<compile_context>
chip_gen: v7x
topology: tpu7x:2x2x1
jax: 0.10.0
libtpu: 0.0.40
codegen_flags: <defaults>
</compile_context>

<pallas_src>
import functools

import numpy as np
import jax
import jax.numpy as jnp
from jax import lax
from jax.experimental import pallas as pl
from jax.experimental.pallas import tpu as pltpu


# ----------------------------------------------------------------------------
# Fused kernel: conv3x3+relu -> [projector L1 | 1x1 head] -> projector L2 ->
# predictor (2-layer MLP) -> per-row cosine.  One lane-dense 128-wide bf16
# output slab, written with direct sub-slice stores.
# ----------------------------------------------------------------------------
def _make_fused_kernel(cf, c_out, proj_len, proj_off, chunk, n_chunks):

    def _chunk_body(r0, patch_ref, w1_ref, b1_ref, wh_ref, bh_ref,
                    wstk_ref, bstk_ref, out_ref):
        rows = pl.ds(r0, chunk)

        # 3x3 conv as im2col matmul: bf16 MXU inputs, f32 accumulate.
        h = jnp.dot(patch_ref[rows, :], w1_ref[...],
                    preferred_element_type=jnp.float32)
        h = jnp.maximum(h + b1_ref[...], 0.0)                   # feat, f32
        hb = h.astype(jnp.bfloat16)

        # Single MXU pass for [projector layer-1 | 2-wide 1x1-conv head],
        # zero-padded to 128 columns -> clean (rows, 128) f32 result.
        th = jnp.dot(hb, wh_ref[...],
                     preferred_element_type=jnp.float32) + bh_ref[...]
        z1 = jnp.maximum(th[:, :proj_len], 0.0)                 # projector hidden
        pred = th[:, proj_len:proj_len + c_out]                  # encoder output

        # Projector layer 2 / predictor MLP (weights stacked in wstk/bstk).
        proj = jnp.dot(z1.astype(jnp.bfloat16), wstk_ref[0],
                       preferred_element_type=jnp.float32) + bstk_ref[0]
        g = jnp.maximum(
            jnp.dot(proj.astype(jnp.bfloat16), wstk_ref[1],
                    preferred_element_type=jnp.float32) + bstk_ref[1], 0.0)
        q = jnp.dot(g.astype(jnp.bfloat16), wstk_ref[2],
                    preferred_element_type=jnp.float32) + bstk_ref[2]

        # Per-row negative-cosine terms (SimSiam: losSG1 + losSG2 = 2*cos since
        # stop_gradient is a no-op on the forward value).  Mean and -2 factor
        # are applied in the wrapper so the grid axis stays "parallel".
        eps = 1e-12
        qn = q * lax.rsqrt(jnp.sum(q * q, axis=-1, keepdims=True) + eps)
        zn = proj * lax.rsqrt(jnp.sum(proj * proj, axis=-1, keepdims=True) + eps)
        cos = jnp.sum(qn * zn, axis=-1, keepdims=True)           # (chunk, 1)

        # Direct sub-slice stores into the lane-dense bf16 out block.
        # Layout: [feat 0:cf | pred | cos | <unwritten pad> | proj @proj_off].
        od = out_ref.dtype
        out_ref[rows, 0:cf] = h.astype(od)
        out_ref[rows, cf:cf + c_out] = pred.astype(od)
        out_ref[rows, cf + c_out:cf + c_out + 1] = cos.astype(od)
        out_ref[rows, proj_off:proj_off + proj_len] = proj.astype(od)

    def kernel(patch_ref, w1_ref, b1_ref, wh_ref, bh_ref,
               wstk_ref, bstk_ref, out_ref):
        if n_chunks == 1:
            _chunk_body(0, patch_ref, w1_ref, b1_ref, wh_ref, bh_ref,
                        wstk_ref, bstk_ref, out_ref)
        else:
            # Fat DMA tile, bounded compute working set: loop 256-row chunks.
            def body(c, carry):
                r0 = pl.multiple_of(c * chunk, chunk)
                _chunk_body(r0, patch_ref, w1_ref, b1_ref, wh_ref, bh_ref,
                            wstk_ref, bstk_ref, out_ref)
                return carry
            lax.fori_loop(0, n_chunks, body, 0)

    return kernel


@functools.partial(jax.jit, static_argnames=("tile_m",))
def siam_fused_forward(img_nchw, params, *, tile_m=1024):
    N, C, H, W = img_nchw.shape
    cf = params["conv1_w"].shape[1]
    co = params["conv2_w"].shape[1]
    pw1, pb1, pw2, pb2 = params["projector"]
    qw1, qb1, qw2, qb2 = params["predictor"]
    L = pw2.shape[1]

    # NCHW -> NHWC, cast to bf16 BEFORE the pad/slice/concat im2col chain so
    # the XLA-side intermediates are half the bytes.
    # TODO(synk): fold the im2col into the kernel at production image sizes.
    x = jnp.transpose(img_nchw, (0, 2, 3, 1)).astype(jnp.bfloat16)
    xp = jnp.pad(x, ((0, 0), (1, 1), (1, 1), (0, 0)))
    patches = jnp.concatenate(
        [xp[:, dy:dy + H, dx:dx + W, :] for dy in range(3) for dx in range(3)],
        axis=-1)
    M = N * H * W
    K = 9 * C
    patches = patches.reshape(M, K)

    # Tiling: fat DMA tiles (up to tile_m rows) + 256-row inner compute chunks.
    # Keep grid >= 2 when M allows so v7x's two TensorCores share the
    # "parallel" axis (the extra ~0.35us/step is negligible on 1-TC chips).
    # Per-tile VMEM at tile_m=1024 is ~1.3 MiB double-buffered -> far under the
    # scoped default on every generation, no vmem_limit_bytes override needed.
    CH = 256
    tm = int(min(tile_m, max(16, pl.cdiv(M, 2))))
    if tm >= CH:
        tm = (tm // CH) * CH           # inner chunks divide evenly
    else:
        tm = ((tm + 15) // 16) * 16    # bf16 sublane packing: multiple of 16
    grid = pl.cdiv(M, tm)
    Mp = grid * tm
    if Mp != M:
        patches = jnp.pad(patches, ((0, Mp - M), (0, 0)))
    chunk = CH if tm >= CH else tm
    n_chunks = tm // chunk

    # Weight prep: bf16 MXU operands, f32 biases.  Projector layer-1 and the
    # 2-wide 1x1 head are packed into one zero-padded 128-column weight so one
    # MXU pass yields a clean (rows, 128) result.  The three LxL MLP weights /
    # biases are stacked into single arrays to cut input bookkeeping.
    w1 = params["conv1_w"].astype(jnp.bfloat16)                       # (K, cf)
    b1 = params["conv1_b"].astype(jnp.float32)                        # (1, cf)
    hcols = ((L + co + 127) // 128) * 128
    wh = jnp.concatenate(
        [pw1, params["conv2_w"],
         jnp.zeros((cf, hcols - L - co), pw1.dtype)], axis=1).astype(jnp.bfloat16)
    bh = jnp.concatenate(
        [pb1, params["conv2_b"],
         jnp.zeros((1, hcols - L - co), pb1.dtype)], axis=1).astype(jnp.float32)
    wstk = jnp.stack([pw2, qw1, qw2]).astype(jnp.bfloat16)            # (3, L, L)
    bstk = jnp.stack([pb2, qb1, qb2]).astype(jnp.float32)             # (3, 1, L)

    # bf16 output slab layout (lane-dense, 128-wide):
    #   [feat 0:cf | pred cf:cf+co | cos | <unwritten> | proj @proj_off:+L]
    # proj sits at a 32-lane-aligned offset to keep its store rotate cheap.
    proj_off = ((cf + co + 1 + 31) // 32) * 32
    slab_w = ((proj_off + L + 127) // 128) * 128
    kernel = _make_fused_kernel(cf, co, L, proj_off, chunk, n_chunks)

    rep = lambda a: pl.BlockSpec(a.shape, lambda i: (0,) * a.ndim)
    slab = pl.pallas_call(
        kernel,
        out_shape=jax.ShapeDtypeStruct((Mp, slab_w), jnp.bfloat16),
        grid=(grid,),
        in_specs=[
            pl.BlockSpec((tm, K), lambda i: (i, 0)),
            rep(w1), rep(b1), rep(wh), rep(bh), rep(wstk), rep(bstk),
        ],
        out_specs=pl.BlockSpec((tm, slab_w), lambda i: (i, 0)),
        compiler_params=pltpu.CompilerParams(
            dimension_semantics=("parallel",)),
    )(patches, w1, b1, wh, bh, wstk, bstk)

    # Slab consumption stays inside this same jit so XLA fuses the slices; the
    # slab itself is bf16 so the re-read is half the bytes of the old f32 path.
    feat = slab[:M, :cf].reshape(N, H, W, cf)
    pred = slab[:M, cf:cf + co].reshape(N, H, W, co)
    cos = slab[:M, cf + co].astype(jnp.float32)
    proj = slab[:M, proj_off:proj_off + L]
    loss = -2.0 * jnp.mean(cos)          # padded rows excluded from the mean
    return feat, pred, proj, loss, patches[:M]


# ----------------------------------------------------------------------------
# Minimal synthetic encoder + SIAM wrapper (mirrors the PyTorch structure).
# ----------------------------------------------------------------------------
class PallasEncoder:
    __name__ = "enc"

    def __init__(self, params):
        self.params = params
        self.projector = params["projector"]
        self.predictor = params["predictor"]

    def __call__(self, img_nchw, **args):
        # Single fused Pallas call: feat/pred/proj/per-row-cos all stay
        # VMEM-resident inside one kernel (no HBM round-trip of feat).
        feat, pred, proj, loss, patches = siam_fused_forward(img_nchw, self.params)
        self.feat = feat          # (N, H, W, Cf) bf16
        self.pred = pred          # (N, H, W, Co) bf16
        self._proj = proj         # (M, L) bf16
        self._loss = loss         # scalar f32
        self._patches = patches   # (M, 9C) bf16, kept for the reference check
        return pred


class IdentitySampler:
    """Stand-in for sampler.select: flattens the feature map to (M, Cf)."""
    def select(self, feat, pred, lab, fov=None):
        return feat.reshape(-1, feat.shape[-1])


class SIAM:
    __name__ = "siam"

    def __init__(self, encoder, clloss="nce", temperature=0.1,
                 proj_num_layers=2, pred_num_layers=2, proj_num_length=64,
                 **kwargs):
        self.encoder = encoder
        self.__name__ = "X".join([self.__name__, self.encoder.__name__])
        self.temperature = temperature
        self.proj_num_layers = proj_num_layers
        self.pred_num_layers = pred_num_layers
        self.projector = self.encoder.projector
        self.predictor = self.encoder.predictor

    def forward(self, img, **args):
        out = self.encoder(img, **args)
        self.pred = self.encoder.pred
        self.feat = self.encoder.feat
        if hasattr(self.encoder, "tmp"):
            self.tmp = self.encoder.tmp
        return out

    __call__ = forward

    def regular(self, sampler, lab, fov=None):
        # sampler.select kept for API fidelity; the stand-in sampler here is
        # the identity flatten, for which the fused in-kernel projector/
        # predictor/loss results are exact.
        feat = sampler.select(self.feat, self.pred, lab, fov)
        assert feat.shape[0] == self.encoder._proj.shape[0], (
            "non-identity samplers need a standalone projector/predictor kernel")
        # TODO(synk): a general (sub-sampling) sampler would re-run a tiled
        # projector/predictor/loss kernel on the sampled rows.
        self.proj = self.encoder._proj
        return self.encoder._loss


# ----------------------------------------------------------------------------
# Deterministic parameter construction + plain-JAX reference (same bf16
# quantization points — matmul operands AND storage — as the kernel).
# ----------------------------------------------------------------------------
def make_params(key, c_in=4, c_feat=32, c_out=2, proj_len=64):
    ks = jax.random.split(key, 12)
    s = lambda fan_in: 1.0 / np.sqrt(fan_in)
    K = 9 * c_in
    return {
        "conv1_w": jax.random.normal(ks[0], (K, c_feat), jnp.float32) * s(K),
        "conv1_b": jax.random.normal(ks[1], (1, c_feat), jnp.float32) * 0.01,
        "conv2_w": jax.random.normal(ks[2], (c_feat, c_out), jnp.float32) * s(c_feat),
        "conv2_b": jax.random.normal(ks[3], (1, c_out), jnp.float32) * 0.01,
        "projector": (
            jax.random.normal(ks[4], (c_feat, proj_len), jnp.float32) * s(c_feat),
            jax.random.normal(ks[5], (1, proj_len), jnp.float32) * 0.01,
            jax.random.normal(ks[6], (proj_len, proj_len), jnp.float32) * s(proj_len),
            jax.random.normal(ks[7], (1, proj_len), jnp.float32) * 0.01,
        ),
        "predictor": (
            jax.random.normal(ks[8], (proj_len, proj_len), jnp.float32) * s(proj_len),
            jax.random.normal(ks[9], (1, proj_len), jnp.float32) * 0.01,
            jax.random.normal(ks[10], (proj_len, proj_len), jnp.float32) * s(proj_len),
            jax.random.normal(ks[11], (1, proj_len), jnp.float32) * 0.01,
        ),
    }


def _reference_all(patches, params):
    bf, f32 = jnp.bfloat16, jnp.float32
    dot = lambda a, b: jnp.dot(a.astype(bf), b.astype(bf),
                               preferred_element_type=f32)
    pw1, pb1, pw2, pb2 = params["projector"]
    qw1, qb1, qw2, qb2 = params["predictor"]
    h = jnp.maximum(dot(patches, params["conv1_w"]) + params["conv1_b"], 0.0)
    pred = dot(h, params["conv2_w"]) + params["conv2_b"]
    z1 = jnp.maximum(dot(h, pw1) + pb1, 0.0)
    proj = dot(z1, pw2) + pb2
    g = jnp.maximum(dot(proj, qw1) + qb1, 0.0)
    q = dot(g, qw2) + qb2
    eps = 1e-12
    qn = q * lax.rsqrt(jnp.sum(q * q, axis=-1, keepdims=True) + eps)
    zn = proj * lax.rsqrt(jnp.sum(proj * proj, axis=-1, keepdims=True) + eps)
    cos = jnp.sum(qn * zn, axis=-1)
    # Mirror the kernel's bf16 storage quantization of the output slab.
    h_q = h.astype(bf).astype(f32)
    pred_q = pred.astype(bf).astype(f32)
    proj_q = proj.astype(bf).astype(f32)
    loss = -2.0 * jnp.mean(cos.astype(bf).astype(f32))
    return h_q, pred_q, proj_q, loss


if __name__ == "__main__":
    key = jax.random.PRNGKey(0)
    kp, kx = jax.random.split(key)

    N, C, H, W = 2, 4, 16, 16
    params = make_params(kp, c_in=C, c_feat=32, c_out=2, proj_len=64)
    img = jax.random.normal(kx, (N, C, H, W), jnp.float32)   # NCHW like torch

    model = SIAM(PallasEncoder(params), clloss="nce", temperature=0.1,
                 proj_num_layers=2, pred_num_layers=2, proj_num_length=64)

    out = model(img)                       # forward: delegates to encoder
    loss = model.regular(IdentitySampler(), lab=None)
    jax.block_until_ready((out, model.feat, model.proj, loss))

    # Correctness check against plain JAX with matching bf16 quantization
    # (matmul operands and bf16 output-slab storage).
    h_ref, pred_ref, proj_ref, loss_ref = _reference_all(
        model.encoder._patches, params)
    np.testing.assert_allclose(
        np.asarray(model.feat.astype(jnp.float32)).reshape(-1, 32),
        np.asarray(h_ref), atol=1e-2, rtol=1e-2)
    np.testing.assert_allclose(
        np.asarray(model.pred.astype(jnp.float32)).reshape(-1, 2),
        np.asarray(pred_ref), atol=1e-2, rtol=1e-2)
    np.testing.assert_allclose(
        np.asarray(model.proj.astype(jnp.float32)),
        np.asarray(proj_ref), atol=1e-2, rtol=1e-2)
    np.testing.assert_allclose(float(loss), float(loss_ref), atol=5e-3)
    assert out.shape == (N, H, W, 2) and model.feat.shape == (N, H, W, 32)
    assert np.isfinite(float(loss))

    print("KERNEL_OK")
</pallas_src>

<mosaic_0001>
module attributes {stable_mosaic.version = 11 : i64} {
  func.func @kernel(%arg0: i32, %arg1: memref<256x36xbf16, #tpu.memory_space<vmem>>, %arg2: memref<36x32xbf16, #tpu.memory_space<vmem>>, %arg3: memref<1x32xf32, #tpu.memory_space<vmem>>, %arg4: memref<32x128xbf16, #tpu.memory_space<vmem>>, %arg5: memref<1x128xf32, #tpu.memory_space<vmem>>, %arg6: memref<3x64x64xbf16, #tpu.memory_space<vmem>>, %arg7: memref<3x1x64xf32, #tpu.memory_space<vmem>>, %arg8: memref<256x128xbf16, #tpu.memory_space<vmem>>) attributes {dimension_semantics = [#tpu.dimension_semantics<parallel>], iteration_bounds = array<i64: 2>, scalar_prefetch = 0 : i64, scratch_operands = 0 : i64, tpu.core_type = #tpu.core_type<tc>, window_params = [{transform_indices = @transform_0, window_bounds = array<i64: 256, 36>}, {pipeline_mode = #tpu.pipeline_mode<synchronous>, transform_indices = @transform_1, window_bounds = array<i64: 36, 32>}, {pipeline_mode = #tpu.pipeline_mode<synchronous>, transform_indices = @transform_2, window_bounds = array<i64: 1, 32>}, {pipeline_mode = #tpu.pipeline_mode<synchronous>, transform_indices = @transform_3, window_bounds = array<i64: 32, 128>}, {pipeline_mode = #tpu.pipeline_mode<synchronous>, transform_indices = @transform_4, window_bounds = array<i64: 1, 128>}, {pipeline_mode = #tpu.pipeline_mode<synchronous>, transform_indices = @transform_5, window_bounds = array<i64: 3, 64, 64>}, {pipeline_mode = #tpu.pipeline_mode<synchronous>, transform_indices = @transform_6, window_bounds = array<i64: 3, 1, 64>}, {transform_indices = @transform_7, window_bounds = array<i64: 256, 128>}]} {
    %c0 = arith.constant 0 : index
    %c0_0 = arith.constant 0 : index
    %0 = vector.load %arg1[%c0, %c0_0] : memref<256x36xbf16, #tpu.memory_space<vmem>>, vector<256x36xbf16>
    %c0_1 = arith.constant 0 : index
    %c0_2 = arith.constant 0 : index
    %1 = vector.load %arg2[%c0_1, %c0_2] : memref<36x32xbf16, #tpu.memory_space<vmem>>, vector<36x32xbf16>
    %cst = arith.constant dense<0.000000e+00> : vector<256x32xf32>
    %2 = tpu.matmul %0, %1, %cst {dimension_numbers = #tpu.dot_dimension_numbers<[1], [0], [0], [1], [0, 0, 1, 1], [], []>} : vector<256x36xbf16>, vector<36x32xbf16>, vector<256x32xf32> -> vector<256x32xf32>
    %c0_3 = arith.constant 0 : index
    %c0_4 = arith.constant 0 : index
    %3 = vector.load %arg3[%c0_3, %c0_4] : memref<1x32xf32, #tpu.memory_space<vmem>>, vector<1x32xf32>
    %4 = vector.broadcast %3 : vector<1x32xf32> to vector<256x32xf32>
    %5 = arith.addf %2, %4 : vector<256x32xf32>
    %cst_5 = arith.constant 0.000000e+00 : f32
    %6 = vector.broadcast %cst_5 : f32 to vector<256x32xf32>
    %7 = arith.maximumf %5, %6 : vector<256x32xf32>
    %8 = arith.truncf %7 : vector<256x32xf32> to vector<256x32xbf16>
    %c0_6 = arith.constant 0 : index
    %c0_7 = arith.constant 0 : index
    %9 = vector.load %arg4[%c0_6, %c0_7] : memref<32x128xbf16, #tpu.memory_space<vmem>>, vector<32x128xbf16>
    %cst_8 = arith.constant dense<0.000000e+00> : vector<256x128xf32>
    %10 = tpu.matmul %8, %9, %cst_8 {dimension_numbers = #tpu.dot_dimension_numbers<[1], [0], [0], [1], [0, 0, 1, 1], [], []>} : vector<256x32xbf16>, vector<32x128xbf16>, vector<256x128xf32> -> vector<256x128xf32>
    %c0_9 = arith.constant 0 : index
    %c0_10 = arith.constant 0 : index
    %11 = vector.load %arg5[%c0_9, %c0_10] : memref<1x128xf32, #tpu.memory_space<vmem>>, vector<1x128xf32>
    %12 = vector.broadcast %11 : vector<1x128xf32> to vector<256x128xf32>
    %13 = arith.addf %10, %12 : vector<256x128xf32>
    %14 = vector.extract_strided_slice %13 {offsets = [0, 0], sizes = [256, 64], strides = [1, 1]} : vector<256x128xf32> to vector<256x64xf32>
    %cst_11 = arith.constant 0.000000e+00 : f32
    %15 = vector.broadcast %cst_11 : f32 to vector<256x64xf32>
    %16 = arith.maximumf %14, %15 : vector<256x64xf32>
    %17 = vector.extract_strided_slice %13 {offsets = [0, 64], sizes = [256, 2], strides = [1, 1]} : vector<256x128xf32> to vector<256x2xf32>
    %18 = arith.truncf %16 : vector<256x64xf32> to vector<256x64xbf16>
    %c0_12 = arith.constant 0 : index
    %c0_13 = arith.constant 0 : index
    %c0_14 = arith.constant 0 : index
    %19 = vector.load %arg6[%c0_12, %c0_13, %c0_14] : memref<3x64x64xbf16, #tpu.memory_space<vmem>>, vector<1x64x64xbf16>
    %20 = vector.shape_cast %19 : vector<1x64x64xbf16> to vector<64x64xbf16>
    %cst_15 = arith.constant dense<0.000000e+00> : vector<256x64xf32>
    %21 = tpu.matmul %18, %20, %cst_15 {dimension_numbers = #tpu.dot_dimension_numbers<[1], [0], [0], [1], [0, 0, 1, 1], [], []>} : vector<256x64xbf16>, vector<64x64xbf16>, vector<256x64xf32> -> vector<256x64xf32>
    %c0_16 = arith.constant 0 : index
    %c0_17 = arith.constant 0 : index
    %c0_18 = arith.constant 0 : index
    %22 = vector.load %arg7[%c0_16, %c0_17, %c0_18] : memref<3x1x64xf32, #tpu.memory_space<vmem>>, vector<1x1x64xf32>
    %23 = vector.shape_cast %22 : vector<1x1x64xf32> to vector<1x64xf32>
    %24 = vector.broadcast %23 : vector<1x64xf32> to vector<256x64xf32>
    %25 = arith.addf %21, %24 : vector<256x64xf32>
    %26 = arith.truncf %25 : vector<256x64xf32> to vector<256x64xbf16>
    %c1 = arith.constant 1 : index
    %c0_19 = arith.constant 0 : index
    %c0_20 = arith.constant 0 : index
    %27 = vector.load %arg6[%c1, %c0_19, %c0_20] : memref<3x64x64xbf16, #tpu.memory_space<vmem>>, vector<1x64x64xbf16>
    %28 = vector.shape_cast %27 : vector<1x64x64xbf16> to vector<64x64xbf16>
    %cst_21 = arith.constant dense<0.000000e+00> : vector<256x64xf32>
    %29 = tpu.matmul %26, %28, %cst_21 {dimension_numbers = #tpu.dot_dimension_numbers<[1], [0], [0], [1], [0, 0, 1, 1], [], []>} : vector<256x64xbf16>, vector<64x64xbf16>, vector<256x64xf32> -> vector<256x64xf32>
    %c1_22 = arith.constant 1 : index
    %c0_23 = arith.constant 0 : index
    %c0_24 = arith.constant 0 : index
    %30 = vector.load %arg7[%c1_22, %c0_23, %c0_24] : memref<3x1x64xf32, #tpu.memory_space<vmem>>, vector<1x1x64xf32>
    %31 = vector.shape_cast %30 : vector<1x1x64xf32> to vector<1x64xf32>
    %32 = vector.broadcast %31 : vector<1x64xf32> to vector<256x64xf32>
    %33 = arith.addf %29, %32 : vector<256x64xf32>
    %cst_25 = arith.constant 0.000000e+00 : f32
    %34 = vector.broadcast %cst_25 : f32 to vector<256x64xf32>
    %35 = arith.maximumf %33, %34 : vector<256x64xf32>
    %36 = arith.truncf %35 : vector<256x64xf32> to vector<256x64xbf16>
    %c2 = arith.constant 2 : index
    %c0_26 = arith.constant 0 : index
    %c0_27 = arith.constant 0 : index
    %37 = vector.load %arg6[%c2, %c0_26, %c0_27] : memref<3x64x64xbf16, #tpu.memory_space<vmem>>, vector<1x64x64xbf16>
    %38 = vector.shape_cast %37 : vector<1x64x64xbf16> to vector<64x64xbf16>
    %cst_28 = arith.constant dense<0.000000e+00> : vector<256x64xf32>
    %39 = tpu.matmul %36, %38, %cst_28 {dimension_numbers = #tpu.dot_dimension_numbers<[1], [0], [0], [1], [0, 0, 1, 1], [], []>} : vector<256x64xbf16>, vector<64x64xbf16>, vector<256x64xf32> -> vector<256x64xf32>
    %c2_29 = arith.constant 2 : index
    %c0_30 = arith.constant 0 : index
    %c0_31 = arith.constant 0 : index
    %40 = vector.load %arg7[%c2_29, %c0_30, %c0_31] : memref<3x1x64xf32, #tpu.memory_space<vmem>>, vector<1x1x64xf32>
    %41 = vector.shape_cast %40 : vector<1x1x64xf32> to vector<1x64xf32>
    %42 = vector.broadcast %41 : vector<1x64xf32> to vector<256x64xf32>
    %43 = arith.addf %39, %42 : vector<256x64xf32>
    %44 = arith.mulf %43, %43 : vector<256x64xf32>
    %cst_32 = arith.constant dense<0.000000e+00> : vector<256xf32>
    %45 = vector.multi_reduction <add>, %44, %cst_32 [1] : vector<256x64xf32> to vector<256xf32>
    %46 = vector.shape_cast %45 : vector<256xf32> to vector<256x1xf32>
    %cst_33 = arith.constant 9.99999996E-13 : f32
    %47 = vector.broadcast %cst_33 : f32 to vector<256x1xf32>
    %48 = arith.addf %46, %47 : vector<256x1xf32>
    %49 = math.rsqrt %48 : vector<256x1xf32>
    %50 = vector.broadcast %49 : vector<256x1xf32> to vector<256x64xf32>
    %51 = arith.mulf %43, %50 : vector<256x64xf32>
    %52 = arith.mulf %25, %25 : vector<256x64xf32>
    %cst_34 = arith.constant dense<0.000000e+00> : vector<256xf32>
    %53 = vector.multi_reduction <add>, %52, %cst_34 [1] : vector<256x64xf32> to vector<256xf32>
    %54 = vector.shape_cast %53 : vector<256xf32> to vector<256x1xf32>
    %cst_35 = arith.constant 9.99999996E-13 : f32
    %55 = vector.broadcast %cst_35 : f32 to vector<256x1xf32>
    %56 = arith.addf %54, %55 : vector<256x1xf32>
    %57 = math.rsqrt %56 : vector<256x1xf32>
    %58 = vector.broadcast %57 : vector<256x1xf32> to vector<256x64xf32>
    %59 = arith.mulf %25, %58 : vector<256x64xf32>
    %60 = arith.mulf %51, %59 : vector<256x64xf32>
    %cst_36 = arith.constant dense<0.000000e+00> : vector<256xf32>
    %61 = vector.multi_reduction <add>, %60, %cst_36 [1] : vector<256x64xf32> to vector<256xf32>
    %62 = vector.shape_cast %61 : vector<256xf32> to vector<256x1xf32>
    %63 = arith.truncf %7 : vector<256x32xf32> to vector<256x32xbf16>
    %c0_37 = arith.constant 0 : index
    %c0_38 = arith.constant 0 : index
    %64 = vector.load %arg8[%c0_37, %c0_38] : memref<256x128xbf16, #tpu.memory_space<vmem>>, vector<256x32xbf16>
    tpu.vector_store %arg8[%c0_37, %c0_38], %63 {strides = array<i32>} : memref<256x128xbf16, #tpu.memory_space<vmem>>, vector<256x32xbf16>,
    %65 = arith.truncf %17 : vector<256x2xf32> to vector<256x2xbf16>
    %c0_39 = arith.constant 0 : index
    %c32 = arith.constant 32 : index
    %66 = vector.load %arg8[%c0_39, %c32] : memref<256x128xbf16, #tpu.memory_space<vmem>>, vector<256x2xbf16>
    tpu.vector_store %arg8[%c0_39, %c32], %65 {strides = array<i32>} : memref<256x128xbf16, #tpu.memory_space<vmem>>, vector<256x2xbf16>,
    %67 = arith.truncf %62 : vector<256x1xf32> to vector<256x1xbf16>
    %c0_40 = arith.constant 0 : index
    %c34 = arith.constant 34 : index
    %68 = vector.load %arg8[%c0_40, %c34] : memref<256x128xbf16, #tpu.memory_space<vmem>>, vector<256x1xbf16>
    tpu.vector_store %arg8[%c0_40, %c34], %67 {strides = array<i32>} : memref<256x128xbf16, #tpu.memory_space<vmem>>, vector<256x1xbf16>,
    %69 = arith.truncf %25 : vector<256x64xf32> to vector<256x64xbf16>
    %c0_41 = arith.constant 0 : index
    %c64 = arith.constant 64 : index
    %70 = vector.load %arg8[%c0_41, %c64] : memref<256x128xbf16, #tpu.memory_space<vmem>>, vector<256x64xbf16>
    tpu.vector_store %arg8[%c0_41, %c64], %69 {strides = array<i32>} : memref<256x128xbf16, #tpu.memory_space<vmem>>, vector<256x64xbf16>,
    return
  }
  func.func @transform_0(%arg0: i32) -> (i32, i32) {
    %c0_i32 = arith.constant 0 : i32
    %c0_i32_0 = arith.constant 0 : i32
    return %arg0, %c0_i32 : i32, i32
  }
  func.func @transform_1(%arg0: i32) -> (i32, i32) {
    %c0_i32 = arith.constant 0 : i32
    %c0_i32_0 = arith.constant 0 : i32
    %c0_i32_1 = arith.constant 0 : i32
    return %c0_i32, %c0_i32_0 : i32, i32
  }
  func.func @transform_2(%arg0: i32) -> (i32, i32) {
    %c0_i32 = arith.constant 0 : i32
    %c0_i32_0 = arith.constant 0 : i32
    %c0_i32_1 = arith.constant 0 : i32
    return %c0_i32, %c0_i32_0 : i32, i32
  }
  func.func @transform_3(%arg0: i32) -> (i32, i32) {
    %c0_i32 = arith.constant 0 : i32
    %c0_i32_0 = arith.constant 0 : i32
    %c0_i32_1 = arith.constant 0 : i32
    return %c0_i32, %c0_i32_0 : i32, i32
  }
  func.func @transform_4(%arg0: i32) -> (i32, i32) {
    %c0_i32 = arith.constant 0 : i32
    %c0_i32_0 = arith.constant 0 : i32
    %c0_i32_1 = arith.constant 0 : i32
    return %c0_i32, %c0_i32_0 : i32, i32
  }
  func.func @transform_5(%arg0: i32) -> (i32, i32, i32) {
    %c0_i32 = arith.constant 0 : i32
    %c0_i32_0 = arith.constant 0 : i32
    %c0_i32_1 = arith.constant 0 : i32
    %c0_i32_2 = arith.constant 0 : i32
    return %c0_i32, %c0_i32_0, %c0_i32_1 : i32, i32, i32
  }
  func.func @transform_6(%arg0: i32) -> (i32, i32, i32) {
    %c0_i32 = arith.constant 0 : i32
    %c0_i32_0 = arith.constant 0 : i32
    %c0_i32_1 = arith.constant 0 : i32
    %c0_i32_2 = arith.constant 0 : i32
    return %c0_i32, %c0_i32_0, %c0_i32_1 : i32, i32, i32
  }
  func.func @transform_7(%arg0: i32) -> (i32, i32) {
    %c0_i32 = arith.constant 0 : i32
    %c0_i32_0 = arith.constant 0 : i32
    return %arg0, %c0_i32 : i32, i32
  }
}

</mosaic_0001>

<llo_original>
// kernel: siam_fused_forward.1
$region0: #{siam_fused_forward.1}
  #allocation0 [shape = 'u32[]', space=smem, size = 0x4, offset = 0x4, fixed_abs, tag = 'smem constant byte address 0x4 - core index']
  #allocation1 [shape = 'u32[144,128]{1,0:T(1,128)}', space=vmem, size = 0x12000, scoped, tag = 'internal scratch']
  %s0 = inlined_call_operand.vmem [shape: bf16[512,36], index: 0, kind: input, shape index: {}]
  %s1 = inlined_call_operand.vmem [shape: bf16[36,32], index: 1, kind: input, shape index: {}]
  %s2 = inlined_call_operand.vmem [shape: f32[1,32], index: 2, kind: input, shape index: {}]
  %s3 = inlined_call_operand.vmem [shape: bf16[32,128], index: 3, kind: input, shape index: {}]
  %s4 = inlined_call_operand.vmem [shape: f32[1,128], index: 4, kind: input, shape index: {}]
  %s5 = inlined_call_operand.vmem [shape: bf16[3,64,64], index: 5, kind: input, shape index: {}]
  %s6 = inlined_call_operand.vmem [shape: f32[3,1,64], index: 6, kind: input, shape index: {}]
  %s7 = inlined_call_operand.vmem [shape: bf16[512,128], index: 7, kind: output, shape index: {}]
  %s8 = sld [smem:[#allocation0]]
  $region61: #{siam_fused_forward.1} parent=0
    _
  %s10 = ssub.s32 1, %s8
  %s11 = scalar_select 0, %s10, %s8
  loop: start=0, step=1, limit=4
  $region2: #{siam_fused_forward.1} parent=0 // loop_pre_header
    _
  $region3: #{siam_fused_forward.1} parent=0 // loop_header
    %s13 = sphi 0, %s17
    %p14 = scmp.ge.s32.totalorder %s13, 4
    %s23 = sphi 0, %s25
    %s26 = sphi 0, %s23
    %s27 = sphi 0, %s26
    %s43 = sphi 0, %s27
    %s47 = sphi 0, %s47
    %s49 = sphi 0, %s47
    %s50 = sphi 0, %s49
    %s64 = sphi 0, %s50
    %s68 = sphi 0, %s68
    %s70 = sphi 0, %s68
    %s71 = sphi 0, %s70
    %s85 = sphi 0, %s71
    %s89 = sphi 0, %s89
    %s91 = sphi 0, %s89
    %s92 = sphi 0, %s91
    %s106 = sphi 0, %s92
    %s110 = sphi 0, %s110
    %s112 = sphi 0, %s110
    %s113 = sphi 0, %s112
    %s127 = sphi 0, %s113
    %s131 = sphi 0, %s131
    %s133 = sphi 0, %s131
    %s134 = sphi 0, %s133
    %s148 = sphi 0, %s134
    %s152 = sphi 0, %s152
    %s154 = sphi 0, %s152
    %s155 = sphi 0, %s154
    %s169 = sphi 0, %s155
    %s175 = sphi 0, %s177
    %s178 = sphi 0, %s175
    %s179 = sphi 0, %s178
    %s195 = sphi 0, %s179
  $region4: #{siam_fused_forward.1} parent=0 // loop_header_branch
    %16 = sbr.rel (%p14) target = $region8
  $region5: #{siam_fused_forward.1} parent=0 // loop_body
    %s18 = ssub.s32 %s13, 1
    %s19 = ssub.s32 %s13, 2
    %s20 = sadd.s32 %s13, 1
    %s21 = ssub.s32 %s13, %s20
    %p22 = scmp.eq.s32.totalorder %s21, 0
    %s24 = sadd.s32 %s23, 1
    %s25 = scalar_select %p22, %s23, %s24
    %p28 = pneg %p22
    %p29 = scmp.eq.s32.totalorder %s13, 1
    %p30 = por %p28, %p29
    %p31 = scmp.ne.s32.totalorder %s23, %s26
    %p32 = scmp.eq.s32.totalorder %s13, 0
    %p33 = por %p31, %p32
    %p34 = scmp.ne.s32.totalorder %s23, %s26
    %p35 = scmp.eq.s32.totalorder %s18, 1
    %p36 = por %p34, %p35
    %p37 = scmp.ne.s32.totalorder %s26, %s27
    %p38 = scmp.eq.s32.totalorder %s18, 0
    %p39 = por %p37, %p38
    %p40 = scmp.ne.s32.totalorder %s26, %s27
    %p41 = scmp.eq.s32.totalorder %s19, 1
    %p42 = por %p40, %p41
    %p44 = scmp.ne.s32.totalorder %s27, %s43
    %p45 = scmp.eq.s32.totalorder %s19, 0
    %p46 = por %p44, %p45
    %s48 = sadd.s32 %s47, 1
    %p51 = scmp.eq.s32.totalorder %s13, 1
    %p52 = scmp.ne.s32.totalorder %s47, %s49
    %p53 = scmp.eq.s32.totalorder %s13, 0
    %p54 = por %p52, %p53
    %p55 = scmp.ne.s32.totalorder %s47, %s49
    %p56 = scmp.eq.s32.totalorder %s18, 1
    %p57 = por %p55, %p56
    %p58 = scmp.ne.s32.totalorder %s49, %s50
    %p59 = scmp.eq.s32.totalorder %s18, 0
    %p60 = por %p58, %p59
    %p61 = scmp.ne.s32.totalorder %s49, %s50
    %p62 = scmp.eq.s32.totalorder %s19, 1
    %p63 = por %p61, %p62
    %p65 = scmp.ne.s32.totalorder %s50, %s64
    %p66 = scmp.eq.s32.totalorder %s19, 0
    %p67 = por %p65, %p66
    %s69 = sadd.s32 %s68, 1
    %p72 = scmp.eq.s32.totalorder %s13, 1
    %p73 = scmp.ne.s32.totalorder %s68, %s70
    %p74 = scmp.eq.s32.totalorder %s13, 0
    %p75 = por %p73, %p74
    %p76 = scmp.ne.s32.totalorder %s68, %s70
    %p77 = scmp.eq.s32.totalorder %s18, 1
    %p78 = por %p76, %p77
    %p79 = scmp.ne.s32.totalorder %s70, %s71
    %p80 = scmp.eq.s32.totalorder %s18, 0
    %p81 = por %p79, %p80
    %p82 = scmp.ne.s32.totalorder %s70, %s71
    %p83 = scmp.eq.s32.totalorder %s19, 1
    %p84 = por %p82, %p83
    %p86 = scmp.ne.s32.totalorder %s71, %s85
    %p87 = scmp.eq.s32.totalorder %s19, 0
    %p88 = por %p86, %p87
    %s90 = sadd.s32 %s89, 1
    %p93 = scmp.eq.s32.totalorder %s13, 1
    %p94 = scmp.ne.s32.totalorder %s89, %s91
    %p95 = scmp.eq.s32.totalorder %s13, 0
    %p96 = por %p94, %p95
    %p97 = scmp.ne.s32.totalorder %s89, %s91
    %p98 = scmp.eq.s32.totalorder %s18, 1
    %p99 = por %p97, %p98
    %p100 = scmp.ne.s32.totalorder %s91, %s92
    %p101 = scmp.eq.s32.totalorder %s18, 0
    %p102 = por %p100, %p101
    %p103 = scmp.ne.s32.totalorder %s91, %s92
    %p104 = scmp.eq.s32.totalorder %s19, 1
    %p105 = por %p103, %p104
    %p107 = scmp.ne.s32.totalorder %s92, %s106
    %p108 = scmp.eq.s32.totalorder %s19, 0
    %p109 = por %p107, %p108
    %s111 = sadd.s32 %s110, 1
    %p114 = scmp.eq.s32.totalorder %s13, 1
    %p115 = scmp.ne.s32.totalorder %s110, %s112
    %p116 = scmp.eq.s32.totalorder %s13, 0
    %p117 = por %p115, %p116
    %p118 = scmp.ne.s32.totalorder %s110, %s112
    %p119 = scmp.eq.s32.totalorder %s18, 1
    %p120 = por %p118, %p119
    %p121 = scmp.ne.s32.totalorder %s112, %s113
    %p122 = scmp.eq.s32.totalorder %s18, 0
    %p123 = por %p121, %p122
    %p124 = scmp.ne.s32.totalorder %s112, %s113
    %p125 = scmp.eq.s32.totalorder %s19, 1
    %p126 = por %p124, %p125
    %p128 = scmp.ne.s32.totalorder %s113, %s127
    %p129 = scmp.eq.s32.totalorder %s19, 0
    %p130 = por %p128, %p129
    %s132 = sadd.s32 %s131, 1
    %p135 = scmp.eq.s32.totalorder %s13, 1
    %p136 = scmp.ne.s32.totalorder %s131, %s133
    %p137 = scmp.eq.s32.totalorder %s13, 0
    %p138 = por %p136, %p137
    %p139 = scmp.ne.s32.totalorder %s131, %s133
    %p140 = scmp.eq.s32.totalorder %s18, 1
    %p141 = por %p139, %p140
    %p142 = scmp.ne.s32.totalorder %s133, %s134
    %p143 = scmp.eq.s32.totalorder %s18, 0
    %p144 = por %p142, %p143
    %p145 = scmp.ne.s32.totalorder %s133, %s134
    %p146 = scmp.eq.s32.totalorder %s19, 1
    %p147 = por %p145, %p146
    %p149 = scmp.ne.s32.totalorder %s134, %s148
    %p150 = scmp.eq.s32.totalorder %s19, 0
    %p151 = por %p149, %p150
    %s153 = sadd.s32 %s152, 1
    %p156 = scmp.eq.s32.totalorder %s13, 1
    %p157 = scmp.ne.s32.totalorder %s152, %s154
    %p158 = scmp.eq.s32.totalorder %s13, 0
    %p159 = por %p157, %p158
    %p160 = scmp.ne.s32.totalorder %s152, %s154
    %p161 = scmp.eq.s32.totalorder %s18, 1
    %p162 = por %p160, %p161
    %p163 = scmp.ne.s32.totalorder %s154, %s155
    %p164 = scmp.eq.s32.totalorder %s18, 0
    %p165 = por %p163, %p164
    %p166 = scmp.ne.s32.totalorder %s154, %s155
    %p167 = scmp.eq.s32.totalorder %s19, 1
    %p168 = por %p166, %p167
    %p170 = scmp.ne.s32.totalorder %s155, %s169
    %p171 = scmp.eq.s32.totalorder %s19, 0
    %p172 = por %p170, %p171
    %s173 = ssub.s32 %s13, %s20
    %p174 = scmp.eq.s32.totalorder %s173, 0
    %s176 = sadd.s32 %s175, 1
    %s177 = scalar_select %p174, %s175, %s176
    %p180 = pneg %p174
    %p181 = scmp.eq.s32.totalorder %s13, 1
    %p182 = por %p180, %p181
    %p183 = scmp.ne.s32.totalorder %s175, %s178
    %p184 = scmp.eq.s32.totalorder %s13, 0
    %p185 = por %p183, %p184
    %p186 = scmp.ne.s32.totalorder %s175, %s178
    %p187 = scmp.eq.s32.totalorder %s18, 1
    %p188 = por %p186, %p187
    %p189 = scmp.ne.s32.totalorder %s178, %s179
    %p190 = scmp.eq.s32.totalorder %s18, 0
    %p191 = por %p189, %p190
    %p192 = scmp.ne.s32.totalorder %s178, %s179
    %p193 = scmp.eq.s32.totalorder %s19, 1
    %p194 = por %p192, %p193
    %p196 = scmp.ne.s32.totalorder %s179, %s195
    %p197 = scmp.eq.s32.totalorder %s19, 0
    %p198 = por %p196, %p197
    %p199 = scmp.le.s32.totalorder 1, %s13
    %p200 = scmp.lt.s32.totalorder %s13, 3
    %p201 = pnand %p199, %p200
    %p202 = pneg %p201
    // Predicated region
    $region9: #{siam_fused_forward.1} parent=5 // pred_check
      _
    $region10: #{siam_fused_forward.1} parent=5 // pred_check_branch
      %204 = sbr.rel (%p201) target = $region12
    $region11: #{siam_fused_forward.1} parent=5 // pred_region
      %s205 = ssub.s32 %s13, 1
      // Predicated region
      $region13: #{siam_fused_forward.1} parent=11 // pred_check
        %p206 = pneg %p60
      $region14: #{siam_fused_forward.1} parent=11 // pred_check_branch
        %208 = sbr.rel (%p206) target = $region16
      $region15: #{siam_fused_forward.1} parent=11 // pred_region
        _
      $region16: #{siam_fused_forward.1} parent=11 // pred_fallthru
        _
      // Predicated region
      $region17: #{siam_fused_forward.1} parent=11 // pred_check
        %p209 = pneg %p81
      $region18: #{siam_fused_forward.1} parent=11 // pred_check_branch
        %211 = sbr.rel (%p209) target = $region20
      $region19: #{siam_fused_forward.1} parent=11 // pred_region
        _
      $region20: #{siam_fused_forward.1} parent=11 // pred_fallthru
        _
      // Predicated region
      $region21: #{siam_fused_forward.1} parent=11 // pred_check
        %p212 = pneg %p102
      $region22: #{siam_fused_forward.1} parent=11 // pred_check_branch
        %214 = sbr.rel (%p212) target = $region24
      $region23: #{siam_fused_forward.1} parent=11 // pred_region
        _
      $region24: #{siam_fused_forward.1} parent=11 // pred_fallthru
        _
      // Predicated region
      $region25: #{siam_fused_forward.1} parent=11 // pred_check
        %p215 = pneg %p123
      $region26: #{siam_fused_forward.1} parent=11 // pred_check_branch
        %217 = sbr.rel (%p215) target = $region28
      $region27: #{siam_fused_forward.1} parent=11 // pred_region
        _
      $region28: #{siam_fused_forward.1} parent=11 // pred_fallthru
        _
      // Predicated region
      $region29: #{siam_fused_forward.1} parent=11 // pred_check
        %p218 = pneg %p144
      $region30: #{siam_fused_forward.1} parent=11 // pred_check_branch
        %220 = sbr.rel (%p218) target = $region32
      $region31: #{siam_fused_forward.1} parent=11 // pred_region
        _
      $region32: #{siam_fused_forward.1} parent=11 // pred_fallthru
        _
      // Predicated region
      $region33: #{siam_fused_forward.1} parent=11 // pred_check
        %p221 = pneg %p165
      $region34: #{siam_fused_forward.1} parent=11 // pred_check_branch
        %223 = sbr.rel (%p221) target = $region36
      $region35: #{siam_fused_forward.1} parent=11 // pred_region
        _
      $region36: #{siam_fused_forward.1} parent=11 // pred_fallthru
        _
    $region12: #{siam_fused_forward.1} parent=5 // pred_fallthru
      _
    %p224 = scmp.lt.s32.totalorder %s13, 2
    // Predicated region
    $region37: #{siam_fused_forward.1} parent=5 // pred_check
      %p225 = pneg %p224
    $region38: #{siam_fused_forward.1} parent=5 // pred_check_branch
      %227 = sbr.rel (%p225) target = $region40
    $region39: #{siam_fused_forward.1} parent=5 // pred_region
      // Predicated region
      $region41: #{siam_fused_forward.1} parent=39 // pred_check
        %p228 = pneg %p33
      $region42: #{siam_fused_forward.1} parent=39 // pred_check_branch
        %230 = sbr.rel (%p228) target = $region44
      $region43: #{siam_fused_forward.1} parent=39 // pred_region
        %s231 = smul.u32 32, %s13
        %p232 = scmp.lt.s32.totalorder %s231, 63
        %s233 = scalar_select %p232, %s231, 63
        %s234 = smul.addr %s233, 4
        %s235 = scalar_lea.vmem %s0, %s234
        %s236 = smul.u32 32, %s13
      $region44: #{siam_fused_forward.1} parent=39 // pred_fallthru
        _
    $region40: #{siam_fused_forward.1} parent=5 // pred_fallthru
      _
    %p237 = scmp.le.s32.totalorder 1, %s13
    %p238 = scmp.lt.s32.totalorder %s13, 3
    %p239 = pnand %p237, %p238
    %p240 = pneg %p239
    // Predicated region
    $region45: #{siam_fused_forward.1} parent=5 // pred_check
      _
    $region46: #{siam_fused_forward.1} parent=5 // pred_check_branch
      %242 = sbr.rel (%p239) target = $region48
    $region47: #{siam_fused_forward.1} parent=5 // pred_region
      %s243 = ssub.s32 %s13, 1
      %s244 = smul.u32 32, %s18
      %p245 = scmp.lt.s32.totalorder %s244, 63
      %s246 = scalar_select %p245, %s244, 63
      %s247 = smul.addr %s246, 4
      %s248 = scalar_lea.vmem %s0, %s247
      %p249 = pneg %p39
      %p250 = pneg %p36
      %p251 = pneg %p60
      %p252 = pneg %p57
      %p253 = pneg %p81
      %p254 = pneg %p78
      %p255 = pneg %p102
      %p256 = pneg %p99
      %p257 = pneg %p123
      %p258 = pneg %p120
      %p259 = pneg %p144
      %p260 = pneg %p141
      %p261 = pneg %p165
      %p262 = pneg %p162
      %p263 = pneg %p191
      %p264 = pneg %p188
      %s265 = smul.u32 32, %s18
      %p266 = scmp.lt.s32.totalorder %s265, 63
      %s267 = scalar_select %p266, %s265, 63
      %s268 = smul.addr %s267, 4
      %s269 = scalar_lea.vmem %s7, %s268
      %s270 = smul.u32 32, %s18
      %p271 = scmp.lt.s32.totalorder %s270, 63
      %s272 = scalar_select %p271, %s270, 63
      %s273 = smul.addr %s272, 4
      %s274 = scalar_lea.vmem %s0, %s273
      %s275 = smul.u32 32, %s18
      %s276 = smul.u32 32, %s18
      %p277 = scmp.lt.s32.totalorder %s276, 63
      %s278 = scalar_select %p277, %s276, 63
      %s279 = smul.addr %s278, 4
      %s280 = scalar_lea.vmem %s7, %s279
      %s281 = smul.u32 32, %s18
      %v283 = vld [vmem:[%s274] sm:$0xf]
      %v284 = vld [vmem:[%s274 + $0x4] sm:$0xf]
      %v285 = vld [vmem:[%s274 + $0x8] sm:$0xf]
      %v286 = vld [vmem:[%s274 + $0xc] sm:$0xf]
      %v287 = vld [vmem:[%s274 + $0x10] sm:$0xf]
      %v288 = vld [vmem:[%s274 + $0x14] sm:$0xf]
      %v289 = vld [vmem:[%s274 + $0x18] sm:$0xf]
      %v290 = vld [vmem:[%s274 + $0x1c] sm:$0xf]
      %v291 = vld [vmem:[%s274 + $0x20] sm:$0xf]
      %v292 = vld [vmem:[%s274 + $0x24] sm:$0xf]
      %v293 = vld [vmem:[%s274 + $0x28] sm:$0xf]
      %v294 = vld [vmem:[%s274 + $0x2c] sm:$0xf]
      %v295 = vld [vmem:[%s274 + $0x30] sm:$0xf]
      %v296 = vld [vmem:[%s274 + $0x34] sm:$0xf]
      %v297 = vld [vmem:[%s274 + $0x38] sm:$0xf]
      %v298 = vld [vmem:[%s274 + $0x3c] sm:$0xf]
      %v299 = vld [vmem:[%s274 + $0x40] sm:$0xf]
      %v300 = vld [vmem:[%s274 + $0x44] sm:$0xf]
      %v301 = vld [vmem:[%s274 + $0x48] sm:$0xf]
      %v302 = vld [vmem:[%s274 + $0x4c] sm:$0xf]
      %v303 = vld [vmem:[%s274 + $0x50] sm:$0xf]
      %v304 = vld [vmem:[%s274 + $0x54] sm:$0xf]
      %v305 = vld [vmem:[%s274 + $0x58] sm:$0xf]
      %v306 = vld [vmem:[%s274 + $0x5c] sm:$0xf]
      %v307 = vld [vmem:[%s274 + $0x60] sm:$0xf]
      %v308 = vld [vmem:[%s274 + $0x64] sm:$0xf]
      %v309 = vld [vmem:[%s274 + $0x68] sm:$0xf]
      %v310 = vld [vmem:[%s274 + $0x6c] sm:$0xf]
      %v311 = vld [vmem:[%s274 + $0x70] sm:$0xf]
      %v312 = vld [vmem:[%s274 + $0x74] sm:$0xf]
      %v313 = vld [vmem:[%s274 + $0x78] sm:$0xf]
      %v314 = vld [vmem:[%s274 + $0x7c] sm:$0xf]
      %v315 = vld [vmem:[%s1] sm:$0xf]
      %v316 = vld [vmem:[%s1 + $0x4] sm:$0xf]
      %v317 = vld [vmem:[%s1 + $0x8] sm:$0xf]
      %v318 = vld [vmem:[%s1 + $0xc] sm:$0xf]
      %v319 = vld [vmem:[%s1 + $0x10] sm:$0x3]
      %v320 = vld [vmem:[%s2] sm:$0x1]
      %v322 = vlaneseq
      %v323 = vshrl.u32 %v322, 7
      %v324 = vsub.s32 0, %v323
      %v325 = vrot.slane %v320, %v324
      %v359 = vunpack.c.l.b16 %v283
      %v360 = vunpack.c.l.b16 %v284
      %v361 = vunpack.c.l.b16 %v285
      %v362 = vunpack.c.l.b16 %v286
      %v363 = vunpack.c.l.b16 %v287
      %v364 = vunpack.c.l.b16 %v288
      %v365 = vunpack.c.l.b16 %v289
      %v366 = vunpack.c.l.b16 %v290
      %v367 = vunpack.c.l.b16 %v291
      %v368 = vunpack.c.l.b16 %v292
      %v369 = vunpack.c.l.b16 %v293
      %v370 = vunpack.c.l.b16 %v294
      %v371 = vunpack.c.l.b16 %v295
      %v372 = vunpack.c.l.b16 %v296
      %v373 = vunpack.c.l.b16 %v297
      %v374 = vunpack.c.l.b16 %v298
      %v375 = vunpack.c.l.b16 %v299
      %v376 = vunpack.c.l.b16 %v300
      %v377 = vunpack.c.l.b16 %v301
      %v378 = vunpack.c.l.b16 %v302
      %v379 = vunpack.c.l.b16 %v303
      %v380 = vunpack.c.l.b16 %v304
      %v381 = vunpack.c.l.b16 %v305
      %v382 = vunpack.c.l.b16 %v306
      %v383 = vunpack.c.l.b16 %v307
      %v384 = vunpack.c.l.b16 %v308
      %v385 = vunpack.c.l.b16 %v309
      %v386 = vunpack.c.l.b16 %v310
      %v387 = vunpack.c.l.b16 %v311
      %v388 = vunpack.c.l.b16 %v312
      %v389 = vunpack.c.l.b16 %v313
      %v390 = vunpack.c.l.b16 %v314
      %v391 = vpack.c.b16 %v360, %v359
      %v392 = vpack.c.b16 %v362, %v361
      %v393 = vpack.c.b16 %v364, %v363
      %v394 = vpack.c.b16 %v366, %v365
      %v395 = vpack.c.b16 %v368, %v367
      %v396 = vpack.c.b16 %v370, %v369
      %v397 = vpack.c.b16 %v372, %v371
      %v398 = vpack.c.b16 %v374, %v373
      %v399 = vpack.c.b16 %v376, %v375
      %v400 = vpack.c.b16 %v378, %v377
      %v401 = vpack.c.b16 %v380, %v379
      %v402 = vpack.c.b16 %v382, %v381
      %v403 = vpack.c.b16 %v384, %v383
      %v404 = vpack.c.b16 %v386, %v385
      %v405 = vpack.c.b16 %v388, %v387
      %v406 = vpack.c.b16 %v390, %v389
      %v412 = vunpack.c.l.b16 %v315
      %v413 = vunpack.c.l.b16 %v316
      %v414 = vunpack.c.l.b16 %v317
      %v415 = vunpack.c.l.b16 %v318
      %v416 = vunpack.c.l.b16 %v319
      %v417 = vpack.c.b16 %v413, %v412
      %v418 = vpack.c.b16 %v415, %v414
      %v419 = vpack.c.b16 %v416, %v416
      %vm422 = vcmask 293888
      %v424 = vsel %vm422, %v391, 0
      %v427 = vsel %vm422, %v392, 0
      %v430 = vsel %vm422, %v393, 0
      %v433 = vsel %vm422, %v394, 0
      %v436 = vsel %vm422, %v395, 0
      %v439 = vsel %vm422, %v396, 0
      %v442 = vsel %vm422, %v397, 0
      %v445 = vsel %vm422, %v398, 0
      %v448 = vsel %vm422, %v399, 0
      %v451 = vsel %vm422, %v400, 0
      %v454 = vsel %vm422, %v401, 0
      %v457 = vsel %vm422, %v402, 0
      %v460 = vsel %vm422, %v403, 0
      %v463 = vsel %vm422, %v404, 0
      %v466 = vsel %vm422, %v405, 0
      %v469 = vsel %vm422, %v406, 0
      %vm471 = vcmask 1041408
      %v473 = vsel %vm471, %v419, 0
      %475 = vmatprep.subr.bf16.mxu0 0
      %476 = vmatpush1.bf16.msra.mxu0 %v417
      %477 = vmatprep.subr.bf16.mxu0 0
      %478 = vmatpush1.bf16.msra.mxu0 %v418
      %479 = vmatprep.subr.bf16.mxu0 0
      %480 = vmatpush1.bf16.msra.mxu0 %v473
      %481 = vmatprep.subr.bf16.mxu0 0
      %482 = vmatpush1.bf16.msra.mxu0 0
      %483 = vmatprep.subr.bf16.mxu0 0
      %484 = vmatpush1.bf16.msra.mxu0 0
      %485 = vmatprep.subr.bf16.mxu0 0
      %486 = vmatpush1.bf16.msra.mxu0 0
      %487 = vmatprep.subr.bf16.mxu0 0
      %488 = vmatpush1.bf16.msra.mxu0 0
      %489 = vmatprep.subr.bf16.mxu0 0
      %490 = vmatpush1.bf16.msra.mxu0 0
      %491 = vmatprep.subr.bf16.mxu0 0
      %492 = vmatpush1.bf16.msra.mxu0 0
      %493 = vmatprep.subr.bf16.mxu0 0
      %494 = vmatpush1.bf16.msra.mxu0 0
      %495 = vmatprep.subr.bf16.mxu0 0
      %496 = vmatpush1.bf16.msra.mxu0 0
      %497 = vmatprep.subr.bf16.mxu0 0
      %498 = vmatpush1.bf16.msra.mxu0 0
      %499 = vmatprep.subr.bf16.mxu0 0
      %500 = vmatpush1.bf16.msra.mxu0 0
      %501 = vmatprep.subr.bf16.mxu0 0
      %502 = vmatpush1.bf16.msra.mxu0 0
      %503 = vmatprep.subr.bf16.mxu0 0
      %504 = vmatpush1.bf16.msra.mxu0 0
      %505 = vmatprep.subr.bf16.mxu0 0
      %506 = vmatpush1.bf16.msra.mxu0 0
      %507 = vmatprep.mubr.bf16.mxu0 0
      %508 = vmatmul.mubr.bf16.gmra.mrb[0].mxu0 %v424
      %v509 = vpop.f32.mrb[0].mxu0
      %v510 = vadd.f32 %v325, %v509
      %v511 = vpop.f32.mrb[0].mxu0
      %v512 = vpop.f32.mrb[0].mxu0
      %v513 = vadd.f32 %v325, %v512
      %v514 = vpop.f32.mrb[0].mxu0
      %515 = vmatprep.mubr.bf16.mxu0 0
      %516 = vmatmul.mubr.bf16.gmra.mrb[0].mxu0 %v427
      %v517 = vpop.f32.mrb[0].mxu0
      %v518 = vadd.f32 %v325, %v517
      %v519 = vpop.f32.mrb[0].mxu0
      %v520 = vpop.f32.mrb[0].mxu0
      %v521 = vadd.f32 %v325, %v520
      %v522 = vpop.f32.mrb[0].mxu0
      %523 = vmatprep.mubr.bf16.mxu0 0
      %524 = vmatmul.mubr.bf16.gmra.mrb[0].mxu0 %v430
      %v525 = vpop.f32.mrb[0].mxu0
      %v526 = vadd.f32 %v325, %v525
      %v527 = vpop.f32.mrb[0].mxu0
      %v528 = vpop.f32.mrb[0].mxu0
      %v529 = vadd.f32 %v325, %v528
      %v530 = vpop.f32.mrb[0].mxu0
      %531 = vmatprep.mubr.bf16.mxu0 0
      %532 = vmatmul.mubr.bf16.gmra.mrb[0].mxu0 %v433
      %v533 = vpop.f32.mrb[0].mxu0
      %v534 = vadd.f32 %v325, %v533
      %v535 = vpop.f32.mrb[0].mxu0
      %v536 = vpop.f32.mrb[0].mxu0
      %v537 = vadd.f32 %v325, %v536
      %v538 = vpop.f32.mrb[0].mxu0
      %539 = vmatprep.mubr.bf16.mxu0 0
      %540 = vmatmul.mubr.bf16.gmra.mrb[0].mxu0 %v436
      %v541 = vpop.f32.mrb[0].mxu0
      %v542 = vadd.f32 %v325, %v541
      %v543 = vpop.f32.mrb[0].mxu0
      %v544 = vpop.f32.mrb[0].mxu0
      %v545 = vadd.f32 %v325, %v544
      %v546 = vpop.f32.mrb[0].mxu0
      %547 = vmatprep.mubr.bf16.mxu0 0
      %548 = vmatmul.mubr.bf16.gmra.mrb[0].mxu0 %v439
      %v549 = vpop.f32.mrb[0].mxu0
      %v550 = vadd.f32 %v325, %v549
      %v551 = vpop.f32.mrb[0].mxu0
      %v552 = vpop.f32.mrb[0].mxu0
      %v553 = vadd.f32 %v325, %v552
      %v554 = vpop.f32.mrb[0].mxu0
      %555 = vmatprep.mubr.bf16.mxu0 0
      %556 = vmatmul.mubr.bf16.gmra.mrb[0].mxu0 %v442
      %v557 = vpop.f32.mrb[0].mxu0
      %v558 = vadd.f32 %v325, %v557
      %v559 = vpop.f32.mrb[0].mxu0
      %v560 = vpop.f32.mrb[0].mxu0
      %v561 = vadd.f32 %v325, %v560
      %v562 = vpop.f32.mrb[0].mxu0
      %563 = vmatprep.mubr.bf16.mxu0 0
      %564 = vmatmul.mubr.bf16.gmra.mrb[0].mxu0 %v445
      %v565 = vpop.f32.mrb[0].mxu0
      %v566 = vadd.f32 %v325, %v565
      %v567 = vpop.f32.mrb[0].mxu0
      %v568 = vpop.f32.mrb[0].mxu0
      %v569 = vadd.f32 %v325, %v568
      %v570 = vpop.f32.mrb[0].mxu0
      %571 = vmatprep.mubr.bf16.mxu0 0
      %572 = vmatmul.mubr.bf16.gmra.mrb[0].mxu0 %v448
      %v573 = vpop.f32.mrb[0].mxu0
      %v574 = vadd.f32 %v325, %v573
      %v575 = vpop.f32.mrb[0].mxu0
      %v576 = vpop.f32.mrb[0].mxu0
      %v577 = vadd.f32 %v325, %v576
      %v578 = vpop.f32.mrb[0].mxu0
      %579 = vmatprep.mubr.bf16.mxu0 0
      %580 = vmatmul.mubr.bf16.gmra.mrb[0].mxu0 %v451
      %v581 = vpop.f32.mrb[0].mxu0
      %v582 = vadd.f32 %v325, %v581
      %v583 = vpop.f32.mrb[0].mxu0
      %v584 = vpop.f32.mrb[0].mxu0
      %v585 = vadd.f32 %v325, %v584
      %v586 = vpop.f32.mrb[0].mxu0
      %587 = vmatprep.mubr.bf16.mxu0 0
      %588 = vmatmul.mubr.bf16.gmra.mrb[0].mxu0 %v454
      %v589 = vpop.f32.mrb[0].mxu0
      %v590 = vadd.f32 %v325, %v589
      %v591 = vpop.f32.mrb[0].mxu0
      %v592 = vpop.f32.mrb[0].mxu0
      %v593 = vadd.f32 %v325, %v592
      %v594 = vpop.f32.mrb[0].mxu0
      %595 = vmatprep.mubr.bf16.mxu0 0
      %596 = vmatmul.mubr.bf16.gmra.mrb[0].mxu0 %v457
      %v597 = vpop.f32.mrb[0].mxu0
      %v598 = vadd.f32 %v325, %v597
      %v599 = vpop.f32.mrb[0].mxu0
      %v600 = vpop.f32.mrb[0].mxu0
      %v601 = vadd.f32 %v325, %v600
      %v602 = vpop.f32.mrb[0].mxu0
      %603 = vmatprep.mubr.bf16.mxu0 0
      %604 = vmatmul.mubr.bf16.gmra.mrb[0].mxu0 %v460
      %v605 = vpop.f32.mrb[0].mxu0
      %v606 = vadd.f32 %v325, %v605
      %v607 = vpop.f32.mrb[0].mxu0
      %v608 = vpop.f32.mrb[0].mxu0
      %v609 = vadd.f32 %v325, %v608
      %v610 = vpop.f32.mrb[0].mxu0
      %611 = vmatprep.mubr.bf16.mxu0 0
      %612 = vmatmul.mubr.bf16.gmra.mrb[0].mxu0 %v463
      %v613 = vpop.f32.mrb[0].mxu0
      %v614 = vadd.f32 %v325, %v613
      %v615 = vpop.f32.mrb[0].mxu0
      %v616 = vpop.f32.mrb[0].mxu0
      %v617 = vadd.f32 %v325, %v616
      %v618 = vpop.f32.mrb[0].mxu0
      %619 = vmatprep.mubr.bf16.mxu0 0
      %620 = vmatmul.mubr.bf16.gmra.mrb[0].mxu0 %v466
      %v621 = vpop.f32.mrb[0].mxu0
      %v622 = vadd.f32 %v325, %v621
      %v623 = vpop.f32.mrb[0].mxu0
      %v624 = vpop.f32.mrb[0].mxu0
      %v625 = vadd.f32 %v325, %v624
      %v626 = vpop.f32.mrb[0].mxu0
      %627 = vmatprep.mubr.bf16.mxu0 0
      %628 = vmatmul.mubr.bf16.gmra.mrb[0].mxu0 %v469
      %v629 = vpop.f32.mrb[0].mxu0
      %v630 = vadd.f32 %v325, %v629
      %v631 = vpop.f32.mrb[0].mxu0
      %v632 = vpop.f32.mrb[0].mxu0
      %v633 = vadd.f32 %v325, %v632
      %v634 = vpop.f32.mrb[0].mxu0
      %635 = vdwg.mxu0
      %v636 = vmax.f32 %v510, 0.0
      %v637 = vmax.f32 %v513, 0.0
      %v638 = vmax.f32 %v518, 0.0
      %v639 = vmax.f32 %v521, 0.0
      %v640 = vmax.f32 %v526, 0.0
      %v641 = vmax.f32 %v529, 0.0
      %v642 = vmax.f32 %v534, 0.0
      %v643 = vmax.f32 %v537, 0.0
      %v644 = vmax.f32 %v542, 0.0
      %v645 = vmax.f32 %v545, 0.0
      %v646 = vmax.f32 %v550, 0.0
      %v647 = vmax.f32 %v553, 0.0
      %v648 = vmax.f32 %v558, 0.0
      %v649 = vmax.f32 %v561, 0.0
      %v650 = vmax.f32 %v566, 0.0
      %v651 = vmax.f32 %v569, 0.0
      %v652 = vmax.f32 %v574, 0.0
      %v653 = vmax.f32 %v577, 0.0
      %v654 = vmax.f32 %v582, 0.0
      %v655 = vmax.f32 %v585, 0.0
      %v656 = vmax.f32 %v590, 0.0
      %v657 = vmax.f32 %v593, 0.0
      %v658 = vmax.f32 %v598, 0.0
      %v659 = vmax.f32 %v601, 0.0
      %v660 = vmax.f32 %v606, 0.0
      %v661 = vmax.f32 %v609, 0.0
      %v662 = vmax.f32 %v614, 0.0
      %v663 = vmax.f32 %v617, 0.0
      %v664 = vmax.f32 %v622, 0.0
      %v665 = vmax.f32 %v625, 0.0
      %v666 = vmax.f32 %v630, 0.0
      %v667 = vmax.f32 %v633, 0.0
      %v668 = vpack.c.bf16 %v637, %v636
      %v669 = vpack.c.bf16 %v639, %v638
      %v670 = vpack.c.bf16 %v641, %v640
      %v671 = vpack.c.bf16 %v643, %v642
      %v672 = vpack.c.bf16 %v645, %v644
      %v673 = vpack.c.bf16 %v647, %v646
      %v674 = vpack.c.bf16 %v649, %v648
      %v675 = vpack.c.bf16 %v651, %v650
      %v676 = vpack.c.bf16 %v653, %v652
      %v677 = vpack.c.bf16 %v655, %v654
      %v678 = vpack.c.bf16 %v657, %v656
      %v679 = vpack.c.bf16 %v659, %v658
      %v680 = vpack.c.bf16 %v661, %v660
      %v681 = vpack.c.bf16 %v663, %v662
      %v682 = vpack.c.bf16 %v665, %v664
      %v683 = vpack.c.bf16 %v667, %v666
      %v684 = vld [vmem:[%s3] sm:$0xf]
      %v685 = vld [vmem:[%s3 + $0x4] sm:$0xf]
      %v686 = vld [vmem:[%s3 + $0x8] sm:$0xf]
      %v687 = vld [vmem:[%s3 + $0xc] sm:$0xf]
      %v688 = vld [vmem:[%s4] sm:$0x1]
      %v690 = vlaneseq
      %v691 = vshrl.u32 %v690, 7
      %v692 = vsub.s32 0, %v691
      %v693 = vrot.slane %v688, %v692
      %v699 = vunpack.c.l.b16 %v684
      %v700 = vunpack.c.l.b16 %v685
      %v701 = vunpack.c.l.b16 %v686
      %v702 = vunpack.c.l.b16 %v687
      %v703 = vpack.c.b16 %v700, %v699
      %v704 = vpack.c.b16 %v702, %v701
      %vm707 = vcmask 261120
      %v709 = vsel %vm707, %v668, 0
      %v712 = vsel %vm707, %v669, 0
      %v715 = vsel %vm707, %v670, 0
      %v718 = vsel %vm707, %v671, 0
      %v721 = vsel %vm707, %v672, 0
      %v724 = vsel %vm707, %v673, 0
      %v727 = vsel %vm707, %v674, 0
      %v730 = vsel %vm707, %v675, 0
      %v733 = vsel %vm707, %v676, 0
      %v736 = vsel %vm707, %v677, 0
      %v739 = vsel %vm707, %v678, 0
      %v742 = vsel %vm707, %v679, 0
      %v745 = vsel %vm707, %v680, 0
      %v748 = vsel %vm707, %v681, 0
      %v751 = vsel %vm707, %v682, 0
      %v754 = vsel %vm707, %v683, 0
      %756 = vmatprep.subr.bf16.mxu0 0
      %757 = vmatpush1.bf16.msra.mxu0 %v703
      %758 = vmatprep.subr.bf16.mxu0 0
      %759 = vmatpush1.bf16.msra.mxu0 %v704
      %760 = vmatprep.subr.bf16.mxu0 0
      %761 = vmatpush1.bf16.msra.mxu0 0
      %762 = vmatprep.subr.bf16.mxu0 0
      %763 = vmatpush1.bf16.msra.mxu0 0
      %764 = vmatprep.subr.bf16.mxu0 0
      %765 = vmatpush1.bf16.msra.mxu0 0
      %766 = vmatprep.subr.bf16.mxu0 0
      %767 = vmatpush1.bf16.msra.mxu0 0
      %768 = vmatprep.subr.bf16.mxu0 0
      %769 = vmatpush1.bf16.msra.mxu0 0
      %770 = vmatprep.subr.bf16.mxu0 0
      %771 = vmatpush1.bf16.msra.mxu0 0
      %772 = vmatprep.subr.bf16.mxu0 0
      %773 = vmatpush1.bf16.msra.mxu0 0
      %774 = vmatprep.subr.bf16.mxu0 0
      %775 = vmatpush1.bf16.msra.mxu0 0
      %776 = vmatprep.subr.bf16.mxu0 0
      %777 = vmatpush1.bf16.msra.mxu0 0
      %778 = vmatprep.subr.bf16.mxu0 0
      %779 = vmatpush1.bf16.msra.mxu0 0
      %780 = vmatprep.subr.bf16.mxu0 0
      %781 = vmatpush1.bf16.msra.mxu0 0
      %782 = vmatprep.subr.bf16.mxu0 0
      %783 = vmatpush1.bf16.msra.mxu0 0
      %784 = vmatprep.subr.bf16.mxu0 0
      %785 = vmatpush1.bf16.msra.mxu0 0
      %786 = vmatprep.subr.bf16.mxu0 0
      %787 = vmatpush1.bf16.msra.mxu0 0
      %788 = vmatprep.mubr.bf16.mxu0 0
      %789 = vmatmul.mubr.bf16.gmra.mrb[0].mxu0 %v709
      %v790 = vpop.f32.mrb[0].mxu0
      %v791 = vadd.f32 %v693, %v790
      %v792 = vpop.f32.mrb[0].mxu0
      %v793 = vpop.f32.mrb[0].mxu0
      %v794 = vadd.f32 %v693, %v793
      %v795 = vpop.f32.mrb[0].mxu0
      %796 = vmatprep.mubr.bf16.mxu0 0
      %797 = vmatmul.mubr.bf16.gmra.mrb[0].mxu0 %v712
      %v798 = vpop.f32.mrb[0].mxu0
      %v799 = vadd.f32 %v693, %v798
      %v800 = vpop.f32.mrb[0].mxu0
      %v801 = vpop.f32.mrb[0].mxu0
      %v802 = vadd.f32 %v693, %v801
      %v803 = vpop.f32.mrb[0].mxu0
      %804 = vmatprep.mubr.bf16.mxu0 0
      %805 = vmatmul.mubr.bf16.gmra.mrb[0].mxu0 %v715
      %v806 = vpop.f32.mrb[0].mxu0
      %v807 = vadd.f32 %v693, %v806
      %v808 = vpop.f32.mrb[0].mxu0
      %v809 = vpop.f32.mrb[0].mxu0
      %v810 = vadd.f32 %v693, %v809
      %v811 = vpop.f32.mrb[0].mxu0
      %812 = vmatprep.mubr.bf16.mxu0 0
      %813 = vmatmul.mubr.bf16.gmra.mrb[0].mxu0 %v718
      %v814 = vpop.f32.mrb[0].mxu0
      %v815 = vadd.f32 %v693, %v814
      %v816 = vpop.f32.mrb[0].mxu0
      %v817 = vpop.f32.mrb[0].mxu0
      %v818 = vadd.f32 %v693, %v817
      %v819 = vpop.f32.mrb[0].mxu0
      %820 = vmatprep.mubr.bf16.mxu0 0
      %821 = vmatmul.mubr.bf16.gmra.mrb[0].mxu0 %v721
      %v822 = vpop.f32.mrb[0].mxu0
      %v823 = vadd.f32 %v693, %v822
      %v824 = vpop.f32.mrb[0].mxu0
      %v825 = vpop.f32.mrb[0].mxu0
      %v826 = vadd.f32 %v693, %v825
      %v827 = vpop.f32.mrb[0].mxu0
      %828 = vmatprep.mubr.bf16.mxu0 0
      %829 = vmatmul.mubr.bf16.gmra.mrb[0].mxu0 %v724
      %v830 = vpop.f32.mrb[0].mxu0
      %v831 = vadd.f32 %v693, %v830
      %v832 = vpop.f32.mrb[0].mxu0
      %v833 = vpop.f32.mrb[0].mxu0
      %v834 = vadd.f32 %v693, %v833
      %v835 = vpop.f32.mrb[0].mxu0
      %836 = vmatprep.mubr.bf16.mxu0 0
      %837 = vmatmul.mubr.bf16.gmra.mrb[0].mxu0 %v727
      %v838 = vpop.f32.mrb[0].mxu0
      %v839 = vadd.f32 %v693, %v838
      %v840 = vpop.f32.mrb[0].mxu0
      %v841 = vpop.f32.mrb[0].mxu0
      %v842 = vadd.f32 %v693, %v841
      %v843 = vpop.f32.mrb[0].mxu0
      %844 = vmatprep.mubr.bf16.mxu0 0
      %845 = vmatmul.mubr.bf16.gmra.mrb[0].mxu0 %v730
      %v846 = vpop.f32.mrb[0].mxu0
      %v847 = vadd.f32 %v693, %v846
      %v848 = vpop.f32.mrb[0].mxu0
      %v849 = vpop.f32.mrb[0].mxu0
      %v850 = vadd.f32 %v693, %v849
      %v851 = vpop.f32.mrb[0].mxu0
      %852 = vmatprep.mubr.bf16.mxu0 0
      %853 = vmatmul.mubr.bf16.gmra.mrb[0].mxu0 %v733
      %v854 = vpop.f32.mrb[0].mxu0
      %v855 = vadd.f32 %v693, %v854
      %v856 = vpop.f32.mrb[0].mxu0
      %v857 = vpop.f32.mrb[0].mxu0
      %v858 = vadd.f32 %v693, %v857
      %v859 = vpop.f32.mrb[0].mxu0
      %860 = vmatprep.mubr.bf16.mxu0 0
      %861 = vmatmul.mubr.bf16.gmra.mrb[0].mxu0 %v736
      %v862 = vpop.f32.mrb[0].mxu0
      %v863 = vadd.f32 %v693, %v862
      %v864 = vpop.f32.mrb[0].mxu0
      %v865 = vpop.f32.mrb[0].mxu0
      %v866 = vadd.f32 %v693, %v865
      %v867 = vpop.f32.mrb[0].mxu0
      %868 = vmatprep.mubr.bf16.mxu0 0
      %869 = vmatmul.mubr.bf16.gmra.mrb[0].mxu0 %v739
      %v870 = vpop.f32.mrb[0].mxu0
      %v871 = vadd.f32 %v693, %v870
      %v872 = vpop.f32.mrb[0].mxu0
      %v873 = vpop.f32.mrb[0].mxu0
      %v874 = vadd.f32 %v693, %v873
      %v875 = vpop.f32.mrb[0].mxu0
      %876 = vmatprep.mubr.bf16.mxu0 0
      %877 = vmatmul.mubr.bf16.gmra.mrb[0].mxu0 %v742
      %v878 = vpop.f32.mrb[0].mxu0
      %v879 = vadd.f32 %v693, %v878
      %v880 = vpop.f32.mrb[0].mxu0
      %v881 = vpop.f32.mrb[0].mxu0
      %v882 = vadd.f32 %v693, %v881
      %v883 = vpop.f32.mrb[0].mxu0
      %884 = vmatprep.mubr.bf16.mxu0 0
      %885 = vmatmul.mubr.bf16.gmra.mrb[0].mxu0 %v745
      %v886 = vpop.f32.mrb[0].mxu0
      %v887 = vadd.f32 %v693, %v886
      %v888 = vpop.f32.mrb[0].mxu0
      %v889 = vpop.f32.mrb[0].mxu0
      %v890 = vadd.f32 %v693, %v889
      %v891 = vpop.f32.mrb[0].mxu0
      %892 = vmatprep.mubr.bf16.mxu0 0
      %893 = vmatmul.mubr.bf16.gmra.mrb[0].mxu0 %v748
      %v894 = vpop.f32.mrb[0].mxu0
      %v895 = vadd.f32 %v693, %v894
      %v896 = vpop.f32.mrb[0].mxu0
      %v897 = vpop.f32.mrb[0].mxu0
      %v898 = vadd.f32 %v693, %v897
      %v899 = vpop.f32.mrb[0].mxu0
      %900 = vmatprep.mubr.bf16.mxu0 0
      %901 = vmatmul.mubr.bf16.gmra.mrb[0].mxu0 %v751
      %v902 = vpop.f32.mrb[0].mxu0
      %v903 = vadd.f32 %v693, %v902
      %v904 = vpop.f32.mrb[0].mxu0
      %v905 = vpop.f32.mrb[0].mxu0
      %v906 = vadd.f32 %v693, %v905
      %v907 = vpop.f32.mrb[0].mxu0
      %908 = vmatprep.mubr.bf16.mxu0 0
      %909 = vmatmul.mubr.bf16.gmra.mrb[0].mxu0 %v754
      %v910 = vpop.f32.mrb[0].mxu0
      %v911 = vadd.f32 %v693, %v910
      %v912 = vpop.f32.mrb[0].mxu0
      %v913 = vpop.f32.mrb[0].mxu0
      %v914 = vadd.f32 %v693, %v913
      %v915 = vpop.f32.mrb[0].mxu0
      %916 = vdwg.mxu0
      %v917 = vmax.f32 %v791, 0.0
      %v918 = vmax.f32 %v794, 0.0
      %v919 = vmax.f32 %v799, 0.0
      %v920 = vmax.f32 %v802, 0.0
      %v921 = vmax.f32 %v807, 0.0
      %v922 = vmax.f32 %v810, 0.0
      %v923 = vmax.f32 %v815, 0.0
      %v924 = vmax.f32 %v818, 0.0
      %v925 = vmax.f32 %v823, 0.0
      %v926 = vmax.f32 %v826, 0.0
      %v927 = vmax.f32 %v831, 0.0
      %v928 = vmax.f32 %v834, 0.0
      %v929 = vmax.f32 %v839, 0.0
      %v930 = vmax.f32 %v842, 0.0
      %v931 = vmax.f32 %v847, 0.0
      %v932 = vmax.f32 %v850, 0.0
      %v933 = vmax.f32 %v855, 0.0
      %v934 = vmax.f32 %v858, 0.0
      %v935 = vmax.f32 %v863, 0.0
      %v936 = vmax.f32 %v866, 0.0
      %v937 = vmax.f32 %v871, 0.0
      %v938 = vmax.f32 %v874, 0.0
      %v939 = vmax.f32 %v879, 0.0
      %v940 = vmax.f32 %v882, 0.0
      %v941 = vmax.f32 %v887, 0.0
      %v942 = vmax.f32 %v890, 0.0
      %v943 = vmax.f32 %v895, 0.0
      %v944 = vmax.f32 %v898, 0.0
      %v945 = vmax.f32 %v903, 0.0
      %v946 = vmax.f32 %v906, 0.0
      %v947 = vmax.f32 %v911, 0.0
      %v948 = vmax.f32 %v914, 0.0
      %v949 = vpack.c.bf16 %v918, %v917
      %v950 = vpack.c.bf16 %v920, %v919
      %v951 = vpack.c.bf16 %v922, %v921
      %v952 = vpack.c.bf16 %v924, %v923
      %v953 = vpack.c.bf16 %v926, %v925
      %v954 = vpack.c.bf16 %v928, %v927
      %v955 = vpack.c.bf16 %v930, %v929
      %v956 = vpack.c.bf16 %v932, %v931
      %v957 = vpack.c.bf16 %v934, %v933
      %v958 = vpack.c.bf16 %v936, %v935
      %v959 = vpack.c.bf16 %v938, %v937
      %v960 = vpack.c.bf16 %v940, %v939
      %v961 = vpack.c.bf16 %v942, %v941
      %v962 = vpack.c.bf16 %v944, %v943
      %v963 = vpack.c.bf16 %v946, %v945
      %v964 = vpack.c.bf16 %v948, %v947
      %v965 = vld [vmem:[%s5] sm:$0xf]
      %v966 = vld [vmem:[%s5 + $0x4] sm:$0xf]
      %v967 = vld [vmem:[%s5 + $0x8] sm:$0xf]
      %v968 = vld [vmem:[%s5 + $0xc] sm:$0xf]
      %v969 = vld [vmem:[%s5 + $0x10] sm:$0xf]
      %v970 = vld [vmem:[%s5 + $0x14] sm:$0xf]
      %v971 = vld [vmem:[%s5 + $0x18] sm:$0xf]
      %v972 = vld [vmem:[%s5 + $0x1c] sm:$0xf]
      %v973 = vld [vmem:[%s6] sm:$0x1]
      %v975 = vlaneseq
      %v976 = vshrl.u32 %v975, 7
      %v977 = vsub.s32 0, %v976
      %v978 = vrot.slane %v973, %v977
      %v988 = vunpack.c.l.b16 %v965
      %v989 = vunpack.c.l.b16 %v966
      %v990 = vunpack.c.l.b16 %v967
      %v991 = vunpack.c.l.b16 %v968
      %v992 = vunpack.c.l.b16 %v969
      %v993 = vunpack.c.l.b16 %v970
      %v994 = vunpack.c.l.b16 %v971
      %v995 = vunpack.c.l.b16 %v972
      %v996 = vpack.c.b16 %v989, %v988
      %v997 = vpack.c.b16 %v991, %v990
      %v998 = vpack.c.b16 %v993, %v992
      %v999 = vpack.c.b16 %v995, %v994
      %vm1004 = vcmask 523264
      %v1006 = vsel %vm1004, %v949, 0
      %v1009 = vsel %vm1004, %v950, 0
      %v1012 = vsel %vm1004, %v951, 0
      %v1015 = vsel %vm1004, %v952, 0
      %v1018 = vsel %vm1004, %v953, 0
      %v1021 = vsel %vm1004, %v954, 0
      %v1024 = vsel %vm1004, %v955, 0
      %v1027 = vsel %vm1004, %v956, 0
      %v1030 = vsel %vm1004, %v957, 0
      %v1033 = vsel %vm1004, %v958, 0
      %v1036 = vsel %vm1004, %v959, 0
      %v1039 = vsel %vm1004, %v960, 0
      %v1042 = vsel %vm1004, %v961, 0
      %v1045 = vsel %vm1004, %v962, 0
      %v1048 = vsel %vm1004, %v963, 0
      %v1051 = vsel %vm1004, %v964, 0
      %1053 = vmatprep.subr.bf16.mxu0 0
      %1054 = vmatpush1.bf16.msra.mxu0 %v996
      %1055 = vmatprep.subr.bf16.mxu0 0
      %1056 = vmatpush1.bf16.msra.mxu0 %v997
      %1057 = vmatprep.subr.bf16.mxu0 0
      %1058 = vmatpush1.bf16.msra.mxu0 %v998
      %1059 = vmatprep.subr.bf16.mxu0 0
      %1060 = vmatpush1.bf16.msra.mxu0 %v999
      %1061 = vmatprep.subr.bf16.mxu0 0
      %1062 = vmatpush1.bf16.msra.mxu0 0
      %1063 = vmatprep.subr.bf16.mxu0 0
      %1064 = vmatpush1.bf16.msra.mxu0 0
      %1065 = vmatprep.subr.bf16.mxu0 0
      %1066 = vmatpush1.bf16.msra.mxu0 0
      %1067 = vmatprep.subr.bf16.mxu0 0
      %1068 = vmatpush1.bf16.msra.mxu0 0
      %1069 = vmatprep.subr.bf16.mxu0 0
      %1070 = vmatpush1.bf16.msra.mxu0 0
      %1071 = vmatprep.subr.bf16.mxu0 0
      %1072 = vmatpush1.bf16.msra.mxu0 0
      %1073 = vmatprep.subr.bf16.mxu0 0
      %1074 = vmatpush1.bf16.msra.mxu0 0
      %1075 = vmatprep.subr.bf16.mxu0 0
      %1076 = vmatpush1.bf16.msra.mxu0 0
      %1077 = vmatprep.subr.bf16.mxu0 0
      %1078 = vmatpush1.bf16.msra.mxu0 0
      %1079 = vmatprep.subr.bf16.mxu0 0
      %1080 = vmatpush1.bf16.msra.mxu0 0
      %1081 = vmatprep.subr.bf16.mxu0 0
      %1082 = vmatpush1.bf16.msra.mxu0 0
      %1083 = vmatprep.subr.bf16.mxu0 0
      %1084 = vmatpush1.bf16.msra.mxu0 0
      %1085 = vmatprep.mubr.bf16.mxu0 0
      %1086 = vmatmul.mubr.bf16.gmra.mrb[0].mxu0 %v1006
      %v1087 = vpop.f32.mrb[0].mxu0
      %v1088 = vadd.f32 %v978, %v1087
      %v1089 = vpop.f32.mrb[0].mxu0
      %v1090 = vpop.f32.mrb[0].mxu0
      %v1091 = vadd.f32 %v978, %v1090
      %v1092 = vpop.f32.mrb[0].mxu0
      %1093 = vmatprep.mubr.bf16.mxu0 0
      %1094 = vmatmul.mubr.bf16.gmra.mrb[0].mxu0 %v1009
      %v1095 = vpop.f32.mrb[0].mxu0
      %v1096 = vadd.f32 %v978, %v1095
      %v1097 = vpop.f32.mrb[0].mxu0
      %v1098 = vpop.f32.mrb[0].mxu0
      %v1099 = vadd.f32 %v978, %v1098
      %v1100 = vpop.f32.mrb[0].mxu0
      %1101 = vmatprep.mubr.bf16.mxu0 0
      %1102 = vmatmul.mubr.bf16.gmra.mrb[0].mxu0 %v1012
      %v1103 = vpop.f32.mrb[0].mxu0
      %v1104 = vadd.f32 %v978, %v1103
      %v1105 = vpop.f32.mrb[0].mxu0
      %v1106 = vpop.f32.mrb[0].mxu0
      %v1107 = vadd.f32 %v978, %v1106
      %v1108 = vpop.f32.mrb[0].mxu0
      %1109 = vmatprep.mubr.bf16.mxu0 0
      %1110 = vmatmul.mubr.bf16.gmra.mrb[0].mxu0 %v1015
      %v1111 = vpop.f32.mrb[0].mxu0
      %v1112 = vadd.f32 %v978, %v1111
      %v1113 = vpop.f32.mrb[0].mxu0
      %v1114 = vpop.f32.mrb[0].mxu0
      %v1115 = vadd.f32 %v978, %v1114
      %v1116 = vpop.f32.mrb[0].mxu0
      %1117 = vmatprep.mubr.bf16.mxu0 0
      %1118 = vmatmul.mubr.bf16.gmra.mrb[0].mxu0 %v1018
      %v1119 = vpop.f32.mrb[0].mxu0
      %v1120 = vadd.f32 %v978, %v1119
      %v1121 = vpop.f32.mrb[0].mxu0
      %v1122 = vpop.f32.mrb[0].mxu0
      %v1123 = vadd.f32 %v978, %v1122
      %v1124 = vpop.f32.mrb[0].mxu0
      %1125 = vmatprep.mubr.bf16.mxu0 0
      %1126 = vmatmul.mubr.bf16.gmra.mrb[0].mxu0 %v1021
      %v1127 = vpop.f32.mrb[0].mxu0
      %v1128 = vadd.f32 %v978, %v1127
      %v1129 = vpop.f32.mrb[0].mxu0
      %v1130 = vpop.f32.mrb[0].mxu0
      %v1131 = vadd.f32 %v978, %v1130
      %v1132 = vpop.f32.mrb[0].mxu0
      %1133 = vmatprep.mubr.bf16.mxu0 0
      %1134 = vmatmul.mubr.bf16.gmra.mrb[0].mxu0 %v1024
      %v1135 = vpop.f32.mrb[0].mxu0
      %v1136 = vadd.f32 %v978, %v1135
      %v1137 = vpop.f32.mrb[0].mxu0
      %v1138 = vpop.f32.mrb[0].mxu0
      %v1139 = vadd.f32 %v978, %v1138
      %v1140 = vpop.f32.mrb[0].mxu0
      %1141 = vmatprep.mubr.bf16.mxu0 0
      %1142 = vmatmul.mubr.bf16.gmra.mrb[0].mxu0 %v1027
      %v1143 = vpop.f32.mrb[0].mxu0
      %v1144 = vadd.f32 %v978, %v1143
      %v1145 = vpop.f32.mrb[0].mxu0
      %v1146 = vpop.f32.mrb[0].mxu0
      %v1147 = vadd.f32 %v978, %v1146
      %v1148 = vpop.f32.mrb[0].mxu0
      %1149 = vmatprep.mubr.bf16.mxu0 0
      %1150 = vmatmul.mubr.bf16.gmra.mrb[0].mxu0 %v1030
      %v1151 = vpop.f32.mrb[0].mxu0
      %v1152 = vadd.f32 %v978, %v1151
      %v1153 = vpop.f32.mrb[0].mxu0
      %v1154 = vpop.f32.mrb[0].mxu0
      %v1155 = vadd.f32 %v978, %v1154
      %v1156 = vpop.f32.mrb[0].mxu0
      %1157 = vmatprep.mubr.bf16.mxu0 0
      %1158 = vmatmul.mubr.bf16.gmra.mrb[0].mxu0 %v1033
      %v1159 = vpop.f32.mrb[0].mxu0
      %v1160 = vadd.f32 %v978, %v1159
      %v1161 = vpop.f32.mrb[0].mxu0
      %v1162 = vpop.f32.mrb[0].mxu0
      %v1163 = vadd.f32 %v978, %v1162
      %v1164 = vpop.f32.mrb[0].mxu0
      %1165 = vmatprep.mubr.bf16.mxu0 0
      %1166 = vmatmul.mubr.bf16.gmra.mrb[0].mxu0 %v1036
      %v1167 = vpop.f32.mrb[0].mxu0
      %v1168 = vadd.f32 %v978, %v1167
      %v1169 = vpop.f32.mrb[0].mxu0
      %v1170 = vpop.f32.mrb[0].mxu0
      %v1171 = vadd.f32 %v978, %v1170
      %v1172 = vpop.f32.mrb[0].mxu0
      %1173 = vmatprep.mubr.bf16.mxu0 0
      %1174 = vmatmul.mubr.bf16.gmra.mrb[0].mxu0 %v1039
      %v1175 = vpop.f32.mrb[0].mxu0
      %v1176 = vadd.f32 %v978, %v1175
      %v1177 = vpop.f32.mrb[0].mxu0
      %v1178 = vpop.f32.mrb[0].mxu0
      %v1179 = vadd.f32 %v978, %v1178
      %v1180 = vpop.f32.mrb[0].mxu0
      %1181 = vmatprep.mubr.bf16.mxu0 0
      %1182 = vmatmul.mubr.bf16.gmra.mrb[0].mxu0 %v1042
      %v1183 = vpop.f32.mrb[0].mxu0
      %v1184 = vadd.f32 %v978, %v1183
      %v1185 = vpop.f32.mrb[0].mxu0
      %v1186 = vpop.f32.mrb[0].mxu0
      %v1187 = vadd.f32 %v978, %v1186
      %v1188 = vpop.f32.mrb[0].mxu0
      %1189 = vmatprep.mubr.bf16.mxu0 0
      %1190 = vmatmul.mubr.bf16.gmra.mrb[0].mxu0 %v1045
      %v1191 = vpop.f32.mrb[0].mxu0
      %v1192 = vadd.f32 %v978, %v1191
      %v1193 = vpop.f32.mrb[0].mxu0
      %v1194 = vpop.f32.mrb[0].mxu0
      %v1195 = vadd.f32 %v978, %v1194
      %v1196 = vpop.f32.mrb[0].mxu0
      %1197 = vmatprep.mubr.bf16.mxu0 0
      %1198 = vmatmul.mubr.bf16.gmra.mrb[0].mxu0 %v1048
      %v1199 = vpop.f32.mrb[0].mxu0
      %v1200 = vadd.f32 %v978, %v1199
      %v1201 = vpop.f32.mrb[0].mxu0
      %v1202 = vpop.f32.mrb[0].mxu0
      %v1203 = vadd.f32 %v978, %v1202
      %v1204 = vpop.f32.mrb[0].mxu0
      %1205 = vmatprep.mubr.bf16.mxu0 0
      %1206 = vmatmul.mubr.bf16.gmra.mrb[0].mxu0 %v1051
      %v1207 = vpop.f32.mrb[0].mxu0
      %v1208 = vadd.f32 %v978, %v1207
      %v1209 = vpop.f32.mrb[0].mxu0
      %v1210 = vpop.f32.mrb[0].mxu0
      %v1211 = vadd.f32 %v978, %v1210
      %v1212 = vpop.f32.mrb[0].mxu0
      %1213 = vdwg.mxu0
      %v1214 = vpack.c.bf16 %v1091, %v1088
      %v1215 = vpack.c.bf16 %v1099, %v1096
      %v1216 = vpack.c.bf16 %v1107, %v1104
      %v1217 = vpack.c.bf16 %v1115, %v1112
      %v1218 = vpack.c.bf16 %v1123, %v1120
      %v1219 = vpack.c.bf16 %v1131, %v1128
      %v1220 = vpack.c.bf16 %v1139, %v1136
      %v1221 = vpack.c.bf16 %v1147, %v1144
      %v1222 = vpack.c.bf16 %v1155, %v1152
      %v1223 = vpack.c.bf16 %v1163, %v1160
      %v1224 = vpack.c.bf16 %v1171, %v1168
      %v1225 = vpack.c.bf16 %v1179, %v1176
      %v1226 = vpack.c.bf16 %v1187, %v1184
      %v1227 = vpack.c.bf16 %v1195, %v1192
      %v1228 = vpack.c.bf16 %v1203, %v1200
      %v1229 = vpack.c.bf16 %v1211, %v1208
      %s1230 = scalar_lea.vmem %s5, 32
      %v1231 = vld [vmem:[%s1230] sm:$0xf]
      %v1232 = vld [vmem:[%s1230 + $0x4] sm:$0xf]
      %v1233 = vld [vmem:[%s1230 + $0x8] sm:$0xf]
      %v1234 = vld [vmem:[%s1230 + $0xc] sm:$0xf]
      %v1235 = vld [vmem:[%s1230 + $0x10] sm:$0xf]
      %v1236 = vld [vmem:[%s1230 + $0x14] sm:$0xf]
      %v1237 = vld [vmem:[%s1230 + $0x18] sm:$0xf]
      %v1238 = vld [vmem:[%s1230 + $0x1c] sm:$0xf]
      %s1239 = scalar_lea.vmem %s6, 1
      %v1240 = vld [vmem:[%s1239] sm:$0x1]
      %v1242 = vlaneseq
      %v1243 = vshrl.u32 %v1242, 7
      %v1244 = vsub.s32 0, %v1243
      %v1245 = vrot.slane %v1240, %v1244
      %v1255 = vunpack.c.l.b16 %v1231
      %v1256 = vunpack.c.l.b16 %v1232
      %v1257 = vunpack.c.l.b16 %v1233
      %v1258 = vunpack.c.l.b16 %v1234
      %v1259 = vunpack.c.l.b16 %v1235
      %v1260 = vunpack.c.l.b16 %v1236
      %v1261 = vunpack.c.l.b16 %v1237
      %v1262 = vunpack.c.l.b16 %v1238
      %v1263 = vpack.c.b16 %v1256, %v1255
      %v1264 = vpack.c.b16 %v1258, %v1257
      %v1265 = vpack.c.b16 %v1260, %v1259
      %v1266 = vpack.c.b16 %v1262, %v1261
      %v1272 = vsel %vm1004, %v1214, 0
      %v1275 = vsel %vm1004, %v1215, 0
      %v1278 = vsel %vm1004, %v1216, 0
      %v1281 = vsel %vm1004, %v1217, 0
      %v1284 = vsel %vm1004, %v1218, 0
      %v1287 = vsel %vm1004, %v1219, 0
      %v1290 = vsel %vm1004, %v1220, 0
      %v1293 = vsel %vm1004, %v1221, 0
      %v1296 = vsel %vm1004, %v1222, 0
      %v1299 = vsel %vm1004, %v1223, 0
      %v1302 = vsel %vm1004, %v1224, 0
      %v1305 = vsel %vm1004, %v1225, 0
      %v1308 = vsel %vm1004, %v1226, 0
      %v1311 = vsel %vm1004, %v1227, 0
      %v1314 = vsel %vm1004, %v1228, 0
      %v1317 = vsel %vm1004, %v1229, 0
      %1319 = vmatprep.subr.bf16.mxu0 0
      %1320 = vmatpush1.bf16.msra.mxu0 %v1263
      %1321 = vmatprep.subr.bf16.mxu0 0
      %1322 = vmatpush1.bf16.msra.mxu0 %v1264
      %1323 = vmatprep.subr.bf16.mxu0 0
      %1324 = vmatpush1.bf16.msra.mxu0 %v1265
      %1325 = vmatprep.subr.bf16.mxu0 0
      %1326 = vmatpush1.bf16.msra.mxu0 %v1266
      %1327 = vmatprep.subr.bf16.mxu0 0
      %1328 = vmatpush1.bf16.msra.mxu0 0
      %1329 = vmatprep.subr.bf16.mxu0 0
      %1330 = vmatpush1.bf16.msra.mxu0 0
      %1331 = vmatprep.subr.bf16.mxu0 0
      %1332 = vmatpush1.bf16.msra.mxu0 0
      %1333 = vmatprep.subr.bf16.mxu0 0
      %1334 = vmatpush1.bf16.msra.mxu0 0
      %1335 = vmatprep.subr.bf16.mxu0 0
      %1336 = vmatpush1.bf16.msra.mxu0 0
      %1337 = vmatprep.subr.bf16.mxu0 0
      %1338 = vmatpush1.bf16.msra.mxu0 0
      %1339 = vmatprep.subr.bf16.mxu0 0
      %1340 = vmatpush1.bf16.msra.mxu0 0
      %1341 = vmatprep.subr.bf16.mxu0 0
      %1342 = vmatpush1.bf16.msra.mxu0 0
      %1343 = vmatprep.subr.bf16.mxu0 0
      %1344 = vmatpush1.bf16.msra.mxu0 0
      %1345 = vmatprep.subr.bf16.mxu0 0
      %1346 = vmatpush1.bf16.msra.mxu0 0
      %1347 = vmatprep.subr.bf16.mxu0 0
      %1348 = vmatpush1.bf16.msra.mxu0 0
      %1349 = vmatprep.subr.bf16.mxu0 0
      %1350 = vmatpush1.bf16.msra.mxu0 0
      %1351 = vmatprep.mubr.bf16.mxu0 0
      %1352 = vmatmul.mubr.bf16.gmra.mrb[0].mxu0 %v1272
      %v1353 = vpop.f32.mrb[0].mxu0
      %v1354 = vadd.f32 %v1245, %v1353
      %v1355 = vpop.f32.mrb[0].mxu0
      %v1356 = vpop.f32.mrb[0].mxu0
      %v1357 = vadd.f32 %v1245, %v1356
      %v1358 = vpop.f32.mrb[0].mxu0
      %1359 = vmatprep.mubr.bf16.mxu0 0
      %1360 = vmatmul.mubr.bf16.gmra.mrb[0].mxu0 %v1275
      %v1361 = vpop.f32.mrb[0].mxu0
      %v1362 = vadd.f32 %v1245, %v1361
      %v1363 = vpop.f32.mrb[0].mxu0
      %v1364 = vpop.f32.mrb[0].mxu0
      %v1365 = vadd.f32 %v1245, %v1364
      %v1366 = vpop.f32.mrb[0].mxu0
      %1367 = vmatprep.mubr.bf16.mxu0 0
      %1368 = vmatmul.mubr.bf16.gmra.mrb[0].mxu0 %v1278
      %v1369 = vpop.f32.mrb[0].mxu0
      %v1370 = vadd.f32 %v1245, %v1369
      %v1371 = vpop.f32.mrb[0].mxu0
      %v1372 = vpop.f32.mrb[0].mxu0
      %v1373 = vadd.f32 %v1245, %v1372
      %v1374 = vpop.f32.mrb[0].mxu0
      %1375 = vmatprep.mubr.bf16.mxu0 0
      %1376 = vmatmul.mubr.bf16.gmra.mrb[0].mxu0 %v1281
      %v1377 = vpop.f32.mrb[0].mxu0
      %v1378 = vadd.f32 %v1245, %v1377
      %v1379 = vpop.f32.mrb[0].mxu0
      %v1380 = vpop.f32.mrb[0].mxu0
      %v1381 = vadd.f32 %v1245, %v1380
      %v1382 = vpop.f32.mrb[0].mxu0
      %1383 = vmatprep.mubr.bf16.mxu0 0
      %1384 = vmatmul.mubr.bf16.gmra.mrb[0].mxu0 %v1284
      %v1385 = vpop.f32.mrb[0].mxu0
      %v1386 = vadd.f32 %v1245, %v1385
      %v1387 = vpop.f32.mrb[0].mxu0
      %v1388 = vpop.f32.mrb[0].mxu0
      %v1389 = vadd.f32 %v1245, %v1388
      %v1390 = vpop.f32.mrb[0].mxu0
      %1391 = vmatprep.mubr.bf16.mxu0 0
      %1392 = vmatmul.mubr.bf16.gmra.mrb[0].mxu0 %v1287
      %v1393 = vpop.f32.mrb[0].mxu0
      %v1394 = vadd.f32 %v1245, %v1393
      %v1395 = vpop.f32.mrb[0].mxu0
      %v1396 = vpop.f32.mrb[0].mxu0
      %v1397 = vadd.f32 %v1245, %v1396
      %v1398 = vpop.f32.mrb[0].mxu0
      %1399 = vmatprep.mubr.bf16.mxu0 0
      %1400 = vmatmul.mubr.bf16.gmra.mrb[0].mxu0 %v1290
      %v1401 = vpop.f32.mrb[0].mxu0
      %v1402 = vadd.f32 %v1245, %v1401
      %v1403 = vpop.f32.mrb[0].mxu0
      %v1404 = vpop.f32.mrb[0].mxu0
      %v1405 = vadd.f32 %v1245, %v1404
      %v1406 = vpop.f32.mrb[0].mxu0
      %1407 = vmatprep.mubr.bf16.mxu0 0
      %1408 = vmatmul.mubr.bf16.gmra.mrb[0].mxu0 %v1293
      %v1409 = vpop.f32.mrb[0].mxu0
      %v1410 = vadd.f32 %v1245, %v1409
      %v1411 = vpop.f32.mrb[0].mxu0
      %v1412 = vpop.f32.mrb[0].mxu0
      %v1413 = vadd.f32 %v1245, %v1412
      %v1414 = vpop.f32.mrb[0].mxu0
      %1415 = vmatprep.mubr.bf16.mxu0 0
      %1416 = vmatmul.mubr.bf16.gmra.mrb[0].mxu0 %v1296
      %v1417 = vpop.f32.mrb[0].mxu0
      %v1418 = vadd.f32 %v1245, %v1417
      %v1419 = vpop.f32.mrb[0].mxu0
      %v1420 = vpop.f32.mrb[0].mxu0
      %v1421 = vadd.f32 %v1245, %v1420
      %v1422 = vpop.f32.mrb[0].mxu0
      %1423 = vmatprep.mubr.bf16.mxu0 0
      %1424 = vmatmul.mubr.bf16.gmra.mrb[0].mxu0 %v1299
      %v1425 = vpop.f32.mrb[0].mxu0
      %v1426 = vadd.f32 %v1245, %v1425
      %v1427 = vpop.f32.mrb[0].mxu0
      %v1428 = vpop.f32.mrb[0].mxu0
      %v1429 = vadd.f32 %v1245, %v1428
      %v1430 = vpop.f32.mrb[0].mxu0
      %1431 = vmatprep.mubr.bf16.mxu0 0
      %1432 = vmatmul.mubr.bf16.gmra.mrb[0].mxu0 %v1302
      %v1433 = vpop.f32.mrb[0].mxu0
      %v1434 = vadd.f32 %v1245, %v1433
      %v1435 = vpop.f32.mrb[0].mxu0
      %v1436 = vpop.f32.mrb[0].mxu0
      %v1437 = vadd.f32 %v1245, %v1436
      %v1438 = vpop.f32.mrb[0].mxu0
      %1439 = vmatprep.mubr.bf16.mxu0 0
      %1440 = vmatmul.mubr.bf16.gmra.mrb[0].mxu0 %v1305
      %v1441 = vpop.f32.mrb[0].mxu0
      %v1442 = vadd.f32 %v1245, %v1441
      %v1443 = vpop.f32.mrb[0].mxu0
      %v1444 = vpop.f32.mrb[0].mxu0
      %v1445 = vadd.f32 %v1245, %v1444
      %v1446 = vpop.f32.mrb[0].mxu0
      %1447 = vmatprep.mubr.bf16.mxu0 0
      %1448 = vmatmul.mubr.bf16.gmra.mrb[0].mxu0 %v1308
      %v1449 = vpop.f32.mrb[0].mxu0
      %v1450 = vadd.f32 %v1245, %v1449
      %v1451 = vpop.f32.mrb[0].mxu0
      %v1452 = vpop.f32.mrb[0].mxu0
      %v1453 = vadd.f32 %v1245, %v1452
      %v1454 = vpop.f32.mrb[0].mxu0
      %1455 = vmatprep.mubr.bf16.mxu0 0
      %1456 = vmatmul.mubr.bf16.gmra.mrb[0].mxu0 %v1311
      %v1457 = vpop.f32.mrb[0].mxu0
      %v1458 = vadd.f32 %v1245, %v1457
      %v1459 = vpop.f32.mrb[0].mxu0
      %v1460 = vpop.f32.mrb[0].mxu0
      %v1461 = vadd.f32 %v1245, %v1460
      %v1462 = vpop.f32.mrb[0].mxu0
      %1463 = vmatprep.mubr.bf16.mxu0 0
      %1464 = vmatmul.mubr.bf16.gmra.mrb[0].mxu0 %v1314
      %v1465 = vpop.f32.mrb[0].mxu0
      %v1466 = vadd.f32 %v1245, %v1465
      %v1467 = vpop.f32.mrb[0].mxu0
      %v1468 = vpop.f32.mrb[0].mxu0
      %v1469 = vadd.f32 %v1245, %v1468
      %v1470 = vpop.f32.mrb[0].mxu0
      %1471 = vmatprep.mubr.bf16.mxu0 0
      %1472 = vmatmul.mubr.bf16.gmra.mrb[0].mxu0 %v1317
      %v1473 = vpop.f32.mrb[0].mxu0
      %v1474 = vadd.f32 %v1245, %v1473
      %v1475 = vpop.f32.mrb[0].mxu0
      %v1476 = vpop.f32.mrb[0].mxu0
      %v1477 = vadd.f32 %v1245, %v1476
      %v1478 = vpop.f32.mrb[0].mxu0
      %1479 = vdwg.mxu0
      %v1480 = vmax.f32 %v1354, 0.0
      %v1481 = vmax.f32 %v1357, 0.0
      %v1482 = vmax.f32 %v1362, 0.0
      %v1483 = vmax.f32 %v1365, 0.0
      %v1484 = vmax.f32 %v1370, 0.0
      %v1485 = vmax.f32 %v1373, 0.0
      %v1486 = vmax.f32 %v1378, 0.0
      %v1487 = vmax.f32 %v1381, 0.0
      %v1488 = vmax.f32 %v1386, 0.0
      %v1489 = vmax.f32 %v1389, 0.0
      %v1490 = vmax.f32 %v1394, 0.0
      %v1491 = vmax.f32 %v1397, 0.0
      %v1492 = vmax.f32 %v1402, 0.0
      %v1493 = vmax.f32 %v1405, 0.0
      %v1494 = vmax.f32 %v1410, 0.0
      %v1495 = vmax.f32 %v1413, 0.0
      %v1496 = vmax.f32 %v1418, 0.0
      %v1497 = vmax.f32 %v1421, 0.0
      %v1498 = vmax.f32 %v1426, 0.0
      %v1499 = vmax.f32 %v1429, 0.0
      %v1500 = vmax.f32 %v1434, 0.0
      %v1501 = vmax.f32 %v1437, 0.0
      %v1502 = vmax.f32 %v1442, 0.0
      %v1503 = vmax.f32 %v1445, 0.0
      %v1504 = vmax.f32 %v1450, 0.0
      %v1505 = vmax.f32 %v1453, 0.0
      %v1506 = vmax.f32 %v1458, 0.0
      %v1507 = vmax.f32 %v1461, 0.0
      %v1508 = vmax.f32 %v1466, 0.0
      %v1509 = vmax.f32 %v1469, 0.0
      %v1510 = vmax.f32 %v1474, 0.0
      %v1511 = vmax.f32 %v1477, 0.0
      %v1512 = vpack.c.bf16 %v1481, %v1480
      %v1513 = vpack.c.bf16 %v1483, %v1482
      %v1514 = vpack.c.bf16 %v1485, %v1484
      %v1515 = vpack.c.bf16 %v1487, %v1486
      %v1516 = vpack.c.bf16 %v1489, %v1488
      %v1517 = vpack.c.bf16 %v1491, %v1490
      %v1518 = vpack.c.bf16 %v1493, %v1492
      %v1519 = vpack.c.bf16 %v1495, %v1494
      %v1520 = vpack.c.bf16 %v1497, %v1496
      %v1521 = vpack.c.bf16 %v1499, %v1498
      %v1522 = vpack.c.bf16 %v1501, %v1500
      %v1523 = vpack.c.bf16 %v1503, %v1502
      %v1524 = vpack.c.bf16 %v1505, %v1504
      %v1525 = vpack.c.bf16 %v1507, %v1506
      %v1526 = vpack.c.bf16 %v1509, %v1508
      %v1527 = vpack.c.bf16 %v1511, %v1510
      %s1528 = scalar_lea.vmem %s5, 64
      %v1529 = vld [vmem:[%s1528] sm:$0xf]
      %v1530 = vld [vmem:[%s1528 + $0x4] sm:$0xf]
      %v1531 = vld [vmem:[%s1528 + $0x8] sm:$0xf]
      %v1532 = vld [vmem:[%s1528 + $0xc] sm:$0xf]
      %v1533 = vld [vmem:[%s1528 + $0x10] sm:$0xf]
      %v1534 = vld [vmem:[%s1528 + $0x14] sm:$0xf]
      %v1535 = vld [vmem:[%s1528 + $0x18] sm:$0xf]
      %v1536 = vld [vmem:[%s1528 + $0x1c] sm:$0xf]
      %s1537 = scalar_lea.vmem %s6, 2
      %v1538 = vld [vmem:[%s1537] sm:$0x1]
      %v1540 = vlaneseq
      %v1541 = vshrl.u32 %v1540, 7
      %v1542 = vsub.s32 0, %v1541
      %v1543 = vrot.slane %v1538, %v1542
      %v1553 = vunpack.c.l.b16 %v1529
      %v1554 = vunpack.c.l.b16 %v1530
      %v1555 = vunpack.c.l.b16 %v1531
      %v1556 = vunpack.c.l.b16 %v1532
      %v1557 = vunpack.c.l.b16 %v1533
      %v1558 = vunpack.c.l.b16 %v1534
      %v1559 = vunpack.c.l.b16 %v1535
      %v1560 = vunpack.c.l.b16 %v1536
      %v1561 = vpack.c.b16 %v1554, %v1553
      %v1562 = vpack.c.b16 %v1556, %v1555
      %v1563 = vpack.c.b16 %v1558, %v1557
      %v1564 = vpack.c.b16 %v1560, %v1559
      %v1570 = vsel %vm1004, %v1512, 0
      %v1573 = vsel %vm1004, %v1513, 0
      %v1576 = vsel %vm1004, %v1514, 0
      %v1579 = vsel %vm1004, %v1515, 0
      %v1582 = vsel %vm1004, %v1516, 0
      %v1585 = vsel %vm1004, %v1517, 0
      %v1588 = vsel %vm1004, %v1518, 0
      %v1591 = vsel %vm1004, %v1519, 0
      %v1594 = vsel %vm1004, %v1520, 0
      %v1597 = vsel %vm1004, %v1521, 0
      %v1600 = vsel %vm1004, %v1522, 0
      %v1603 = vsel %vm1004, %v1523, 0
      %v1606 = vsel %vm1004, %v1524, 0
      %v1609 = vsel %vm1004, %v1525, 0
      %v1612 = vsel %vm1004, %v1526, 0
      %v1615 = vsel %vm1004, %v1527, 0
      %1617 = vmatprep.subr.bf16.mxu0 0
      %1618 = vmatpush1.bf16.msra.mxu0 %v1561
      %1619 = vmatprep.subr.bf16.mxu0 0
      %1620 = vmatpush1.bf16.msra.mxu0 %v1562
      %1621 = vmatprep.subr.bf16.mxu0 0
      %1622 = vmatpush1.bf16.msra.mxu0 %v1563
      %1623 = vmatprep.subr.bf16.mxu0 0
      %1624 = vmatpush1.bf16.msra.mxu0 %v1564
      %1625 = vmatprep.subr.bf16.mxu0 0
      %1626 = vmatpush1.bf16.msra.mxu0 0
      %1627 = vmatprep.subr.bf16.mxu0 0
      %1628 = vmatpush1.bf16.msra.mxu0 0
      %1629 = vmatprep.subr.bf16.mxu0 0
      %1630 = vmatpush1.bf16.msra.mxu0 0
      %1631 = vmatprep.subr.bf16.mxu0 0
      %1632 = vmatpush1.bf16.msra.mxu0 0
      %1633 = vmatprep.subr.bf16.mxu0 0
      %1634 = vmatpush1.bf16.msra.mxu0 0
      %1635 = vmatprep.subr.bf16.mxu0 0
      %1636 = vmatpush1.bf16.msra.mxu0 0
      %1637 = vmatprep.subr.bf16.mxu0 0
      %1638 = vmatpush1.bf16.msra.mxu0 0
      %1639 = vmatprep.subr.bf16.mxu0 0
      %1640 = vmatpush1.bf16.msra.mxu0 0
      %1641 = vmatprep.subr.bf16.mxu0 0
      %1642 = vmatpush1.bf16.msra.mxu0 0
      %1643 = vmatprep.subr.bf16.mxu0 0
      %1644 = vmatpush1.bf16.msra.mxu0 0
      %1645 = vmatprep.subr.bf16.mxu0 0
      %1646 = vmatpush1.bf16.msra.mxu0 0
      %1647 = vmatprep.subr.bf16.mxu0 0
      %1648 = vmatpush1.bf16.msra.mxu0 0
      %1649 = vmatprep.mubr.bf16.mxu0 0
      %1650 = vmatmul.mubr.bf16.gmra.mrb[0].mxu0 %v1570
      %v1651 = vpop.f32.mrb[0].mxu0
      %v1652 = vadd.f32 %v1543, %v1651
      %v1653 = vpop.f32.mrb[0].mxu0
      %v1654 = vpop.f32.mrb[0].mxu0
      %v1655 = vadd.f32 %v1543, %v1654
      %v1656 = vpop.f32.mrb[0].mxu0
      %1657 = vmatprep.mubr.bf16.mxu0 0
      %1658 = vmatmul.mubr.bf16.gmra.mrb[0].mxu0 %v1573
      %v1659 = vpop.f32.mrb[0].mxu0
      %v1660 = vadd.f32 %v1543, %v1659
      %v1661 = vpop.f32.mrb[0].mxu0
      %v1662 = vpop.f32.mrb[0].mxu0
      %v1663 = vadd.f32 %v1543, %v1662
      %v1664 = vpop.f32.mrb[0].mxu0
      %1665 = vmatprep.mubr.bf16.mxu0 0
      %1666 = vmatmul.mubr.bf16.gmra.mrb[0].mxu0 %v1576
      %v1667 = vpop.f32.mrb[0].mxu0
      %v1668 = vadd.f32 %v1543, %v1667
      %v1669 = vpop.f32.mrb[0].mxu0
      %v1670 = vpop.f32.mrb[0].mxu0
      %v1671 = vadd.f32 %v1543, %v1670
      %v1672 = vpop.f32.mrb[0].mxu0
      %1673 = vmatprep.mubr.bf16.mxu0 0
      %1674 = vmatmul.mubr.bf16.gmra.mrb[0].mxu0 %v1579
      %v1675 = vpop.f32.mrb[0].mxu0
      %v1676 = vadd.f32 %v1543, %v1675
      %v1677 = vpop.f32.mrb[0].mxu0
      %v1678 = vpop.f32.mrb[0].mxu0
      %v1679 = vadd.f32 %v1543, %v1678
      %v1680 = vpop.f32.mrb[0].mxu0
      %1681 = vmatprep.mubr.bf16.mxu0 0
      %1682 = vmatmul.mubr.bf16.gmra.mrb[0].mxu0 %v1582
      %v1683 = vpop.f32.mrb[0].mxu0
      %v1684 = vadd.f32 %v1543, %v1683
      %v1685 = vpop.f32.mrb[0].mxu0
      %v1686 = vpop.f32.mrb[0].mxu0
      %v1687 = vadd.f32 %v1543, %v1686
      %v1688 = vpop.f32.mrb[0].mxu0
      %1689 = vmatprep.mubr.bf16.mxu0 0
      %1690 = vmatmul.mubr.bf16.gmra.mrb[0].mxu0 %v1585
      %v1691 = vpop.f32.mrb[0].mxu0
      %v1692 = vadd.f32 %v1543, %v1691
      %v1693 = vpop.f32.mrb[0].mxu0
      %v1694 = vpop.f32.mrb[0].mxu0
      %v1695 = vadd.f32 %v1543, %v1694
      %v1696 = vpop.f32.mrb[0].mxu0
      %1697 = vmatprep.mubr.bf16.mxu0 0
      %1698 = vmatmul.mubr.bf16.gmra.mrb[0].mxu0 %v1588
      %v1699 = vpop.f32.mrb[0].mxu0
      %v1700 = vadd.f32 %v1543, %v1699
      %v1701 = vpop.f32.mrb[0].mxu0
      %v1702 = vpop.f32.mrb[0].mxu0
      %v1703 = vadd.f32 %v1543, %v1702
      %v1704 = vpop.f32.mrb[0].mxu0
      %1705 = vmatprep.mubr.bf16.mxu0 0
      %1706 = vmatmul.mubr.bf16.gmra.mrb[0].mxu0 %v1591
      %v1707 = vpop.f32.mrb[0].mxu0
      %v1708 = vadd.f32 %v1543, %v1707
      %v1709 = vpop.f32.mrb[0].mxu0
      %v1710 = vpop.f32.mrb[0].mxu0
      %v1711 = vadd.f32 %v1543, %v1710
      %v1712 = vpop.f32.mrb[0].mxu0
      %1713 = vmatprep.mubr.bf16.mxu0 0
      %1714 = vmatmul.mubr.bf16.gmra.mrb[0].mxu0 %v1594
      %v1715 = vpop.f32.mrb[0].mxu0
      %v1716 = vadd.f32 %v1543, %v1715
      %v1717 = vpop.f32.mrb[0].mxu0
      %v1718 = vpop.f32.mrb[0].mxu0
      %v1719 = vadd.f32 %v1543, %v1718
      %v1720 = vpop.f32.mrb[0].mxu0
      %1721 = vmatprep.mubr.bf16.mxu0 0
      %1722 = vmatmul.mubr.bf16.gmra.mrb[0].mxu0 %v1597
      %v1723 = vpop.f32.mrb[0].mxu0
      %v1724 = vadd.f32 %v1543, %v1723
      %v1725 = vpop.f32.mrb[0].mxu0
      %v1726 = vpop.f32.mrb[0].mxu0
      %v1727 = vadd.f32 %v1543, %v1726
      %v1728 = vpop.f32.mrb[0].mxu0
      %1729 = vmatprep.mubr.bf16.mxu0 0
      %1730 = vmatmul.mubr.bf16.gmra.mrb[0].mxu0 %v1600
      %v1731 = vpop.f32.mrb[0].mxu0
      %v1732 = vadd.f32 %v1543, %v1731
      %v1733 = vpop.f32.mrb[0].mxu0
      %v1734 = vpop.f32.mrb[0].mxu0
      %v1735 = vadd.f32 %v1543, %v1734
      %v1736 = vpop.f32.mrb[0].mxu0
      %1737 = vmatprep.mubr.bf16.mxu0 0
      %1738 = vmatmul.mubr.bf16.gmra.mrb[0].mxu0 %v1603
      %v1739 = vpop.f32.mrb[0].mxu0
      %v1740 = vadd.f32 %v1543, %v1739
      %v1741 = vpop.f32.mrb[0].mxu0
      %v1742 = vpop.f32.mrb[0].mxu0
      %v1743 = vadd.f32 %v1543, %v1742
      %v1744 = vpop.f32.mrb[0].mxu0
      %1745 = vmatprep.mubr.bf16.mxu0 0
      %1746 = vmatmul.mubr.bf16.gmra.mrb[0].mxu0 %v1606
      %v1747 = vpop.f32.mrb[0].mxu0
      %v1748 = vadd.f32 %v1543, %v1747
      %v1749 = vpop.f32.mrb[0].mxu0
      %v1750 = vpop.f32.mrb[0].mxu0
      %v1751 = vadd.f32 %v1543, %v1750
      %v1752 = vpop.f32.mrb[0].mxu0
      %1753 = vmatprep.mubr.bf16.mxu0 0
      %1754 = vmatmul.mubr.bf16.gmra.mrb[0].mxu0 %v1609
      %v1755 = vpop.f32.mrb[0].mxu0
      %v1756 = vadd.f32 %v1543, %v1755
      %v1757 = vpop.f32.mrb[0].mxu0
      %v1758 = vpop.f32.mrb[0].mxu0
      %v1759 = vadd.f32 %v1543, %v1758
      %v1760 = vpop.f32.mrb[0].mxu0
      %1761 = vmatprep.mubr.bf16.mxu0 0
      %1762 = vmatmul.mubr.bf16.gmra.mrb[0].mxu0 %v1612
      %v1763 = vpop.f32.mrb[0].mxu0
      %v1764 = vadd.f32 %v1543, %v1763
      %v1765 = vpop.f32.mrb[0].mxu0
      %v1766 = vpop.f32.mrb[0].mxu0
      %v1767 = vadd.f32 %v1543, %v1766
      %v1768 = vpop.f32.mrb[0].mxu0
      %1769 = vmatprep.mubr.bf16.mxu0 0
      %1770 = vmatmul.mubr.bf16.gmra.mrb[0].mxu0 %v1615
      %v1771 = vpop.f32.mrb[0].mxu0
      %v1772 = vadd.f32 %v1543, %v1771
      %v1773 = vpop.f32.mrb[0].mxu0
      %v1774 = vpop.f32.mrb[0].mxu0
      %v1775 = vadd.f32 %v1543, %v1774
      %v1776 = vpop.f32.mrb[0].mxu0
      %1777 = vdwg.mxu0
      %v1778 = vmul.f32 %v1652, %v1652
      %v1779 = vmul.f32 %v1655, %v1655
      %v1780 = vmul.f32 %v1660, %v1660
      %v1781 = vmul.f32 %v1663, %v1663
      %v1782 = vmul.f32 %v1668, %v1668
      %v1783 = vmul.f32 %v1671, %v1671
      %v1784 = vmul.f32 %v1676, %v1676
      %v1785 = vmul.f32 %v1679, %v1679
      %v1786 = vmul.f32 %v1684, %v1684
      %v1787 = vmul.f32 %v1687, %v1687
      %v1788 = vmul.f32 %v1692, %v1692
      %v1789 = vmul.f32 %v1695, %v1695
      %v1790 = vmul.f32 %v1700, %v1700
      %v1791 = vmul.f32 %v1703, %v1703
      %v1792 = vmul.f32 %v1708, %v1708
      %v1793 = vmul.f32 %v1711, %v1711
      %v1794 = vmul.f32 %v1716, %v1716
      %v1795 = vmul.f32 %v1719, %v1719
      %v1796 = vmul.f32 %v1724, %v1724
      %v1797 = vmul.f32 %v1727, %v1727
      %v1798 = vmul.f32 %v1732, %v1732
      %v1799 = vmul.f32 %v1735, %v1735
      %v1800 = vmul.f32 %v1740, %v1740
      %v1801 = vmul.f32 %v1743, %v1743
      %v1802 = vmul.f32 %v1748, %v1748
      %v1803 = vmul.f32 %v1751, %v1751
      %v1804 = vmul.f32 %v1756, %v1756
      %v1805 = vmul.f32 %v1759, %v1759
      %v1806 = vmul.f32 %v1764, %v1764
      %v1807 = vmul.f32 %v1767, %v1767
      %v1808 = vmul.f32 %v1772, %v1772
      %v1809 = vmul.f32 %v1775, %v1775
      %v1810 = vsel %vm1004, %v1778, 0.0
      %1811 = vadd.xlane.f32.xlu0 %v1810
      %v1812 = vpop.xlane.xlu0 %1811
      %v1813 = vsel %vm1004, %v1779, 0.0
      %1814 = vadd.xlane.f32.xlu0 %v1813
      %v1815 = vpop.xlane.xlu0 %1814
      %v1816 = vsel %vm1004, %v1780, 0.0
      %1817 = vadd.xlane.f32.xlu0 %v1816
      %v1818 = vpop.xlane.xlu0 %1817
      %v1819 = vsel %vm1004, %v1781, 0.0
      %1820 = vadd.xlane.f32.xlu0 %v1819
      %v1821 = vpop.xlane.xlu0 %1820
      %v1822 = vsel %vm1004, %v1782, 0.0
      %1823 = vadd.xlane.f32.xlu0 %v1822
      %v1824 = vpop.xlane.xlu0 %1823
      %v1825 = vsel %vm1004, %v1783, 0.0
      %1826 = vadd.xlane.f32.xlu0 %v1825
      %v1827 = vpop.xlane.xlu0 %1826
      %v1828 = vsel %vm1004, %v1784, 0.0
      %1829 = vadd.xlane.f32.xlu0 %v1828
      %v1830 = vpop.xlane.xlu0 %1829
      %v1831 = vsel %vm1004, %v1785, 0.0
      %1832 = vadd.xlane.f32.xlu0 %v1831
      %v1833 = vpop.xlane.xlu0 %1832
      %v1834 = vsel %vm1004, %v1786, 0.0
      %1835 = vadd.xlane.f32.xlu0 %v1834
      %v1836 = vpop.xlane.xlu0 %1835
      %v1837 = vsel %vm1004, %v1787, 0.0
      %1838 = vadd.xlane.f32.xlu0 %v1837
      %v1839 = vpop.xlane.xlu0 %1838
      %v1840 = vsel %vm1004, %v1788, 0.0
      %1841 = vadd.xlane.f32.xlu0 %v1840
      %v1842 = vpop.xlane.xlu0 %1841
      %v1843 = vsel %vm1004, %v1789, 0.0
      %1844 = vadd.xlane.f32.xlu0 %v1843
      %v1845 = vpop.xlane.xlu0 %1844
      %v1846 = vsel %vm1004, %v1790, 0.0
      %1847 = vadd.xlane.f32.xlu0 %v1846
      %v1848 = vpop.xlane.xlu0 %1847
      %v1849 = vsel %vm1004, %v1791, 0.0
      %1850 = vadd.xlane.f32.xlu0 %v1849
      %v1851 = vpop.xlane.xlu0 %1850
      %v1852 = vsel %vm1004, %v1792, 0.0
      %1853 = vadd.xlane.f32.xlu0 %v1852
      %v1854 = vpop.xlane.xlu0 %1853
      %v1855 = vsel %vm1004, %v1793, 0.0
      %1856 = vadd.xlane.f32.xlu0 %v1855
      %v1857 = vpop.xlane.xlu0 %1856
      %v1858 = vsel %vm1004, %v1794, 0.0
      %1859 = vadd.xlane.f32.xlu0 %v1858
      %v1860 = vpop.xlane.xlu0 %1859
      %v1861 = vsel %vm1004, %v1795, 0.0
      %1862 = vadd.xlane.f32.xlu0 %v1861
      %v1863 = vpop.xlane.xlu0 %1862
      %v1864 = vsel %vm1004, %v1796, 0.0
      %1865 = vadd.xlane.f32.xlu0 %v1864
      %v1866 = vpop.xlane.xlu0 %1865
      %v1867 = vsel %vm1004, %v1797, 0.0
      %1868 = vadd.xlane.f32.xlu0 %v1867
      %v1869 = vpop.xlane.xlu0 %1868
      %v1870 = vsel %vm1004, %v1798, 0.0
      %1871 = vadd.xlane.f32.xlu0 %v1870
      %v1872 = vpop.xlane.xlu0 %1871
      %v1873 = vsel %vm1004, %v1799, 0.0
      %1874 = vadd.xlane.f32.xlu0 %v1873
      %v1875 = vpop.xlane.xlu0 %1874
      %v1876 = vsel %vm1004, %v1800, 0.0
      %1877 = vadd.xlane.f32.xlu0 %v1876
      %v1878 = vpop.xlane.xlu0 %1877
      %v1879 = vsel %vm1004, %v1801, 0.0
      %1880 = vadd.xlane.f32.xlu0 %v1879
      %v1881 = vpop.xlane.xlu0 %1880
      %v1882 = vsel %vm1004, %v1802, 0.0
      %1883 = vadd.xlane.f32.xlu0 %v1882
      %v1884 = vpop.xlane.xlu0 %1883
      %v1885 = vsel %vm1004, %v1803, 0.0
      %1886 = vadd.xlane.f32.xlu0 %v1885
      %v1887 = vpop.xlane.xlu0 %1886
      %v1888 = vsel %vm1004, %v1804, 0.0
      %1889 = vadd.xlane.f32.xlu0 %v1888
      %v1890 = vpop.xlane.xlu0 %1889
      %v1891 = vsel %vm1004, %v1805, 0.0
      %1892 = vadd.xlane.f32.xlu0 %v1891
      %v1893 = vpop.xlane.xlu0 %1892
      %v1894 = vsel %vm1004, %v1806, 0.0
      %1895 = vadd.xlane.f32.xlu0 %v1894
      %v1896 = vpop.xlane.xlu0 %1895
      %v1897 = vsel %vm1004, %v1807, 0.0
      %1898 = vadd.xlane.f32.xlu0 %v1897
      %v1899 = vpop.xlane.xlu0 %1898
      %v1900 = vsel %vm1004, %v1808, 0.0
      %1901 = vadd.xlane.f32.xlu0 %v1900
      %v1902 = vpop.xlane.xlu0 %1901
      %v1903 = vsel %vm1004, %v1809, 0.0
      %1904 = vadd.xlane.f32.xlu0 %v1903
      %v1905 = vpop.xlane.xlu0 %1904
      %v1906 = vadd.f32 %v1812, 1e-12
      %v1907 = vadd.f32 %v1815, 1e-12
      %v1908 = vadd.f32 %v1818, 1e-12
      %v1909 = vadd.f32 %v1821, 1e-12
      %v1910 = vadd.f32 %v1824, 1e-12
      %v1911 = vadd.f32 %v1827, 1e-12
      %v1912 = vadd.f32 %v1830, 1e-12
      %v1913 = vadd.f32 %v1833, 1e-12
      %v1914 = vadd.f32 %v1836, 1e-12
      %v1915 = vadd.f32 %v1839, 1e-12
      %v1916 = vadd.f32 %v1842, 1e-12
      %v1917 = vadd.f32 %v1845, 1e-12
      %v1918 = vadd.f32 %v1848, 1e-12
      %v1919 = vadd.f32 %v1851, 1e-12
      %v1920 = vadd.f32 %v1854, 1e-12
      %v1921 = vadd.f32 %v1857, 1e-12
      %v1922 = vadd.f32 %v1860, 1e-12
      %v1923 = vadd.f32 %v1863, 1e-12
      %v1924 = vadd.f32 %v1866, 1e-12
      %v1925 = vadd.f32 %v1869, 1e-12
      %v1926 = vadd.f32 %v1872, 1e-12
      %v1927 = vadd.f32 %v1875, 1e-12
      %v1928 = vadd.f32 %v1878, 1e-12
      %v1929 = vadd.f32 %v1881, 1e-12
      %v1930 = vadd.f32 %v1884, 1e-12
      %v1931 = vadd.f32 %v1887, 1e-12
      %v1932 = vadd.f32 %v1890, 1e-12
      %v1933 = vadd.f32 %v1893, 1e-12
      %v1934 = vadd.f32 %v1896, 1e-12
      %v1935 = vadd.f32 %v1899, 1e-12
      %v1936 = vadd.f32 %v1902, 1e-12
      %v1937 = vadd.f32 %v1905, 1e-12
      %v1938 = vrsqrt.pop %v1906
      %v1939 = vrsqrt.pop %v1907
      %v1940 = vrsqrt.pop %v1908
      %v1941 = vrsqrt.pop %v1909
      %v1942 = vrsqrt.pop %v1910
      %v1943 = vrsqrt.pop %v1911
      %v1944 = vrsqrt.pop %v1912
      %v1945 = vrsqrt.pop %v1913
      %v1946 = vrsqrt.pop %v1914
      %v1947 = vrsqrt.pop %v1915
      %v1948 = vrsqrt.pop %v1916
      %v1949 = vrsqrt.pop %v1917
      %v1950 = vrsqrt.pop %v1918
      %v1951 = vrsqrt.pop %v1919
      %v1952 = vrsqrt.pop %v1920
      %v1953 = vrsqrt.pop %v1921
      %v1954 = vrsqrt.pop %v1922
      %v1955 = vrsqrt.pop %v1923
      %v1956 = vrsqrt.pop %v1924
      %v1957 = vrsqrt.pop %v1925
      %v1958 = vrsqrt.pop %v1926
      %v1959 = vrsqrt.pop %v1927
      %v1960 = vrsqrt.pop %v1928
      %v1961 = vrsqrt.pop %v1929
      %v1962 = vrsqrt.pop %v1930
      %v1963 = vrsqrt.pop %v1931
      %v1964 = vrsqrt.pop %v1932
      %v1965 = vrsqrt.pop %v1933
      %v1966 = vrsqrt.pop %v1934
      %v1967 = vrsqrt.pop %v1935
      %v1968 = vrsqrt.pop %v1936
      %v1969 = vrsqrt.pop %v1937
      %v1970 = vmul.f32 %v1652, %v1938
      %v1971 = vmul.f32 %v1655, %v1939
      %v1972 = vmul.f32 %v1660, %v1940
      %v1973 = vmul.f32 %v1663, %v1941
      %v1974 = vmul.f32 %v1668, %v1942
      %v1975 = vmul.f32 %v1671, %v1943
      %v1976 = vmul.f32 %v1676, %v1944
      %v1977 = vmul.f32 %v1679, %v1945
      %v1978 = vmul.f32 %v1684, %v1946
      %v1979 = vmul.f32 %v1687, %v1947
      %v1980 = vmul.f32 %v1692, %v1948
      %v1981 = vmul.f32 %v1695, %v1949
      %v1982 = vmul.f32 %v1700, %v1950
      %v1983 = vmul.f32 %v1703, %v1951
      %v1984 = vmul.f32 %v1708, %v1952
      %v1985 = vmul.f32 %v1711, %v1953
      %v1986 = vmul.f32 %v1716, %v1954
      %v1987 = vmul.f32 %v1719, %v1955
      %v1988 = vmul.f32 %v1724, %v1956
      %v1989 = vmul.f32 %v1727, %v1957
      %v1990 = vmul.f32 %v1732, %v1958
      %v1991 = vmul.f32 %v1735, %v1959
      %v1992 = vmul.f32 %v1740, %v1960
      %v1993 = vmul.f32 %v1743, %v1961
      %v1994 = vmul.f32 %v1748, %v1962
      %v1995 = vmul.f32 %v1751, %v1963
      %v1996 = vmul.f32 %v1756, %v1964
      %v1997 = vmul.f32 %v1759, %v1965
      %v1998 = vmul.f32 %v1764, %v1966
      %v1999 = vmul.f32 %v1767, %v1967
      %v2000 = vmul.f32 %v1772, %v1968
      %v2001 = vmul.f32 %v1775, %v1969
      %v2002 = vmul.f32 %v1088, %v1088
      %v2003 = vmul.f32 %v1091, %v1091
      %v2004 = vmul.f32 %v1096, %v1096
      %v2005 = vmul.f32 %v1099, %v1099
      %v2006 = vmul.f32 %v1104, %v1104
      %v2007 = vmul.f32 %v1107, %v1107
      %v2008 = vmul.f32 %v1112, %v1112
      %v2009 = vmul.f32 %v1115, %v1115
      %v2010 = vmul.f32 %v1120, %v1120
      %v2011 = vmul.f32 %v1123, %v1123
      %v2012 = vmul.f32 %v1128, %v1128
      %v2013 = vmul.f32 %v1131, %v1131
      %v2014 = vmul.f32 %v1136, %v1136
      %v2015 = vmul.f32 %v1139, %v1139
      %v2016 = vmul.f32 %v1144, %v1144
      %v2017 = vmul.f32 %v1147, %v1147
      %v2018 = vmul.f32 %v1152, %v1152
      %v2019 = vmul.f32 %v1155, %v1155
      %v2020 = vmul.f32 %v1160, %v1160
      %v2021 = vmul.f32 %v1163, %v1163
      %v2022 = vmul.f32 %v1168, %v1168
      %v2023 = vmul.f32 %v1171, %v1171
      %v2024 = vmul.f32 %v1176, %v1176
      %v2025 = vmul.f32 %v1179, %v1179
      %v2026 = vmul.f32 %v1184, %v1184
      %v2027 = vmul.f32 %v1187, %v1187
      %v2028 = vmul.f32 %v1192, %v1192
      %v2029 = vmul.f32 %v1195, %v1195
      %v2030 = vmul.f32 %v1200, %v1200
      %v2031 = vmul.f32 %v1203, %v1203
      %v2032 = vmul.f32 %v1208, %v1208
      %v2033 = vmul.f32 %v1211, %v1211
      %v2034 = vsel %vm1004, %v2002, 0.0
      %2035 = vadd.xlane.f32.xlu0 %v2034
      %v2036 = vpop.xlane.xlu0 %2035
      %v2037 = vsel %vm1004, %v2003, 0.0
      %2038 = vadd.xlane.f32.xlu0 %v2037
      %v2039 = vpop.xlane.xlu0 %2038
      %v2040 = vsel %vm1004, %v2004, 0.0
      %2041 = vadd.xlane.f32.xlu0 %v2040
      %v2042 = vpop.xlane.xlu0 %2041
      %v2043 = vsel %vm1004, %v2005, 0.0
      %2044 = vadd.xlane.f32.xlu0 %v2043
      %v2045 = vpop.xlane.xlu0 %2044
      %v2046 = vsel %vm1004, %v2006, 0.0
      %2047 = vadd.xlane.f32.xlu0 %v2046
      %v2048 = vpop.xlane.xlu0 %2047
      %v2049 = vsel %vm1004, %v2007, 0.0
      %2050 = vadd.xlane.f32.xlu0 %v2049
      %v2051 = vpop.xlane.xlu0 %2050
      %v2052 = vsel %vm1004, %v2008, 0.0
      %2053 = vadd.xlane.f32.xlu0 %v2052
      %v2054 = vpop.xlane.xlu0 %2053
      %v2055 = vsel %vm1004, %v2009, 0.0
      %2056 = vadd.xlane.f32.xlu0 %v2055
      %v2057 = vpop.xlane.xlu0 %2056
      %v2058 = vsel %vm1004, %v2010, 0.0
      %2059 = vadd.xlane.f32.xlu0 %v2058
      %v2060 = vpop.xlane.xlu0 %2059
      %v2061 = vsel %vm1004, %v2011, 0.0
      %2062 = vadd.xlane.f32.xlu0 %v2061
      %v2063 = vpop.xlane.xlu0 %2062
      %v2064 = vsel %vm1004, %v2012, 0.0
      %2065 = vadd.xlane.f32.xlu0 %v2064
      %v2066 = vpop.xlane.xlu0 %2065
      %v2067 = vsel %vm1004, %v2013, 0.0
      %2068 = vadd.xlane.f32.xlu0 %v2067
      %v2069 = vpop.xlane.xlu0 %2068
      %v2070 = vsel %vm1004, %v2014, 0.0
      %2071 = vadd.xlane.f32.xlu0 %v2070
      %v2072 = vpop.xlane.xlu0 %2071
      %v2073 = vsel %vm1004, %v2015, 0.0
      %2074 = vadd.xlane.f32.xlu0 %v2073
      %v2075 = vpop.xlane.xlu0 %2074
      %v2076 = vsel %vm1004, %v2016, 0.0
      %2077 = vadd.xlane.f32.xlu0 %v2076
      %v2078 = vpop.xlane.xlu0 %2077
      %v2079 = vsel %vm1004, %v2017, 0.0
      %2080 = vadd.xlane.f32.xlu0 %v2079
      %v2081 = vpop.xlane.xlu0 %2080
      %v2082 = vsel %vm1004, %v2018, 0.0
      %2083 = vadd.xlane.f32.xlu0 %v2082
      %v2084 = vpop.xlane.xlu0 %2083
      %v2085 = vsel %vm1004, %v2019, 0.0
      %2086 = vadd.xlane.f32.xlu0 %v2085
      %v2087 = vpop.xlane.xlu0 %2086
      %v2088 = vsel %vm1004, %v2020, 0.0
      %2089 = vadd.xlane.f32.xlu0 %v2088
      %v2090 = vpop.xlane.xlu0 %2089
      %v2091 = vsel %vm1004, %v2021, 0.0
      %2092 = vadd.xlane.f32.xlu0 %v2091
      %v2093 = vpop.xlane.xlu0 %2092
      %v2094 = vsel %vm1004, %v2022, 0.0
      %2095 = vadd.xlane.f32.xlu0 %v2094
      %v2096 = vpop.xlane.xlu0 %2095
      %v2097 = vsel %vm1004, %v2023, 0.0
      %2098 = vadd.xlane.f32.xlu0 %v2097
      %v2099 = vpop.xlane.xlu0 %2098
      %v2100 = vsel %vm1004, %v2024, 0.0
      %2101 = vadd.xlane.f32.xlu0 %v2100
      %v2102 = vpop.xlane.xlu0 %2101
      %v2103 = vsel %vm1004, %v2025, 0.0
      %2104 = vadd.xlane.f32.xlu0 %v2103
      %v2105 = vpop.xlane.xlu0 %2104
      %v2106 = vsel %vm1004, %v2026, 0.0
      %2107 = vadd.xlane.f32.xlu0 %v2106
      %v2108 = vpop.xlane.xlu0 %2107
      %v2109 = vsel %vm1004, %v2027, 0.0
      %2110 = vadd.xlane.f32.xlu0 %v2109
      %v2111 = vpop.xlane.xlu0 %2110
      %v2112 = vsel %vm1004, %v2028, 0.0
      %2113 = vadd.xlane.f32.xlu0 %v2112
      %v2114 = vpop.xlane.xlu0 %2113
      %v2115 = vsel %vm1004, %v2029, 0.0
      %2116 = vadd.xlane.f32.xlu0 %v2115
      %v2117 = vpop.xlane.xlu0 %2116
      %v2118 = vsel %vm1004, %v2030, 0.0
      %2119 = vadd.xlane.f32.xlu0 %v2118
      %v2120 = vpop.xlane.xlu0 %2119
      %v2121 = vsel %vm1004, %v2031, 0.0
      %2122 = vadd.xlane.f32.xlu0 %v2121
      %v2123 = vpop.xlane.xlu0 %2122
      %v2124 = vsel %vm1004, %v2032, 0.0
      %2125 = vadd.xlane.f32.xlu0 %v2124
      %v2126 = vpop.xlane.xlu0 %2125
      %v2127 = vsel %vm1004, %v2033, 0.0
      %2128 = vadd.xlane.f32.xlu0 %v2127
      %v2129 = vpop.xlane.xlu0 %2128
      %v2130 = vadd.f32 %v2036, 1e-12
      %v2131 = vadd.f32 %v2039, 1e-12
      %v2132 = vadd.f32 %v2042, 1e-12
      %v2133 = vadd.f32 %v2045, 1e-12
      %v2134 = vadd.f32 %v2048, 1e-12
      %v2135 = vadd.f32 %v2051, 1e-12
      %v2136 = vadd.f32 %v2054, 1e-12
      %v2137 = vadd.f32 %v2057, 1e-12
      %v2138 = vadd.f32 %v2060, 1e-12
      %v2139 = vadd.f32 %v2063, 1e-12
      %v2140 = vadd.f32 %v2066, 1e-12
      %v2141 = vadd.f32 %v2069, 1e-12
      %v2142 = vadd.f32 %v2072, 1e-12
      %v2143 = vadd.f32 %v2075, 1e-12
      %v2144 = vadd.f32 %v2078, 1e-12
      %v2145 = vadd.f32 %v2081, 1e-12
      %v2146 = vadd.f32 %v2084, 1e-12
      %v2147 = vadd.f32 %v2087, 1e-12
      %v2148 = vadd.f32 %v2090, 1e-12
      %v2149 = vadd.f32 %v2093, 1e-12
      %v2150 = vadd.f32 %v2096, 1e-12
      %v2151 = vadd.f32 %v2099, 1e-12
      %v2152 = vadd.f32 %v2102, 1e-12
      %v2153 = vadd.f32 %v2105, 1e-12
      %v2154 = vadd.f32 %v2108, 1e-12
      %v2155 = vadd.f32 %v2111, 1e-12
      %v2156 = vadd.f32 %v2114, 1e-12
      %v2157 = vadd.f32 %v2117, 1e-12
      %v2158 = vadd.f32 %v2120, 1e-12
      %v2159 = vadd.f32 %v2123, 1e-12
      %v2160 = vadd.f32 %v2126, 1e-12
      %v2161 = vadd.f32 %v2129, 1e-12
      %v2162 = vrsqrt.pop %v2130
      %v2163 = vrsqrt.pop %v2131
      %v2164 = vrsqrt.pop %v2132
      %v2165 = vrsqrt.pop %v2133
      %v2166 = vrsqrt.pop %v2134
      %v2167 = vrsqrt.pop %v2135
      %v2168 = vrsqrt.pop %v2136
      %v2169 = vrsqrt.pop %v2137
      %v2170 = vrsqrt.pop %v2138
      %v2171 = vrsqrt.pop %v2139
      %v2172 = vrsqrt.pop %v2140
      %v2173 = vrsqrt.pop %v2141
      %v2174 = vrsqrt.pop %v2142
      %v2175 = vrsqrt.pop %v2143
      %v2176 = vrsqrt.pop %v2144
      %v2177 = vrsqrt.pop %v2145
      %v2178 = vrsqrt.pop %v2146
      %v2179 = vrsqrt.pop %v2147
      %v2180 = vrsqrt.pop %v2148
      %v2181 = vrsqrt.pop %v2149
      %v2182 = vrsqrt.pop %v2150
      %v2183 = vrsqrt.pop %v2151
      %v2184 = vrsqrt.pop %v2152
      %v2185 = vrsqrt.pop %v2153
      %v2186 = vrsqrt.pop %v2154
      %v2187 = vrsqrt.pop %v2155
      %v2188 = vrsqrt.pop %v2156
      %v2189 = vrsqrt.pop %v2157
      %v2190 = vrsqrt.pop %v2158
      %v2191 = vrsqrt.pop %v2159
      %v2192 = vrsqrt.pop %v2160
      %v2193 = vrsqrt.pop %v2161
      %v2194 = vmul.f32 %v1088, %v2162
      %v2195 = vmul.f32 %v1091, %v2163
      %v2196 = vmul.f32 %v1096, %v2164
      %v2197 = vmul.f32 %v1099, %v2165
      %v2198 = vmul.f32 %v1104, %v2166
      %v2199 = vmul.f32 %v1107, %v2167
      %v2200 = vmul.f32 %v1112, %v2168
      %v2201 = vmul.f32 %v1115, %v2169
      %v2202 = vmul.f32 %v1120, %v2170
      %v2203 = vmul.f32 %v1123, %v2171
      %v2204 = vmul.f32 %v1128, %v2172
      %v2205 = vmul.f32 %v1131, %v2173
      %v2206 = vmul.f32 %v1136, %v2174
      %v2207 = vmul.f32 %v1139, %v2175
      %v2208 = vmul.f32 %v1144, %v2176
      %v2209 = vmul.f32 %v1147, %v2177
      %v2210 = vmul.f32 %v1152, %v2178
      %v2211 = vmul.f32 %v1155, %v2179
      %v2212 = vmul.f32 %v1160, %v2180
      %v2213 = vmul.f32 %v1163, %v2181
      %v2214 = vmul.f32 %v1168, %v2182
      %v2215 = vmul.f32 %v1171, %v2183
      %v2216 = vmul.f32 %v1176, %v2184
      %v2217 = vmul.f32 %v1179, %v2185
      %v2218 = vmul.f32 %v1184, %v2186
      %v2219 = vmul.f32 %v1187, %v2187
      %v2220 = vmul.f32 %v1192, %v2188
      %v2221 = vmul.f32 %v1195, %v2189
      %v2222 = vmul.f32 %v1200, %v2190
      %v2223 = vmul.f32 %v1203, %v2191
      %v2224 = vmul.f32 %v1208, %v2192
      %v2225 = vmul.f32 %v1211, %v2193
      %v2226 = vmul.f32 %v1970, %v2194
      %v2227 = vmul.f32 %v1971, %v2195
      %v2228 = vmul.f32 %v1972, %v2196
      %v2229 = vmul.f32 %v1973, %v2197
      %v2230 = vmul.f32 %v1974, %v2198
      %v2231 = vmul.f32 %v1975, %v2199
      %v2232 = vmul.f32 %v1976, %v2200
      %v2233 = vmul.f32 %v1977, %v2201
      %v2234 = vmul.f32 %v1978, %v2202
      %v2235 = vmul.f32 %v1979, %v2203
      %v2236 = vmul.f32 %v1980, %v2204
      %v2237 = vmul.f32 %v1981, %v2205
      %v2238 = vmul.f32 %v1982, %v2206
      %v2239 = vmul.f32 %v1983, %v2207
      %v2240 = vmul.f32 %v1984, %v2208
      %v2241 = vmul.f32 %v1985, %v2209
      %v2242 = vmul.f32 %v1986, %v2210
      %v2243 = vmul.f32 %v1987, %v2211
      %v2244 = vmul.f32 %v1988, %v2212
      %v2245 = vmul.f32 %v1989, %v2213
      %v2246 = vmul.f32 %v1990, %v2214
      %v2247 = vmul.f32 %v1991, %v2215
      %v2248 = vmul.f32 %v1992, %v2216
      %v2249 = vmul.f32 %v1993, %v2217
      %v2250 = vmul.f32 %v1994, %v2218
      %v2251 = vmul.f32 %v1995, %v2219
      %v2252 = vmul.f32 %v1996, %v2220
      %v2253 = vmul.f32 %v1997, %v2221
      %v2254 = vmul.f32 %v1998, %v2222
      %v2255 = vmul.f32 %v1999, %v2223
      %v2256 = vmul.f32 %v2000, %v2224
      %v2257 = vmul.f32 %v2001, %v2225
      %v2258 = vsel %vm1004, %v2226, 0.0
      %2259 = vadd.xlane.f32.xlu0 %v2258
      %v2260 = vpop.xlane.xlu0 %2259
      %v2261 = vsel %vm1004, %v2227, 0.0
      %2262 = vadd.xlane.f32.xlu0 %v2261
      %v2263 = vpop.xlane.xlu0 %2262
      %v2264 = vsel %vm1004, %v2228, 0.0
      %2265 = vadd.xlane.f32.xlu0 %v2264
      %v2266 = vpop.xlane.xlu0 %2265
      %v2267 = vsel %vm1004, %v2229, 0.0
      %2268 = vadd.xlane.f32.xlu0 %v2267
      %v2269 = vpop.xlane.xlu0 %2268
      %v2270 = vsel %vm1004, %v2230, 0.0
      %2271 = vadd.xlane.f32.xlu0 %v2270
      %v2272 = vpop.xlane.xlu0 %2271
      %v2273 = vsel %vm1004, %v2231, 0.0
      %2274 = vadd.xlane.f32.xlu0 %v2273
      %v2275 = vpop.xlane.xlu0 %2274
      %v2276 = vsel %vm1004, %v2232, 0.0
      %2277 = vadd.xlane.f32.xlu0 %v2276
      %v2278 = vpop.xlane.xlu0 %2277
      %v2279 = vsel %vm1004, %v2233, 0.0
      %2280 = vadd.xlane.f32.xlu0 %v2279
      %v2281 = vpop.xlane.xlu0 %2280
      %v2282 = vsel %vm1004, %v2234, 0.0
      %2283 = vadd.xlane.f32.xlu0 %v2282
      %v2284 = vpop.xlane.xlu0 %2283
      %v2285 = vsel %vm1004, %v2235, 0.0
      %2286 = vadd.xlane.f32.xlu0 %v2285
      %v2287 = vpop.xlane.xlu0 %2286
      %v2288 = vsel %vm1004, %v2236, 0.0
      %2289 = vadd.xlane.f32.xlu0 %v2288
      %v2290 = vpop.xlane.xlu0 %2289
      %v2291 = vsel %vm1004, %v2237, 0.0
      %2292 = vadd.xlane.f32.xlu0 %v2291
      %v2293 = vpop.xlane.xlu0 %2292
      %v2294 = vsel %vm1004, %v2238, 0.0
      %2295 = vadd.xlane.f32.xlu0 %v2294
      %v2296 = vpop.xlane.xlu0 %2295
      %v2297 = vsel %vm1004, %v2239, 0.0
      %2298 = vadd.xlane.f32.xlu0 %v2297
      %v2299 = vpop.xlane.xlu0 %2298
      %v2300 = vsel %vm1004, %v2240, 0.0
      %2301 = vadd.xlane.f32.xlu0 %v2300
      %v2302 = vpop.xlane.xlu0 %2301
      %v2303 = vsel %vm1004, %v2241, 0.0
      %2304 = vadd.xlane.f32.xlu0 %v2303
      %v2305 = vpop.xlane.xlu0 %2304
      %v2306 = vsel %vm1004, %v2242, 0.0
      %2307 = vadd.xlane.f32.xlu0 %v2306
      %v2308 = vpop.xlane.xlu0 %2307
      %v2309 = vsel %vm1004, %v2243, 0.0
      %2310 = vadd.xlane.f32.xlu0 %v2309
      %v2311 = vpop.xlane.xlu0 %2310
      %v2312 = vsel %vm1004, %v2244, 0.0
      %2313 = vadd.xlane.f32.xlu0 %v2312
      %v2314 = vpop.xlane.xlu0 %2313
      %v2315 = vsel %vm1004, %v2245, 0.0
      %2316 = vadd.xlane.f32.xlu0 %v2315
      %v2317 = vpop.xlane.xlu0 %2316
      %v2318 = vsel %vm1004, %v2246, 0.0
      %2319 = vadd.xlane.f32.xlu0 %v2318
      %v2320 = vpop.xlane.xlu0 %2319
      %v2321 = vsel %vm1004, %v2247, 0.0
      %2322 = vadd.xlane.f32.xlu0 %v2321
      %v2323 = vpop.xlane.xlu0 %2322
      %v2324 = vsel %vm1004, %v2248, 0.0
      %2325 = vadd.xlane.f32.xlu0 %v2324
      %v2326 = vpop.xlane.xlu0 %2325
      %v2327 = vsel %vm1004, %v2249, 0.0
      %2328 = vadd.xlane.f32.xlu0 %v2327
      %v2329 = vpop.xlane.xlu0 %2328
      %v2330 = vsel %vm1004, %v2250, 0.0
      %2331 = vadd.xlane.f32.xlu0 %v2330
      %v2332 = vpop.xlane.xlu0 %2331
      %v2333 = vsel %vm1004, %v2251, 0.0
      %2334 = vadd.xlane.f32.xlu0 %v2333
      %v2335 = vpop.xlane.xlu0 %2334
      %v2336 = vsel %vm1004, %v2252, 0.0
      %2337 = vadd.xlane.f32.xlu0 %v2336
      %v2338 = vpop.xlane.xlu0 %2337
      %v2339 = vsel %vm1004, %v2253, 0.0
      %2340 = vadd.xlane.f32.xlu0 %v2339
      %v2341 = vpop.xlane.xlu0 %2340
      %v2342 = vsel %vm1004, %v2254, 0.0
      %2343 = vadd.xlane.f32.xlu0 %v2342
      %v2344 = vpop.xlane.xlu0 %2343
      %v2345 = vsel %vm1004, %v2255, 0.0
      %2346 = vadd.xlane.f32.xlu0 %v2345
      %v2347 = vpop.xlane.xlu0 %2346
      %v2348 = vsel %vm1004, %v2256, 0.0
      %2349 = vadd.xlane.f32.xlu0 %v2348
      %v2350 = vpop.xlane.xlu0 %2349
      %v2351 = vsel %vm1004, %v2257, 0.0
      %2352 = vadd.xlane.f32.xlu0 %v2351
      %v2353 = vpop.xlane.xlu0 %2352
      %v2370 = vunpack.c.l.b16 %v668
      %v2371 = vunpack.c.h.b16 %v668
      %v2372 = vunpack.c.l.b16 %v669
      %v2373 = vunpack.c.h.b16 %v669
      %v2374 = vunpack.c.l.b16 %v670
      %v2375 = vunpack.c.h.b16 %v670
      %v2376 = vunpack.c.l.b16 %v671
      %v2377 = vunpack.c.h.b16 %v671
      %v2378 = vunpack.c.l.b16 %v672
      %v2379 = vunpack.c.h.b16 %v672
      %v2380 = vunpack.c.l.b16 %v673
      %v2381 = vunpack.c.h.b16 %v673
      %v2382 = vunpack.c.l.b16 %v674
      %v2383 = vunpack.c.h.b16 %v674
      %v2384 = vunpack.c.l.b16 %v675
      %v2385 = vunpack.c.h.b16 %v675
      %v2386 = vunpack.c.l.b16 %v676
      %v2387 = vunpack.c.h.b16 %v676
      %v2388 = vunpack.c.l.b16 %v677
      %v2389 = vunpack.c.h.b16 %v677
      %v2390 = vunpack.c.l.b16 %v678
      %v2391 = vunpack.c.h.b16 %v678
      %v2392 = vunpack.c.l.b16 %v679
      %v2393 = vunpack.c.h.b16 %v679
      %v2394 = vunpack.c.l.b16 %v680
      %v2395 = vunpack.c.h.b16 %v680
      %v2396 = vunpack.c.l.b16 %v681
      %v2397 = vunpack.c.h.b16 %v681
      %v2398 = vunpack.c.l.b16 %v682
      %v2399 = vunpack.c.h.b16 %v682
      %v2400 = vunpack.c.l.b16 %v683
      %v2401 = vunpack.c.h.b16 %v683
      %v2402 = vpack.c.b16 %v2370, %v2370
      %v2403 = vpack.c.b16 %v2371, %v2371
      %v2404 = vpack.c.b16 %v2372, %v2372
      %v2405 = vpack.c.b16 %v2373, %v2373
      %v2406 = vpack.c.b16 %v2374, %v2374
      %v2407 = vpack.c.b16 %v2375, %v2375
      %v2408 = vpack.c.b16 %v2376, %v2376
      %v2409 = vpack.c.b16 %v2377, %v2377
      %v2410 = vpack.c.b16 %v2378, %v2378
      %v2411 = vpack.c.b16 %v2379, %v2379
      %v2412 = vpack.c.b16 %v2380, %v2380
      %v2413 = vpack.c.b16 %v2381, %v2381
      %v2414 = vpack.c.b16 %v2382, %v2382
      %v2415 = vpack.c.b16 %v2383, %v2383
      %v2416 = vpack.c.b16 %v2384, %v2384
      %v2417 = vpack.c.b16 %v2385, %v2385
      %v2418 = vpack.c.b16 %v2386, %v2386
      %v2419 = vpack.c.b16 %v2387, %v2387
      %v2420 = vpack.c.b16 %v2388, %v2388
      %v2421 = vpack.c.b16 %v2389, %v2389
      %v2422 = vpack.c.b16 %v2390, %v2390
      %v2423 = vpack.c.b16 %v2391, %v2391
      %v2424 = vpack.c.b16 %v2392, %v2392
      %v2425 = vpack.c.b16 %v2393, %v2393
      %v2426 = vpack.c.b16 %v2394, %v2394
      %v2427 = vpack.c.b16 %v2395, %v2395
      %v2428 = vpack.c.b16 %v2396, %v2396
      %v2429 = vpack.c.b16 %v2397, %v2397
      %v2430 = vpack.c.b16 %v2398, %v2398
      %v2431 = vpack.c.b16 %v2399, %v2399
      %v2432 = vpack.c.b16 %v2400, %v2400
      %v2433 = vpack.c.b16 %v2401, %v2401
      %vm2466 = vcmask 257024
      %2467 = vst.msk [vmem:[%s280] sm:$0xf] %vm2466, %v2402
      %2468 = vst.msk [vmem:[%s280 + $0x4] sm:$0xf] %vm2466, %v2403
      %2469 = vst.msk [vmem:[%s280 + $0x8] sm:$0xf] %vm2466, %v2404
      %2470 = vst.msk [vmem:[%s280 + $0xc] sm:$0xf] %vm2466, %v2405
      %2471 = vst.msk [vmem:[%s280 + $0x10] sm:$0xf] %vm2466, %v2406
      %2472 = vst.msk [vmem:[%s280 + $0x14] sm:$0xf] %vm2466, %v2407
      %2473 = vst.msk [vmem:[%s280 + $0x18] sm:$0xf] %vm2466, %v2408
      %2474 = vst.msk [vmem:[%s280 + $0x1c] sm:$0xf] %vm2466, %v2409
      %2475 = vst.msk [vmem:[%s280 + $0x20] sm:$0xf] %vm2466, %v2410
      %2476 = vst.msk [vmem:[%s280 + $0x24] sm:$0xf] %vm2466, %v2411
      %2477 = vst.msk [vmem:[%s280 + $0x28] sm:$0xf] %vm2466, %v2412
      %2478 = vst.msk [vmem:[%s280 + $0x2c] sm:$0xf] %vm2466, %v2413
      %2479 = vst.msk [vmem:[%s280 + $0x30] sm:$0xf] %vm2466, %v2414
      %2480 = vst.msk [vmem:[%s280 + $0x34] sm:$0xf] %vm2466, %v2415
      %2481 = vst.msk [vmem:[%s280 + $0x38] sm:$0xf] %vm2466, %v2416
      %2482 = vst.msk [vmem:[%s280 + $0x3c] sm:$0xf] %vm2466, %v2417
      %2483 = vst.msk [vmem:[%s280 + $0x40] sm:$0xf] %vm2466, %v2418
      %2484 = vst.msk [vmem:[%s280 + $0x44] sm:$0xf] %vm2466, %v2419
      %2485 = vst.msk [vmem:[%s280 + $0x48] sm:$0xf] %vm2466, %v2420
      %2486 = vst.msk [vmem:[%s280 + $0x4c] sm:$0xf] %vm2466, %v2421
      %2487 = vst.msk [vmem:[%s280 + $0x50] sm:$0xf] %vm2466, %v2422
      %2488 = vst.msk [vmem:[%s280 + $0x54] sm:$0xf] %vm2466, %v2423
      %2489 = vst.msk [vmem:[%s280 + $0x58] sm:$0xf] %vm2466, %v2424
      %2490 = vst.msk [vmem:[%s280 + $0x5c] sm:$0xf] %vm2466, %v2425
      %2491 = vst.msk [vmem:[%s280 + $0x60] sm:$0xf] %vm2466, %v2426
      %2492 = vst.msk [vmem:[%s280 + $0x64] sm:$0xf] %vm2466, %v2427
      %2493 = vst.msk [vmem:[%s280 + $0x68] sm:$0xf] %vm2466, %v2428
      %2494 = vst.msk [vmem:[%s280 + $0x6c] sm:$0xf] %vm2466, %v2429
      %2495 = vst.msk [vmem:[%s280 + $0x70] sm:$0xf] %vm2466, %v2430
      %2496 = vst.msk [vmem:[%s280 + $0x74] sm:$0xf] %vm2466, %v2431
      %2497 = vst.msk [vmem:[%s280 + $0x78] sm:$0xf] %vm2466, %v2432
      %2498 = vst.msk [vmem:[%s280 + $0x7c] sm:$0xf] %vm2466, %v2433
      %v2499 = vpack.c.bf16 %v794, %v791
      %v2500 = vpack.c.bf16 %v802, %v799
      %v2501 = vpack.c.bf16 %v810, %v807
      %v2502 = vpack.c.bf16 %v818, %v815
      %v2503 = vpack.c.bf16 %v826, %v823
      %v2504 = vpack.c.bf16 %v834, %v831
      %v2505 = vpack.c.bf16 %v842, %v839
      %v2506 = vpack.c.bf16 %v850, %v847
      %v2507 = vpack.c.bf16 %v858, %v855
      %v2508 = vpack.c.bf16 %v866, %v863
      %v2509 = vpack.c.bf16 %v874, %v871
      %v2510 = vpack.c.bf16 %v882, %v879
      %v2511 = vpack.c.bf16 %v890, %v887
      %v2512 = vpack.c.bf16 %v898, %v895
      %v2513 = vpack.c.bf16 %v906, %v903
      %v2514 = vpack.c.bf16 %v914, %v911
      %v2531 = vunpack.c.l.b16 %v2499
      %v2532 = vunpack.c.h.b16 %v2499
      %v2533 = vunpack.c.l.b16 %v2500
      %v2534 = vunpack.c.h.b16 %v2500
      %v2535 = vunpack.c.l.b16 %v2501
      %v2536 = vunpack.c.h.b16 %v2501
      %v2537 = vunpack.c.l.b16 %v2502
      %v2538 = vunpack.c.h.b16 %v2502
      %v2539 = vunpack.c.l.b16 %v2503
      %v2540 = vunpack.c.h.b16 %v2503
      %v2541 = vunpack.c.l.b16 %v2504
      %v2542 = vunpack.c.h.b16 %v2504
      %v2543 = vunpack.c.l.b16 %v2505
      %v2544 = vunpack.c.h.b16 %v2505
      %v2545 = vunpack.c.l.b16 %v2506
      %v2546 = vunpack.c.h.b16 %v2506
      %v2547 = vunpack.c.l.b16 %v2507
      %v2548 = vunpack.c.h.b16 %v2507
      %v2549 = vunpack.c.l.b16 %v2508
      %v2550 = vunpack.c.h.b16 %v2508
      %v2551 = vunpack.c.l.b16 %v2509
      %v2552 = vunpack.c.h.b16 %v2509
      %v2553 = vunpack.c.l.b16 %v2510
      %v2554 = vunpack.c.h.b16 %v2510
      %v2555 = vunpack.c.l.b16 %v2511
      %v2556 = vunpack.c.h.b16 %v2511
      %v2557 = vunpack.c.l.b16 %v2512
      %v2558 = vunpack.c.h.b16 %v2512
      %v2559 = vunpack.c.l.b16 %v2513
      %v2560 = vunpack.c.h.b16 %v2513
      %v2561 = vunpack.c.l.b16 %v2514
      %v2562 = vunpack.c.h.b16 %v2514
      %v2563 = vpack.c.b16 %v2531, %v2531
      %v2564 = vpack.c.b16 %v2532, %v2532
      %v2565 = vpack.c.b16 %v2533, %v2533
      %v2566 = vpack.c.b16 %v2534, %v2534
      %v2567 = vpack.c.b16 %v2535, %v2535
      %v2568 = vpack.c.b16 %v2536, %v2536
      %v2569 = vpack.c.b16 %v2537, %v2537
      %v2570 = vpack.c.b16 %v2538, %v2538
      %v2571 = vpack.c.b16 %v2539, %v2539
      %v2572 = vpack.c.b16 %v2540, %v2540
      %v2573 = vpack.c.b16 %v2541, %v2541
      %v2574 = vpack.c.b16 %v2542, %v2542
      %v2575 = vpack.c.b16 %v2543, %v2543
      %v2576 = vpack.c.b16 %v2544, %v2544
      %v2577 = vpack.c.b16 %v2545, %v2545
      %v2578 = vpack.c.b16 %v2546, %v2546
      %v2579 = vpack.c.b16 %v2547, %v2547
      %v2580 = vpack.c.b16 %v2548, %v2548
      %v2581 = vpack.c.b16 %v2549, %v2549
      %v2582 = vpack.c.b16 %v2550, %v2550
      %v2583 = vpack.c.b16 %v2551, %v2551
      %v2584 = vpack.c.b16 %v2552, %v2552
      %v2585 = vpack.c.b16 %v2553, %v2553
      %v2586 = vpack.c.b16 %v2554, %v2554
      %v2587 = vpack.c.b16 %v2555, %v2555
      %v2588 = vpack.c.b16 %v2556, %v2556
      %v2589 = vpack.c.b16 %v2557, %v2557
      %v2590 = vpack.c.b16 %v2558, %v2558
      %v2591 = vpack.c.b16 %v2559, %v2559
      %v2592 = vpack.c.b16 %v2560, %v2560
      %v2593 = vpack.c.b16 %v2561, %v2561
      %v2594 = vpack.c.b16 %v2562, %v2562
      %2595 = vrot.lane.b32.xlu0 %v2563, 96
      %v2596 = vpop.permute.xlu0 %2595
      %2597 = vrot.lane.b32.xlu0 %v2564, 96
      %v2598 = vpop.permute.xlu0 %2597
      %2599 = vrot.lane.b32.xlu0 %v2565, 96
      %v2600 = vpop.permute.xlu0 %2599
      %2601 = vrot.lane.b32.xlu0 %v2566, 96
      %v2602 = vpop.permute.xlu0 %2601
      %2603 = vrot.lane.b32.xlu0 %v2567, 96
      %v2604 = vpop.permute.xlu0 %2603
      %2605 = vrot.lane.b32.xlu0 %v2568, 96
      %v2606 = vpop.permute.xlu0 %2605
      %2607 = vrot.lane.b32.xlu0 %v2569, 96
      %v2608 = vpop.permute.xlu0 %2607
      %2609 = vrot.lane.b32.xlu0 %v2570, 96
      %v2610 = vpop.permute.xlu0 %2609
      %2611 = vrot.lane.b32.xlu0 %v2571, 96
      %v2612 = vpop.permute.xlu0 %2611
      %2613 = vrot.lane.b32.xlu0 %v2572, 96
      %v2614 = vpop.permute.xlu0 %2613
      %2615 = vrot.lane.b32.xlu0 %v2573, 96
      %v2616 = vpop.permute.xlu0 %2615
      %2617 = vrot.lane.b32.xlu0 %v2574, 96
      %v2618 = vpop.permute.xlu0 %2617
      %2619 = vrot.lane.b32.xlu0 %v2575, 96
      %v2620 = vpop.permute.xlu0 %2619
      %2621 = vrot.lane.b32.xlu0 %v2576, 96
      %v2622 = vpop.permute.xlu0 %2621
      %2623 = vrot.lane.b32.xlu0 %v2577, 96
      %v2624 = vpop.permute.xlu0 %2623
      %2625 = vrot.lane.b32.xlu0 %v2578, 96
      %v2626 = vpop.permute.xlu0 %2625
      %2627 = vrot.lane.b32.xlu0 %v2579, 96
      %v2628 = vpop.permute.xlu0 %2627
      %2629 = vrot.lane.b32.xlu0 %v2580, 96
      %v2630 = vpop.permute.xlu0 %2629
      %2631 = vrot.lane.b32.xlu0 %v2581, 96
      %v2632 = vpop.permute.xlu0 %2631
      %2633 = vrot.lane.b32.xlu0 %v2582, 96
      %v2634 = vpop.permute.xlu0 %2633
      %2635 = vrot.lane.b32.xlu0 %v2583, 96
      %v2636 = vpop.permute.xlu0 %2635
      %2637 = vrot.lane.b32.xlu0 %v2584, 96
      %v2638 = vpop.permute.xlu0 %2637
      %2639 = vrot.lane.b32.xlu0 %v2585, 96
      %v2640 = vpop.permute.xlu0 %2639
      %2641 = vrot.lane.b32.xlu0 %v2586, 96
      %v2642 = vpop.permute.xlu0 %2641
      %2643 = vrot.lane.b32.xlu0 %v2587, 96
      %v2644 = vpop.permute.xlu0 %2643
      %2645 = vrot.lane.b32.xlu0 %v2588, 96
      %v2646 = vpop.permute.xlu0 %2645
      %2647 = vrot.lane.b32.xlu0 %v2589, 96
      %v2648 = vpop.permute.xlu0 %2647
      %2649 = vrot.lane.b32.xlu0 %v2590, 96
      %v2650 = vpop.permute.xlu0 %2649
      %2651 = vrot.lane.b32.xlu0 %v2591, 96
      %v2652 = vpop.permute.xlu0 %2651
      %2653 = vrot.lane.b32.xlu0 %v2592, 96
      %v2654 = vpop.permute.xlu0 %2653
      %2655 = vrot.lane.b32.xlu0 %v2593, 96
      %v2656 = vpop.permute.xlu0 %2655
      %2657 = vrot.lane.b32.xlu0 %v2594, 96
      %v2658 = vpop.permute.xlu0 %2657
      %vm2691 = vcmask 273664
      %2692 = vst.msk [vmem:[%s280] sm:$0xf] %vm2691, %v2596
      %2693 = vst.msk [vmem:[%s280 + $0x4] sm:$0xf] %vm2691, %v2598
      %2694 = vst.msk [vmem:[%s280 + $0x8] sm:$0xf] %vm2691, %v2600
      %2695 = vst.msk [vmem:[%s280 + $0xc] sm:$0xf] %vm2691, %v2602
      %2696 = vst.msk [vmem:[%s280 + $0x10] sm:$0xf] %vm2691, %v2604
      %2697 = vst.msk [vmem:[%s280 + $0x14] sm:$0xf] %vm2691, %v2606
      %2698 = vst.msk [vmem:[%s280 + $0x18] sm:$0xf] %vm2691, %v2608
      %2699 = vst.msk [vmem:[%s280 + $0x1c] sm:$0xf] %vm2691, %v2610
      %2700 = vst.msk [vmem:[%s280 + $0x20] sm:$0xf] %vm2691, %v2612
      %2701 = vst.msk [vmem:[%s280 + $0x24] sm:$0xf] %vm2691, %v2614
      %2702 = vst.msk [vmem:[%s280 + $0x28] sm:$0xf] %vm2691, %v2616
      %2703 = vst.msk [vmem:[%s280 + $0x2c] sm:$0xf] %vm2691, %v2618
      %2704 = vst.msk [vmem:[%s280 + $0x30] sm:$0xf] %vm2691, %v2620
      %2705 = vst.msk [vmem:[%s280 + $0x34] sm:$0xf] %vm2691, %v2622
      %2706 = vst.msk [vmem:[%s280 + $0x38] sm:$0xf] %vm2691, %v2624
      %2707 = vst.msk [vmem:[%s280 + $0x3c] sm:$0xf] %vm2691, %v2626
      %2708 = vst.msk [vmem:[%s280 + $0x40] sm:$0xf] %vm2691, %v2628
      %2709 = vst.msk [vmem:[%s280 + $0x44] sm:$0xf] %vm2691, %v2630
      %2710 = vst.msk [vmem:[%s280 + $0x48] sm:$0xf] %vm2691, %v2632
      %2711 = vst.msk [vmem:[%s280 + $0x4c] sm:$0xf] %vm2691, %v2634
      %2712 = vst.msk [vmem:[%s280 + $0x50] sm:$0xf] %vm2691, %v2636
      %2713 = vst.msk [vmem:[%s280 + $0x54] sm:$0xf] %vm2691, %v2638
      %2714 = vst.msk [vmem:[%s280 + $0x58] sm:$0xf] %vm2691, %v2640
      %2715 = vst.msk [vmem:[%s280 + $0x5c] sm:$0xf] %vm2691, %v2642
      %2716 = vst.msk [vmem:[%s280 + $0x60] sm:$0xf] %vm2691, %v2644
      %2717 = vst.msk [vmem:[%s280 + $0x64] sm:$0xf] %vm2691, %v2646
      %2718 = vst.msk [vmem:[%s280 + $0x68] sm:$0xf] %vm2691, %v2648
      %2719 = vst.msk [vmem:[%s280 + $0x6c] sm:$0xf] %vm2691, %v2650
      %2720 = vst.msk [vmem:[%s280 + $0x70] sm:$0xf] %vm2691, %v2652
      %2721 = vst.msk [vmem:[%s280 + $0x74] sm:$0xf] %vm2691, %v2654
      %2722 = vst.msk [vmem:[%s280 + $0x78] sm:$0xf] %vm2691, %v2656
      %2723 = vst.msk [vmem:[%s280 + $0x7c] sm:$0xf] %vm2691, %v2658
      %v2724 = vpack.c.bf16 %v2263, %v2260
      %v2725 = vpack.c.bf16 %v2269, %v2266
      %v2726 = vpack.c.bf16 %v2275, %v2272
      %v2727 = vpack.c.bf16 %v2281, %v2278
      %v2728 = vpack.c.bf16 %v2287, %v2284
      %v2729 = vpack.c.bf16 %v2293, %v2290
      %v2730 = vpack.c.bf16 %v2299, %v2296
      %v2731 = vpack.c.bf16 %v2305, %v2302
      %v2732 = vpack.c.bf16 %v2311, %v2308
      %v2733 = vpack.c.bf16 %v2317, %v2314
      %v2734 = vpack.c.bf16 %v2323, %v2320
      %v2735 = vpack.c.bf16 %v2329, %v2326
      %v2736 = vpack.c.bf16 %v2335, %v2332
      %v2737 = vpack.c.bf16 %v2341, %v2338
      %v2738 = vpack.c.bf16 %v2347, %v2344
      %v2739 = vpack.c.bf16 %v2353, %v2350
      %v2757 = vunpack.c.l.s4 839922192
      %v2758 = vunpack.c.0.s8 %v2757
      %v2759 = vlaneseq
      %v2760 = vshrl.u32 %v2759, 7
      %v2761 = vsub.s32 %v2758, %v2760
      %v2762 = vrot.slane %v2724, %v2761
      %v2764 = vunpack.c.l.s4 1985246804
      %v2765 = vunpack.c.0.s8 %v2764
      %v2766 = vlaneseq
      %v2767 = vshrl.u32 %v2766, 7
      %v2768 = vsub.s32 %v2765, %v2767
      %v2769 = vrot.slane %v2724, %v2768
      %v2771 = vunpack.c.l.s4 839922192
      %v2772 = vunpack.c.0.s8 %v2771
      %v2773 = vlaneseq
      %v2774 = vshrl.u32 %v2773, 7
      %v2775 = vsub.s32 %v2772, %v2774
      %v2776 = vrot.slane %v2725, %v2775
      %v2778 = vunpack.c.l.s4 1985246804
      %v2779 = vunpack.c.0.s8 %v2778
      %v2780 = vlaneseq
      %v2781 = vshrl.u32 %v2780, 7
      %v2782 = vsub.s32 %v2779, %v2781
      %v2783 = vrot.slane %v2725, %v2782
      %v2785 = vunpack.c.l.s4 839922192
      %v2786 = vunpack.c.0.s8 %v2785
      %v2787 = vlaneseq
      %v2788 = vshrl.u32 %v2787, 7
      %v2789 = vsub.s32 %v2786, %v2788
      %v2790 = vrot.slane %v2726, %v2789
      %v2792 = vunpack.c.l.s4 1985246804
      %v2793 = vunpack.c.0.s8 %v2792
      %v2794 = vlaneseq
      %v2795 = vshrl.u32 %v2794, 7
      %v2796 = vsub.s32 %v2793, %v2795
      %v2797 = vrot.slane %v2726, %v2796
      %v2799 = vunpack.c.l.s4 839922192
      %v2800 = vunpack.c.0.s8 %v2799
      %v2801 = vlaneseq
      %v2802 = vshrl.u32 %v2801, 7
      %v2803 = vsub.s32 %v2800, %v2802
      %v2804 = vrot.slane %v2727, %v2803
      %v2806 = vunpack.c.l.s4 1985246804
      %v2807 = vunpack.c.0.s8 %v2806
      %v2808 = vlaneseq
      %v2809 = vshrl.u32 %v2808, 7
      %v2810 = vsub.s32 %v2807, %v2809
      %v2811 = vrot.slane %v2727, %v2810
      %v2813 = vunpack.c.l.s4 839922192
      %v2814 = vunpack.c.0.s8 %v2813
      %v2815 = vlaneseq
      %v2816 = vshrl.u32 %v2815, 7
      %v2817 = vsub.s32 %v2814, %v2816
      %v2818 = vrot.slane %v2728, %v2817
      %v2820 = vunpack.c.l.s4 1985246804
      %v2821 = vunpack.c.0.s8 %v2820
      %v2822 = vlaneseq
      %v2823 = vshrl.u32 %v2822, 7
      %v2824 = vsub.s32 %v2821, %v2823
      %v2825 = vrot.slane %v2728, %v2824
      %v2827 = vunpack.c.l.s4 839922192
      %v2828 = vunpack.c.0.s8 %v2827
      %v2829 = vlaneseq
      %v2830 = vshrl.u32 %v2829, 7
      %v2831 = vsub.s32 %v2828, %v2830
      %v2832 = vrot.slane %v2729, %v2831
      %v2834 = vunpack.c.l.s4 1985246804
      %v2835 = vunpack.c.0.s8 %v2834
      %v2836 = vlaneseq
      %v2837 = vshrl.u32 %v2836, 7
      %v2838 = vsub.s32 %v2835, %v2837
      %v2839 = vrot.slane %v2729, %v2838
      %v2841 = vunpack.c.l.s4 839922192
      %v2842 = vunpack.c.0.s8 %v2841
      %v2843 = vlaneseq
      %v2844 = vshrl.u32 %v2843, 7
      %v2845 = vsub.s32 %v2842, %v2844
      %v2846 = vrot.slane %v2730, %v2845
      %v2848 = vunpack.c.l.s4 1985246804
      %v2849 = vunpack.c.0.s8 %v2848
      %v2850 = vlaneseq
      %v2851 = vshrl.u32 %v2850, 7
      %v2852 = vsub.s32 %v2849, %v2851
      %v2853 = vrot.slane %v2730, %v2852
      %v2855 = vunpack.c.l.s4 839922192
      %v2856 = vunpack.c.0.s8 %v2855
      %v2857 = vlaneseq
      %v2858 = vshrl.u32 %v2857, 7
      %v2859 = vsub.s32 %v2856, %v2858
      %v2860 = vrot.slane %v2731, %v2859
      %v2862 = vunpack.c.l.s4 1985246804
      %v2863 = vunpack.c.0.s8 %v2862
      %v2864 = vlaneseq
      %v2865 = vshrl.u32 %v2864, 7
      %v2866 = vsub.s32 %v2863, %v2865
      %v2867 = vrot.slane %v2731, %v2866
      %v2869 = vunpack.c.l.s4 839922192
      %v2870 = vunpack.c.0.s8 %v2869
      %v2871 = vlaneseq
      %v2872 = vshrl.u32 %v2871, 7
      %v2873 = vsub.s32 %v2870, %v2872
      %v2874 = vrot.slane %v2732, %v2873
      %v2876 = vunpack.c.l.s4 1985246804
      %v2877 = vunpack.c.0.s8 %v2876
      %v2878 = vlaneseq
      %v2879 = vshrl.u32 %v2878, 7
      %v2880 = vsub.s32 %v2877, %v2879
      %v2881 = vrot.slane %v2732, %v2880
      %v2883 = vunpack.c.l.s4 839922192
      %v2884 = vunpack.c.0.s8 %v2883
      %v2885 = vlaneseq
      %v2886 = vshrl.u32 %v2885, 7
      %v2887 = vsub.s32 %v2884, %v2886
      %v2888 = vrot.slane %v2733, %v2887
      %v2890 = vunpack.c.l.s4 1985246804
      %v2891 = vunpack.c.0.s8 %v2890
      %v2892 = vlaneseq
      %v2893 = vshrl.u32 %v2892, 7
      %v2894 = vsub.s32 %v2891, %v2893
      %v2895 = vrot.slane %v2733, %v2894
      %v2897 = vunpack.c.l.s4 839922192
      %v2898 = vunpack.c.0.s8 %v2897
      %v2899 = vlaneseq
      %v2900 = vshrl.u32 %v2899, 7
      %v2901 = vsub.s32 %v2898, %v2900
      %v2902 = vrot.slane %v2734, %v2901
      %v2904 = vunpack.c.l.s4 1985246804
      %v2905 = vunpack.c.0.s8 %v2904
      %v2906 = vlaneseq
      %v2907 = vshrl.u32 %v2906, 7
      %v2908 = vsub.s32 %v2905, %v2907
      %v2909 = vrot.slane %v2734, %v2908
      %v2911 = vunpack.c.l.s4 839922192
      %v2912 = vunpack.c.0.s8 %v2911
      %v2913 = vlaneseq
      %v2914 = vshrl.u32 %v2913, 7
      %v2915 = vsub.s32 %v2912, %v2914
      %v2916 = vrot.slane %v2735, %v2915
      %v2918 = vunpack.c.l.s4 1985246804
      %v2919 = vunpack.c.0.s8 %v2918
      %v2920 = vlaneseq
      %v2921 = vshrl.u32 %v2920, 7
      %v2922 = vsub.s32 %v2919, %v2921
      %v2923 = vrot.slane %v2735, %v2922
      %v2925 = vunpack.c.l.s4 839922192
      %v2926 = vunpack.c.0.s8 %v2925
      %v2927 = vlaneseq
      %v2928 = vshrl.u32 %v2927, 7
      %v2929 = vsub.s32 %v2926, %v2928
      %v2930 = vrot.slane %v2736, %v2929
      %v2932 = vunpack.c.l.s4 1985246804
      %v2933 = vunpack.c.0.s8 %v2932
      %v2934 = vlaneseq
      %v2935 = vshrl.u32 %v2934, 7
      %v2936 = vsub.s32 %v2933, %v2935
      %v2937 = vrot.slane %v2736, %v2936
      %v2939 = vunpack.c.l.s4 839922192
      %v2940 = vunpack.c.0.s8 %v2939
      %v2941 = vlaneseq
      %v2942 = vshrl.u32 %v2941, 7
      %v2943 = vsub.s32 %v2940, %v2942
      %v2944 = vrot.slane %v2737, %v2943
      %v2946 = vunpack.c.l.s4 1985246804
      %v2947 = vunpack.c.0.s8 %v2946
      %v2948 = vlaneseq
      %v2949 = vshrl.u32 %v2948, 7
      %v2950 = vsub.s32 %v2947, %v2949
      %v2951 = vrot.slane %v2737, %v2950
      %v2953 = vunpack.c.l.s4 839922192
      %v2954 = vunpack.c.0.s8 %v2953
      %v2955 = vlaneseq
      %v2956 = vshrl.u32 %v2955, 7
      %v2957 = vsub.s32 %v2954, %v2956
      %v2958 = vrot.slane %v2738, %v2957
      %v2960 = vunpack.c.l.s4 1985246804
      %v2961 = vunpack.c.0.s8 %v2960
      %v2962 = vlaneseq
      %v2963 = vshrl.u32 %v2962, 7
      %v2964 = vsub.s32 %v2961, %v2963
      %v2965 = vrot.slane %v2738, %v2964
      %v2967 = vunpack.c.l.s4 839922192
      %v2968 = vunpack.c.0.s8 %v2967
      %v2969 = vlaneseq
      %v2970 = vshrl.u32 %v2969, 7
      %v2971 = vsub.s32 %v2968, %v2970
      %v2972 = vrot.slane %v2739, %v2971
      %v2974 = vunpack.c.l.s4 1985246804
      %v2975 = vunpack.c.0.s8 %v2974
      %v2976 = vlaneseq
      %v2977 = vshrl.u32 %v2976, 7
      %v2978 = vsub.s32 %v2975, %v2977
      %v2979 = vrot.slane %v2739, %v2978
      %vm3012 = vcmask 281872
      %3013 = vst.msk [vmem:[%s280] sm:$0xf] %vm3012, %v2762
      %3014 = vst.msk [vmem:[%s280 + $0x4] sm:$0xf] %vm3012, %v2769
      %3015 = vst.msk [vmem:[%s280 + $0x8] sm:$0xf] %vm3012, %v2776
      %3016 = vst.msk [vmem:[%s280 + $0xc] sm:$0xf] %vm3012, %v2783
      %3017 = vst.msk [vmem:[%s280 + $0x10] sm:$0xf] %vm3012, %v2790
      %3018 = vst.msk [vmem:[%s280 + $0x14] sm:$0xf] %vm3012, %v2797
      %3019 = vst.msk [vmem:[%s280 + $0x18] sm:$0xf] %vm3012, %v2804
      %3020 = vst.msk [vmem:[%s280 + $0x1c] sm:$0xf] %vm3012, %v2811
      %3021 = vst.msk [vmem:[%s280 + $0x20] sm:$0xf] %vm3012, %v2818
      %3022 = vst.msk [vmem:[%s280 + $0x24] sm:$0xf] %vm3012, %v2825
      %3023 = vst.msk [vmem:[%s280 + $0x28] sm:$0xf] %vm3012, %v2832
      %3024 = vst.msk [vmem:[%s280 + $0x2c] sm:$0xf] %vm3012, %v2839
      %3025 = vst.msk [vmem:[%s280 + $0x30] sm:$0xf] %vm3012, %v2846
      %3026 = vst.msk [vmem:[%s280 + $0x34] sm:$0xf] %vm3012, %v2853
      %3027 = vst.msk [vmem:[%s280 + $0x38] sm:$0xf] %vm3012, %v2860
      %3028 = vst.msk [vmem:[%s280 + $0x3c] sm:$0xf] %vm3012, %v2867
      %3029 = vst.msk [vmem:[%s280 + $0x40] sm:$0xf] %vm3012, %v2874
      %3030 = vst.msk [vmem:[%s280 + $0x44] sm:$0xf] %vm3012, %v2881
      %3031 = vst.msk [vmem:[%s280 + $0x48] sm:$0xf] %vm3012, %v2888
      %3032 = vst.msk [vmem:[%s280 + $0x4c] sm:$0xf] %vm3012, %v2895
      %3033 = vst.msk [vmem:[%s280 + $0x50] sm:$0xf] %vm3012, %v2902
      %3034 = vst.msk [vmem:[%s280 + $0x54] sm:$0xf] %vm3012, %v2909
      %3035 = vst.msk [vmem:[%s280 + $0x58] sm:$0xf] %vm3012, %v2916
      %3036 = vst.msk [vmem:[%s280 + $0x5c] sm:$0xf] %vm3012, %v2923
      %3037 = vst.msk [vmem:[%s280 + $0x60] sm:$0xf] %vm3012, %v2930
      %3038 = vst.msk [vmem:[%s280 + $0x64] sm:$0xf] %vm3012, %v2937
      %3039 = vst.msk [vmem:[%s280 + $0x68] sm:$0xf] %vm3012, %v2944
      %3040 = vst.msk [vmem:[%s280 + $0x6c] sm:$0xf] %vm3012, %v2951
      %3041 = vst.msk [vmem:[%s280 + $0x70] sm:$0xf] %vm3012, %v2958
      %3042 = vst.msk [vmem:[%s280 + $0x74] sm:$0xf] %vm3012, %v2965
      %3043 = vst.msk [vmem:[%s280 + $0x78] sm:$0xf] %vm3012, %v2972
      %3044 = vst.msk [vmem:[%s280 + $0x7c] sm:$0xf] %vm3012, %v2979
      %v3061 = vunpack.c.l.b16 %v1214
      %v3062 = vunpack.c.h.b16 %v1214
      %v3063 = vunpack.c.l.b16 %v1215
      %v3064 = vunpack.c.h.b16 %v1215
      %v3065 = vunpack.c.l.b16 %v1216
      %v3066 = vunpack.c.h.b16 %v1216
      %v3067 = vunpack.c.l.b16 %v1217
      %v3068 = vunpack.c.h.b16 %v1217
      %v3069 = vunpack.c.l.b16 %v1218
      %v3070 = vunpack.c.h.b16 %v1218
      %v3071 = vunpack.c.l.b16 %v1219
      %v3072 = vunpack.c.h.b16 %v1219
      %v3073 = vunpack.c.l.b16 %v1220
      %v3074 = vunpack.c.h.b16 %v1220
      %v3075 = vunpack.c.l.b16 %v1221
      %v3076 = vunpack.c.h.b16 %v1221
      %v3077 = vunpack.c.l.b16 %v1222
      %v3078 = vunpack.c.h.b16 %v1222
      %v3079 = vunpack.c.l.b16 %v1223
      %v3080 = vunpack.c.h.b16 %v1223
      %v3081 = vunpack.c.l.b16 %v1224
      %v3082 = vunpack.c.h.b16 %v1224
      %v3083 = vunpack.c.l.b16 %v1225
      %v3084 = vunpack.c.h.b16 %v1225
      %v3085 = vunpack.c.l.b16 %v1226
      %v3086 = vunpack.c.h.b16 %v1226
      %v3087 = vunpack.c.l.b16 %v1227
      %v3088 = vunpack.c.h.b16 %v1227
      %v3089 = vunpack.c.l.b16 %v1228
      %v3090 = vunpack.c.h.b16 %v1228
      %v3091 = vunpack.c.l.b16 %v1229
      %v3092 = vunpack.c.h.b16 %v1229
      %v3093 = vpack.c.b16 %v3061, %v3061
      %v3094 = vpack.c.b16 %v3062, %v3062
      %v3095 = vpack.c.b16 %v3063, %v3063
      %v3096 = vpack.c.b16 %v3064, %v3064
      %v3097 = vpack.c.b16 %v3065, %v3065
      %v3098 = vpack.c.b16 %v3066, %v3066
      %v3099 = vpack.c.b16 %v3067, %v3067
      %v3100 = vpack.c.b16 %v3068, %v3068
      %v3101 = vpack.c.b16 %v3069, %v3069
      %v3102 = vpack.c.b16 %v3070, %v3070
      %v3103 = vpack.c.b16 %v3071, %v3071
      %v3104 = vpack.c.b16 %v3072, %v3072
      %v3105 = vpack.c.b16 %v3073, %v3073
      %v3106 = vpack.c.b16 %v3074, %v3074
      %v3107 = vpack.c.b16 %v3075, %v3075
      %v3108 = vpack.c.b16 %v3076, %v3076
      %v3109 = vpack.c.b16 %v3077, %v3077
      %v3110 = vpack.c.b16 %v3078, %v3078
      %v3111 = vpack.c.b16 %v3079, %v3079
      %v3112 = vpack.c.b16 %v3080, %v3080
      %v3113 = vpack.c.b16 %v3081, %v3081
      %v3114 = vpack.c.b16 %v3082, %v3082
      %v3115 = vpack.c.b16 %v3083, %v3083
      %v3116 = vpack.c.b16 %v3084, %v3084
      %v3117 = vpack.c.b16 %v3085, %v3085
      %v3118 = vpack.c.b16 %v3086, %v3086
      %v3119 = vpack.c.b16 %v3087, %v3087
      %v3120 = vpack.c.b16 %v3088, %v3088
      %v3121 = vpack.c.b16 %v3089, %v3089
      %v3122 = vpack.c.b16 %v3090, %v3090
      %v3123 = vpack.c.b16 %v3091, %v3091
      %v3124 = vpack.c.b16 %v3092, %v3092
      %3125 = vrot.lane.b32.xlu0 %v3093, 64
      %v3126 = vpop.permute.xlu0 %3125
      %3127 = vrot.lane.b32.xlu0 %v3094, 64
      %v3128 = vpop.permute.xlu0 %3127
      %3129 = vrot.lane.b32.xlu0 %v3095, 64
      %v3130 = vpop.permute.xlu0 %3129
      %3131 = vrot.lane.b32.xlu0 %v3096, 64
      %v3132 = vpop.permute.xlu0 %3131
      %3133 = vrot.lane.b32.xlu0 %v3097, 64
      %v3134 = vpop.permute.xlu0 %3133
      %3135 = vrot.lane.b32.xlu0 %v3098, 64
      %v3136 = vpop.permute.xlu0 %3135
      %3137 = vrot.lane.b32.xlu0 %v3099, 64
      %v3138 = vpop.permute.xlu0 %3137
      %3139 = vrot.lane.b32.xlu0 %v3100, 64
      %v3140 = vpop.permute.xlu0 %3139
      %3141 = vrot.lane.b32.xlu0 %v3101, 64
      %v3142 = vpop.permute.xlu0 %3141
      %3143 = vrot.lane.b32.xlu0 %v3102, 64
      %v3144 = vpop.permute.xlu0 %3143
      %3145 = vrot.lane.b32.xlu0 %v3103, 64
      %v3146 = vpop.permute.xlu0 %3145
      %3147 = vrot.lane.b32.xlu0 %v3104, 64
      %v3148 = vpop.permute.xlu0 %3147
      %3149 = vrot.lane.b32.xlu0 %v3105, 64
      %v3150 = vpop.permute.xlu0 %3149
      %3151 = vrot.lane.b32.xlu0 %v3106, 64
      %v3152 = vpop.permute.xlu0 %3151
      %3153 = vrot.lane.b32.xlu0 %v3107, 64
      %v3154 = vpop.permute.xlu0 %3153
      %3155 = vrot.lane.b32.xlu0 %v3108, 64
      %v3156 = vpop.permute.xlu0 %3155
      %3157 = vrot.lane.b32.xlu0 %v3109, 64
      %v3158 = vpop.permute.xlu0 %3157
      %3159 = vrot.lane.b32.xlu0 %v3110, 64
      %v3160 = vpop.permute.xlu0 %3159
      %3161 = vrot.lane.b32.xlu0 %v3111, 64
      %v3162 = vpop.permute.xlu0 %3161
      %3163 = vrot.lane.b32.xlu0 %v3112, 64
      %v3164 = vpop.permute.xlu0 %3163
      %3165 = vrot.lane.b32.xlu0 %v3113, 64
      %v3166 = vpop.permute.xlu0 %3165
      %3167 = vrot.lane.b32.xlu0 %v3114, 64
      %v3168 = vpop.permute.xlu0 %3167
      %3169 = vrot.lane.b32.xlu0 %v3115, 64
      %v3170 = vpop.permute.xlu0 %3169
      %3171 = vrot.lane.b32.xlu0 %v3116, 64
      %v3172 = vpop.permute.xlu0 %3171
      %3173 = vrot.lane.b32.xlu0 %v3117, 64
      %v3174 = vpop.permute.xlu0 %3173
      %3175 = vrot.lane.b32.xlu0 %v3118, 64
      %v3176 = vpop.permute.xlu0 %3175
      %3177 = vrot.lane.b32.xlu0 %v3119, 64
      %v3178 = vpop.permute.xlu0 %3177
      %3179 = vrot.lane.b32.xlu0 %v3120, 64
      %v3180 = vpop.permute.xlu0 %3179
      %3181 = vrot.lane.b32.xlu0 %v3121, 64
      %v3182 = vpop.permute.xlu0 %3181
      %3183 = vrot.lane.b32.xlu0 %v3122, 64
      %v3184 = vpop.permute.xlu0 %3183
      %3185 = vrot.lane.b32.xlu0 %v3123, 64
      %v3186 = vpop.permute.xlu0 %3185
      %3187 = vrot.lane.b32.xlu0 %v3124, 64
      %v3188 = vpop.permute.xlu0 %3187
      %vm3221 = vcmask 1043968
      %3222 = vst.msk [vmem:[%s280] sm:$0xf] %vm3221, %v3126
      %3223 = vst.msk [vmem:[%s280 + $0x4] sm:$0xf] %vm3221, %v3128
      %3224 = vst.msk [vmem:[%s280 + $0x8] sm:$0xf] %vm3221, %v3130
      %3225 = vst.msk [vmem:[%s280 + $0xc] sm:$0xf] %vm3221, %v3132
      %3226 = vst.msk [vmem:[%s280 + $0x10] sm:$0xf] %vm3221, %v3134
      %3227 = vst.msk [vmem:[%s280 + $0x14] sm:$0xf] %vm3221, %v3136
      %3228 = vst.msk [vmem:[%s280 + $0x18] sm:$0xf] %vm3221, %v3138
      %3229 = vst.msk [vmem:[%s280 + $0x1c] sm:$0xf] %vm3221, %v3140
      %3230 = vst.msk [vmem:[%s280 + $0x20] sm:$0xf] %vm3221, %v3142
      %3231 = vst.msk [vmem:[%s280 + $0x24] sm:$0xf] %vm3221, %v3144
      %3232 = vst.msk [vmem:[%s280 + $0x28] sm:$0xf] %vm3221, %v3146
      %3233 = vst.msk [vmem:[%s280 + $0x2c] sm:$0xf] %vm3221, %v3148
      %3234 = vst.msk [vmem:[%s280 + $0x30] sm:$0xf] %vm3221, %v3150
      %3235 = vst.msk [vmem:[%s280 + $0x34] sm:$0xf] %vm3221, %v3152
      %3236 = vst.msk [vmem:[%s280 + $0x38] sm:$0xf] %vm3221, %v3154
      %3237 = vst.msk [vmem:[%s280 + $0x3c] sm:$0xf] %vm3221, %v3156
      %3238 = vst.msk [vmem:[%s280 + $0x40] sm:$0xf] %vm3221, %v3158
      %3239 = vst.msk [vmem:[%s280 + $0x44] sm:$0xf] %vm3221, %v3160
      %3240 = vst.msk [vmem:[%s280 + $0x48] sm:$0xf] %vm3221, %v3162
      %3241 = vst.msk [vmem:[%s280 + $0x4c] sm:$0xf] %vm3221, %v3164
      %3242 = vst.msk [vmem:[%s280 + $0x50] sm:$0xf] %vm3221, %v3166
      %3243 = vst.msk [vmem:[%s280 + $0x54] sm:$0xf] %vm3221, %v3168
      %3244 = vst.msk [vmem:[%s280 + $0x58] sm:$0xf] %vm3221, %v3170
      %3245 = vst.msk [vmem:[%s280 + $0x5c] sm:$0xf] %vm3221, %v3172
      %3246 = vst.msk [vmem:[%s280 + $0x60] sm:$0xf] %vm3221, %v3174
      %3247 = vst.msk [vmem:[%s280 + $0x64] sm:$0xf] %vm3221, %v3176
      %3248 = vst.msk [vmem:[%s280 + $0x68] sm:$0xf] %vm3221, %v3178
      %3249 = vst.msk [vmem:[%s280 + $0x6c] sm:$0xf] %vm3221, %v3180
      %3250 = vst.msk [vmem:[%s280 + $0x70] sm:$0xf] %vm3221, %v3182
      %3251 = vst.msk [vmem:[%s280 + $0x74] sm:$0xf] %vm3221, %v3184
      %3252 = vst.msk [vmem:[%s280 + $0x78] sm:$0xf] %vm3221, %v3186
      %3253 = vst.msk [vmem:[%s280 + $0x7c] sm:$0xf] %vm3221, %v3188
      %s3254 = smul.u32 32, %s18
      %p3255 = scmp.lt.s32.totalorder %s3254, 63
      %s3256 = scalar_select %p3255, %s3254, 63
      %s3257 = smul.addr %s3256, 4
      %s3258 = scalar_lea.vmem %s7, %s3257
      // Predicated region
      $region49: #{siam_fused_forward.1} parent=47 // pred_check
        %p3259 = pneg %p188
      $region50: #{siam_fused_forward.1} parent=47 // pred_check_branch
        %3261 = sbr.rel (%p3259) target = $region52
      $region51: #{siam_fused_forward.1} parent=47 // pred_region
        %s3262 = smul.u32 32, %s18
      $region52: #{siam_fused_forward.1} parent=47 // pred_fallthru
        _
    $region48: #{siam_fused_forward.1} parent=5 // pred_fallthru
      _
    %p3263 = scmp.le.s32.totalorder 2, %s13
    // Predicated region
    $region53: #{siam_fused_forward.1} parent=5 // pred_check
      %p3264 = pneg %p3263
    $region54: #{siam_fused_forward.1} parent=5 // pred_check_branch
      %3266 = sbr.rel (%p3264) target = $region56
    $region55: #{siam_fused_forward.1} parent=5 // pred_region
      %s3267 = ssub.s32 %s13, 2
      // Predicated region
      $region57: #{siam_fused_forward.1} parent=55 // pred_check
        %p3268 = pneg %p194
      $region58: #{siam_fused_forward.1} parent=55 // pred_check_branch
        %3270 = sbr.rel (%p3268) target = $region60
      $region59: #{siam_fused_forward.1} parent=55 // pred_region
        %s3271 = smul.u32 32, %s19
        %p3272 = scmp.lt.s32.totalorder %s3271, 63
        %s3273 = scalar_select %p3272, %s3271, 63
        %s3274 = smul.addr %s3273, 4
        %s3275 = scalar_lea.vmem %s7, %s3274
      $region60: #{siam_fused_forward.1} parent=55 // pred_fallthru
        _
    $region56: #{siam_fused_forward.1} parent=5 // pred_fallthru
      _
  $region6: #{siam_fused_forward.1} parent=0 // loop_footer
    %s17 = sadd.s32 1, %s13
  $region7: #{siam_fused_forward.1} parent=0 // loop_footer_branch
    %12 = sbr.rel target = $region3
  $region8: #{siam_fused_forward.1} parent=0 // loop_exit
    _

</llo_original>
